<compile_context>
chip_gen: v7x
topology: tpu7x:2x2x1
jax: 0.10.0
libtpu: 0.0.40
codegen_flags: <defaults>
</compile_context>

<pallas_src>
import numpy as np
import jax
import jax.numpy as jnp
from jax.experimental import pallas as pl
from jax.experimental.pallas import tpu as pltpu

_HALO = 128  # per-image zero halo width in the 3x3 line buffer (>= W+1, 128-aligned)


def _interp_matrix(out_size, in_size):
    """Row interpolation matrix for bilinear resize, align_corners=True."""
    if in_size == 1:
        return np.ones((out_size, 1), np.float32)
    if out_size == 1:
        m = np.zeros((1, in_size), np.float32)
        m[0, 0] = 1.0
        return m
    src = np.arange(out_size, dtype=np.float64) * (in_size - 1) / (out_size - 1)
    lo = np.clip(np.floor(src).astype(np.int64), 0, in_size - 1)
    hi = np.minimum(lo + 1, in_size - 1)
    frac = (src - lo).astype(np.float32)
    m = np.zeros((out_size, in_size), np.float32)
    m[np.arange(out_size), lo] += (1.0 - frac)
    m[np.arange(out_size), hi] += frac
    return m


def _pack_rows(blocks, row_align, dtype):
    """Pack named 2-D blocks row-wise into one lane-major array.

    Each block is zero-padded to `row_align` rows and to a common lane width
    (rounded up to a multiple of 128 when > 1), so all in-kernel slices are
    tile-aligned.  Returns (packed_array, {name: (row_off, rows, cols)}).
    """
    width = max(int(a.shape[1]) for _, a in blocks)
    if width > 1:
        width = ((width + 127) // 128) * 128
    offs, parts, r = {}, [], 0
    for name, a in blocks:
        a = jnp.asarray(a, jnp.float32)
        nr, nc = a.shape
        offs[name] = (r, nr, nc)
        pr = (-nr) % row_align
        parts.append(jnp.pad(a, ((0, pr), (0, width - nc))))
        r += nr + pr
    return jnp.concatenate(parts, axis=0).astype(dtype), offs


def _make_tower_kernel(H, W, Bt, c_, w_offs, sh_offs):
    HW = H * W
    N = Bt * HW                 # folded pixel/lane dimension
    SEG = HW + 2 * _HALO        # per-image segment in the 3x3 line buffer

    def silu(y):
        # y * sigmoid(y) in tanh form: numerically stable, EUP transcendental,
        # no VPU divide.
        return y * (0.5 * jnp.tanh(0.5 * y) + 0.5)

    def kernel(x0_ref, x1_ref, x2_ref, m1_ref, m2_ref, maskx_ref, w_ref, sh_ref,
               o_ref, lb_ref, col_ref):
        f32, bf16 = jnp.float32, jnp.bfloat16
        dot = lambda a, b: jnp.dot(a, b, preferred_element_type=f32)

        def Wt(name):            # packed weight block, cast to bf16 for the MXU
            r0, nr, nc = w_offs[name]
            return w_ref[r0:r0 + nr, 0:nc].astype(bf16)

        def Sh(name):            # packed per-channel BN shift, kept in f32
            r0, nr, _ = sh_offs[name]
            return sh_ref[r0:r0 + nr, :]

        # Zero only the per-image halos of the line buffer (aligned 128-wide
        # stores).  Done every grid step on purpose: under "parallel" megacore
        # sharding the other core never runs step 0.
        zeros = jnp.zeros((c_, _HALO), f32)
        for b in range(Bt):
            lb_ref[:, b * SEG:b * SEG + _HALO] = zeros
            lb_ref[:, b * SEG + _HALO + HW:(b + 1) * SEG] = zeros

        mask_l = maskx_ref[0:1, :]   # (1, HW): kills the dx=-1 row wrap
        mask_r = maskx_ref[1:2, :]   # (1, HW): kills the dx=+1 row wrap

        def conv3x3(h, wname):
            """3x3 / stride 1 / pad 1 conv on flat (c_, Bt*HW) pixels as one
            K=9*c_ im2col matmul (single MXU weight push instead of nine)."""
            for b in range(Bt):
                lb_ref[:, b * SEG + _HALO:b * SEG + _HALO + HW] = \
                    h[:, b * HW:(b + 1) * HW]
            for t in range(9):                       # tap t = kh*3 + kw
                dy, dx = t // 3 - 1, t % 3 - 1
                off = _HALO + dy * W + dx
                for b in range(Bt):
                    win = lb_ref[:, b * SEG + off:b * SEG + off + HW]
                    if dx == -1:
                        win = win * mask_l
                    elif dx == 1:
                        win = win * mask_r
                    col_ref[t * c_:(t + 1) * c_, b * HW:(b + 1) * HW] = win
            return dot(Wt(wname), col_ref[...].astype(bf16))

        # Lateral 1x1 convs (BN folded) + SiLU, then exact bilinear
        # align_corners=True upsample as block-diagonal (per-image) matmuls.
        # Level 0 is already at (H, W): identity resize skipped.
        y0 = silu(dot(Wt("wl0"), x0_ref[0]) + Sh("shl0"))           # (mid, N)
        y1 = silu(dot(Wt("wl1"), x1_ref[0]) + Sh("shl1"))           # (mid, Bt*hw1)
        y2 = silu(dot(Wt("wl2"), x2_ref[0]) + Sh("shl2"))           # (mid, Bt*hw2)
        y1 = dot(y1.astype(bf16), m1_ref[...])                      # (mid, N)
        y2 = dot(y2.astype(bf16), m2_ref[...])                      # (mid, N)

        # seg[0]: channel concat fused into a single K=3*mid matmul.
        ycat = jnp.concatenate([y0, y1, y2], axis=0).astype(bf16)   # (3*mid, N)
        s = silu(dot(Wt("ws"), ycat) + Sh("shs"))                   # (out, N)

        # Ctx4.block1 / block2: CtxBottle13 = SiLU(OnlyConv3x3(BaseConv1x1(.)))
        h1 = silu(dot(Wt("wb1c1"), s.astype(bf16)) + Sh("shb1"))    # (c_, N)
        x1c = silu(conv3x3(h1, "wb1c2"))                            # (c_, N)
        h2 = silu(dot(Wt("wb2c1"), x1c.astype(bf16)) + Sh("shb2"))
        x2c = silu(conv3x3(h2, "wb2c2"))

        # ctx_reduce on cat(s, x1c, x2c): single K = 2*out matmul.
        rcat = jnp.concatenate([s, x1c, x2c], axis=0).astype(bf16)
        ctx = silu(dot(Wt("wcr"), rcat) + Sh("shcr"))               # (red, N)

        # ctx_fuse on cat(x2c, ctx): single K = c_ + red matmul.
        fcat = jnp.concatenate([x2c, ctx], axis=0).astype(bf16)
        out = silu(dot(Wt("wcf"), fcat) + Sh("shcf"))               # (c_+red, N)

        o_ref[0] = out.astype(o_ref.dtype)

    return kernel


def yolo_seg_tower(xs_nchw, params, images_per_step=None):
    """Fused YoloSegTower forward.  xs_nchw: list of 3 NCHW maps; returns NCHW."""
    assert len(xs_nchw) == 3
    x0, x1, x2 = xs_nchw
    B, _, H, W = x0.shape
    _, _, h1, w1 = x1.shape
    _, _, h2, w2 = x2.shape
    HW = H * W
    assert W + 1 <= _HALO, "3x3 conv halo does not cover one row + 1 pixel"

    if images_per_step is None:
        # Fold whole (small) batches into one step; keep >=2 grid steps for
        # v7x's two TensorCores when the batch allows it.
        images_per_step = B if B <= 2 else (B // 2 if B % 2 == 0 else 1)
    Bt = images_per_step
    assert B % Bt == 0, "images_per_step must divide the batch size"
    G = B // Bt
    N = Bt * HW

    p = params
    c_ = p["wb1c1"].shape[0]
    out_c = p["wcf"].shape[0]

    # ---- fold Bt images into the lane/N dimension: (G, C, Bt*h*w), bf16 -----
    def fold(x):
        b, c, h, w = x.shape
        xf = x.reshape(G, Bt, c, h * w).transpose(0, 2, 1, 3)
        return xf.reshape(G, c, Bt * h * w).astype(jnp.bfloat16)

    x0f, x1f, x2f = fold(x0), fold(x1), fold(x2)

    # ---- exact bilinear align_corners=True maps, block-diag over images -----
    m1 = np.kron(_interp_matrix(H, h1), _interp_matrix(W, w1)).T   # (hw1, HW)
    m2 = np.kron(_interp_matrix(H, h2), _interp_matrix(W, w2)).T   # (hw2, HW)
    eye = np.eye(Bt, dtype=np.float32)
    m1b = jnp.asarray(np.kron(eye, m1), jnp.bfloat16)              # (Bt*hw1, N)
    m2b = jnp.asarray(np.kron(eye, m2), jnp.bfloat16)              # (Bt*hw2, N)

    # ---- {0,1} masks killing the row wrap of the flat-pixel 3x3 conv --------
    xi = np.arange(HW) % W
    maskx = jnp.asarray(np.stack([(xi >= 1), (xi <= W - 2)]).astype(np.float32))

    # ---- pack all tiny per-layer constants into two DMAs --------------------
    wpack, w_offs = _pack_rows(
        [("wl0", p["wl0"]), ("wl1", p["wl1"]), ("wl2", p["wl2"]), ("ws", p["ws"]),
         ("wb1c1", p["wb1c1"]), ("wb1c2", p["wb1c2"]),
         ("wb2c1", p["wb2c1"]), ("wb2c2", p["wb2c2"]),
         ("wcr", p["wcr"]), ("wcf", p["wcf"])],
        row_align=8, dtype=jnp.float32)
    shpack, sh_offs = _pack_rows(
        [("shl0", p["shl0"]), ("shl1", p["shl1"]), ("shl2", p["shl2"]),
         ("shs", p["shs"]), ("shb1", p["shb1"]), ("shb2", p["shb2"]),
         ("shcr", p["shcr"]), ("shcf", p["shcf"])],
        row_align=8, dtype=jnp.float32)

    inputs = [x0f, x1f, x2f, m1b, m2b, maskx, wpack, shpack]

    def batch_spec(shape):
        nd = len(shape)
        return pl.BlockSpec((1,) + tuple(shape[1:]),
                            lambda g, _nd=nd: (g,) + (0,) * (_nd - 1))

    def const_spec(shape):
        nd = len(shape)
        return pl.BlockSpec(tuple(shape), lambda g, _nd=nd: (0,) * _nd)

    in_specs = [batch_spec(a.shape) for a in inputs[:3]]
    in_specs += [const_spec(a.shape) for a in inputs[3:]]

    SEG = HW + 2 * _HALO
    out_flat = pl.pallas_call(
        _make_tower_kernel(H, W, Bt, c_, w_offs, sh_offs),
        out_shape=jax.ShapeDtypeStruct((G, out_c, N), jnp.float32),
        grid=(G,),
        in_specs=in_specs,
        out_specs=pl.BlockSpec((1, out_c, N), lambda g: (g, 0, 0)),
        scratch_shapes=[pltpu.VMEM((c_, Bt * SEG), jnp.float32),   # 3x3 line buffer
                        pltpu.VMEM((9 * c_, N), jnp.float32)],     # im2col columns
        compiler_params=pltpu.CompilerParams(
            dimension_semantics=("parallel",)),
    )(*inputs)

    out = out_flat.reshape(G, out_c, Bt, HW).transpose(0, 2, 1, 3)
    return out.reshape(B, out_c, H, W)


# ----------------------------------------------------------------------------
# Parameter init (deterministic, shapes per the module's __init__).
# BN is in inference form with constant_init (gamma=1, beta=0, mean=0, var=1);
# its scale is folded into the conv weights and only the per-channel additive
# shift (here 0) is kept.  Concat-consuming 1x1 convs keep their full (merged)
# weight; 3x3 convs are stored in im2col layout (cout, 9*cin), tap = kh*3+kw.
# ----------------------------------------------------------------------------
def init_params(key, kdim, midim, outdim, eps=1e-5):
    keys = iter(jax.random.split(key, 16))
    bn_scale = float(1.0 / np.sqrt(1.0 + eps))

    def conv1x1(cout, cin):
        std = (2.0 / cin) ** 0.5                      # kaiming-normal style
        w = jax.random.normal(next(keys), (cout, cin), jnp.float32) * std * bn_scale
        sh = jnp.zeros((cout, 1), jnp.float32)        # shift = beta - mean*scale = 0
        return w, sh

    def conv3x3_col(cout, cin):
        std = (2.0 / (cin * 9)) ** 0.5
        taps = jax.random.normal(next(keys), (9, cout, cin), jnp.float32) * std
        # im2col column index = tap*cin + ci   (tap = kh*3 + kw)
        return taps.transpose(1, 0, 2).reshape(cout, 9 * cin)

    c_ = outdim // 2
    red = outdim // 2
    wl0, shl0 = conv1x1(midim, kdim[0])
    wl1, shl1 = conv1x1(midim, kdim[1])
    wl2, shl2 = conv1x1(midim, kdim[2])
    ws, shs = conv1x1(outdim, midim * len(kdim))       # seg[0] on cat(y0,y1,y2)
    wb1c1, shb1 = conv1x1(c_, outdim)
    wb1c2 = conv3x3_col(c_, c_)
    wb2c1, shb2 = conv1x1(c_, c_)
    wb2c2 = conv3x3_col(c_, c_)
    wcr, shcr = conv1x1(red, 2 * outdim)               # ctx_reduce on cat(s,x1,x2)
    wcf, shcf = conv1x1(c_ + red, c_ + red)            # ctx_fuse on cat(x2,ctx)

    return dict(wl0=wl0, wl1=wl1, wl2=wl2, shl0=shl0, shl1=shl1, shl2=shl2,
                ws=ws, shs=shs,
                wb1c1=wb1c1, shb1=shb1, wb1c2=wb1c2,
                wb2c1=wb2c1, shb2=shb2, wb2c2=wb2c2,
                wcr=wcr, shcr=shcr,
                wcf=wcf, shcf=shcf)


# ----------------------------------------------------------------------------
if __name__ == "__main__":
    # Small shapes consistent with the module: kdim=(8,16,32), midim=16,
    # outdim=16, FPN-style inputs at strides 1/2/4 relative to x[0].
    kdim, midim, outdim = (8, 16, 32), 16, 16
    B, H, W = 2, 16, 16

    key = jax.random.PRNGKey(0)
    kparams, kx = jax.random.split(key)
    params = init_params(kparams, kdim, midim, outdim)

    kx0, kx1, kx2 = jax.random.split(kx, 3)
    xs = [
        jax.random.normal(kx0, (B, kdim[0], H, W), jnp.float32),
        jax.random.normal(kx1, (B, kdim[1], H // 2, W // 2), jnp.float32),
        jax.random.normal(kx2, (B, kdim[2], H // 4, W // 4), jnp.float32),
    ]

    out = yolo_seg_tower(xs, params)   # B=2 folds into one grid step (Bt=2)
    out = jax.block_until_ready(out)

    assert out.shape == (B, outdim, H, W), out.shape
    assert bool(jnp.all(jnp.isfinite(out)))
    print("KERNEL_OK")
</pallas_src>

<mosaic_0001>
module attributes {stable_mosaic.version = 11 : i64} {
  func.func @kernel(%arg0: i32, %arg1: memref<1x8x512xbf16, #tpu.memory_space<vmem>>, %arg2: memref<1x16x128xbf16, #tpu.memory_space<vmem>>, %arg3: memref<1x32x32xbf16, #tpu.memory_space<vmem>>, %arg4: memref<128x512xbf16, #tpu.memory_space<vmem>>, %arg5: memref<32x512xbf16, #tpu.memory_space<vmem>>, %arg6: memref<2x256xf32, #tpu.memory_space<vmem>>, %arg7: memref<120x128xf32, #tpu.memory_space<vmem>>, %arg8: memref<104x1xf32, #tpu.memory_space<vmem>>, %arg9: memref<1x16x512xf32, #tpu.memory_space<vmem>>, %arg10: memref<8x1024xf32, #tpu.memory_space<vmem>>, %arg11: memref<72x512xf32, #tpu.memory_space<vmem>>) attributes {dimension_semantics = [#tpu.dimension_semantics<parallel>], iteration_bounds = array<i64: 1>, scalar_prefetch = 0 : i64, scratch_operands = 2 : i64, tpu.core_type = #tpu.core_type<tc>, window_params = [{transform_indices = @transform_0, window_bounds = array<i64: 1, 8, 512>}, {transform_indices = @transform_1, window_bounds = array<i64: 1, 16, 128>}, {transform_indices = @transform_2, window_bounds = array<i64: 1, 32, 32>}, {pipeline_mode = #tpu.pipeline_mode<synchronous>, transform_indices = @transform_3, window_bounds = array<i64: 128, 512>}, {pipeline_mode = #tpu.pipeline_mode<synchronous>, transform_indices = @transform_4, window_bounds = array<i64: 32, 512>}, {pipeline_mode = #tpu.pipeline_mode<synchronous>, transform_indices = @transform_5, window_bounds = array<i64: 2, 256>}, {pipeline_mode = #tpu.pipeline_mode<synchronous>, transform_indices = @transform_6, window_bounds = array<i64: 120, 128>}, {pipeline_mode = #tpu.pipeline_mode<synchronous>, transform_indices = @transform_7, window_bounds = array<i64: 104, 1>}, {transform_indices = @transform_8, window_bounds = array<i64: 1, 16, 512>}]} {
    %cst = arith.constant 0.000000e+00 : f32
    %0 = vector.broadcast %cst : f32 to vector<8x128xf32>
    %c0 = arith.constant 0 : index
    %c0_0 = arith.constant 0 : index
    %1 = vector.load %arg10[%c0, %c0_0] : memref<8x1024xf32, #tpu.memory_space<vmem>>, vector<8x128xf32>
    tpu.vector_store %arg10[%c0, %c0_0], %0 {strides = array<i32>} : memref<8x1024xf32, #tpu.memory_space<vmem>>, vector<8x128xf32>,
    %c0_1 = arith.constant 0 : index
    %c384 = arith.constant 384 : index
    %2 = vector.load %arg10[%c0_1, %c384] : memref<8x1024xf32, #tpu.memory_space<vmem>>, vector<8x128xf32>
    tpu.vector_store %arg10[%c0_1, %c384], %0 {strides = array<i32>} : memref<8x1024xf32, #tpu.memory_space<vmem>>, vector<8x128xf32>,
    %c0_2 = arith.constant 0 : index
    %c512 = arith.constant 512 : index
    %3 = vector.load %arg10[%c0_2, %c512] : memref<8x1024xf32, #tpu.memory_space<vmem>>, vector<8x128xf32>
    tpu.vector_store %arg10[%c0_2, %c512], %0 {strides = array<i32>} : memref<8x1024xf32, #tpu.memory_space<vmem>>, vector<8x128xf32>,
    %c0_3 = arith.constant 0 : index
    %c896 = arith.constant 896 : index
    %4 = vector.load %arg10[%c0_3, %c896] : memref<8x1024xf32, #tpu.memory_space<vmem>>, vector<8x128xf32>
    tpu.vector_store %arg10[%c0_3, %c896], %0 {strides = array<i32>} : memref<8x1024xf32, #tpu.memory_space<vmem>>, vector<8x128xf32>,
    %c0_4 = arith.constant 0 : index
    %c0_5 = arith.constant 0 : index
    %5 = vector.load %arg6[%c0_4, %c0_5] : memref<2x256xf32, #tpu.memory_space<vmem>>, vector<1x256xf32>
    %c1 = arith.constant 1 : index
    %c0_6 = arith.constant 0 : index
    %6 = vector.load %arg6[%c1, %c0_6] : memref<2x256xf32, #tpu.memory_space<vmem>>, vector<1x256xf32>
    %c0_7 = arith.constant 0 : index
    %c0_8 = arith.constant 0 : index
    %7 = vector.load %arg7[%c0_7, %c0_8] : memref<120x128xf32, #tpu.memory_space<vmem>>, vector<16x8xf32>
    %8 = arith.truncf %7 : vector<16x8xf32> to vector<16x8xbf16>
    %c0_9 = arith.constant 0 : index
    %c0_10 = arith.constant 0 : index
    %c0_11 = arith.constant 0 : index
    %9 = vector.load %arg1[%c0_9, %c0_10, %c0_11] : memref<1x8x512xbf16, #tpu.memory_space<vmem>>, vector<1x8x512xbf16>
    %10 = vector.shape_cast %9 : vector<1x8x512xbf16> to vector<8x512xbf16>
    %cst_12 = arith.constant dense<0.000000e+00> : vector<16x512xf32>
    %11 = tpu.matmul %8, %10, %cst_12 {dimension_numbers = #tpu.dot_dimension_numbers<[1], [0], [0], [1], [0, 0, 1, 1], [], []>} : vector<16x8xbf16>, vector<8x512xbf16>, vector<16x512xf32> -> vector<16x512xf32>
    %c0_13 = arith.constant 0 : index
    %c0_14 = arith.constant 0 : index
    %12 = vector.load %arg8[%c0_13, %c0_14] : memref<104x1xf32, #tpu.memory_space<vmem>>, vector<16x1xf32>
    %13 = vector.broadcast %12 : vector<16x1xf32> to vector<16x512xf32>
    %14 = arith.addf %11, %13 : vector<16x512xf32>
    %cst_15 = arith.constant 5.000000e-01 : f32
    %15 = vector.broadcast %cst_15 : f32 to vector<16x512xf32>
    %16 = arith.mulf %15, %14 : vector<16x512xf32>
    %17 = math.tanh %16 : vector<16x512xf32>
    %cst_16 = arith.constant 5.000000e-01 : f32
    %18 = vector.broadcast %cst_16 : f32 to vector<16x512xf32>
    %19 = arith.mulf %18, %17 : vector<16x512xf32>
    %cst_17 = arith.constant 5.000000e-01 : f32
    %20 = vector.broadcast %cst_17 : f32 to vector<16x512xf32>
    %21 = arith.addf %19, %20 : vector<16x512xf32>
    %22 = arith.mulf %14, %21 : vector<16x512xf32>
    %c16 = arith.constant 16 : index
    %c0_18 = arith.constant 0 : index
    %23 = vector.load %arg7[%c16, %c0_18] : memref<120x128xf32, #tpu.memory_space<vmem>>, vector<16x16xf32>
    %24 = arith.truncf %23 : vector<16x16xf32> to vector<16x16xbf16>
    %c0_19 = arith.constant 0 : index
    %c0_20 = arith.constant 0 : index
    %c0_21 = arith.constant 0 : index
    %25 = vector.load %arg2[%c0_19, %c0_20, %c0_21] : memref<1x16x128xbf16, #tpu.memory_space<vmem>>, vector<1x16x128xbf16>
    %26 = vector.shape_cast %25 : vector<1x16x128xbf16> to vector<16x128xbf16>
    %cst_22 = arith.constant dense<0.000000e+00> : vector<16x128xf32>
    %27 = tpu.matmul %24, %26, %cst_22 {dimension_numbers = #tpu.dot_dimension_numbers<[1], [0], [0], [1], [0, 0, 1, 1], [], []>} : vector<16x16xbf16>, vector<16x128xbf16>, vector<16x128xf32> -> vector<16x128xf32>
    %c16_23 = arith.constant 16 : index
    %c0_24 = arith.constant 0 : index
    %28 = vector.load %arg8[%c16_23, %c0_24] : memref<104x1xf32, #tpu.memory_space<vmem>>, vector<16x1xf32>
    %29 = vector.broadcast %28 : vector<16x1xf32> to vector<16x128xf32>
    %30 = arith.addf %27, %29 : vector<16x128xf32>
    %cst_25 = arith.constant 5.000000e-01 : f32
    %31 = vector.broadcast %cst_25 : f32 to vector<16x128xf32>
    %32 = arith.mulf %31, %30 : vector<16x128xf32>
    %33 = math.tanh %32 : vector<16x128xf32>
    %cst_26 = arith.constant 5.000000e-01 : f32
    %34 = vector.broadcast %cst_26 : f32 to vector<16x128xf32>
    %35 = arith.mulf %34, %33 : vector<16x128xf32>
    %cst_27 = arith.constant 5.000000e-01 : f32
    %36 = vector.broadcast %cst_27 : f32 to vector<16x128xf32>
    %37 = arith.addf %35, %36 : vector<16x128xf32>
    %38 = arith.mulf %30, %37 : vector<16x128xf32>
    %c32 = arith.constant 32 : index
    %c0_28 = arith.constant 0 : index
    %39 = vector.load %arg7[%c32, %c0_28] : memref<120x128xf32, #tpu.memory_space<vmem>>, vector<16x32xf32>
    %40 = arith.truncf %39 : vector<16x32xf32> to vector<16x32xbf16>
    %c0_29 = arith.constant 0 : index
    %c0_30 = arith.constant 0 : index
    %c0_31 = arith.constant 0 : index
    %41 = vector.load %arg3[%c0_29, %c0_30, %c0_31] : memref<1x32x32xbf16, #tpu.memory_space<vmem>>, vector<1x32x32xbf16>
    %42 = vector.shape_cast %41 : vector<1x32x32xbf16> to vector<32x32xbf16>
    %cst_32 = arith.constant dense<0.000000e+00> : vector<16x32xf32>
    %43 = tpu.matmul %40, %42, %cst_32 {dimension_numbers = #tpu.dot_dimension_numbers<[1], [0], [0], [1], [0, 0, 1, 1], [], []>} : vector<16x32xbf16>, vector<32x32xbf16>, vector<16x32xf32> -> vector<16x32xf32>
    %c32_33 = arith.constant 32 : index
    %c0_34 = arith.constant 0 : index
    %44 = vector.load %arg8[%c32_33, %c0_34] : memref<104x1xf32, #tpu.memory_space<vmem>>, vector<16x1xf32>
    %45 = vector.broadcast %44 : vector<16x1xf32> to vector<16x32xf32>
    %46 = arith.addf %43, %45 : vector<16x32xf32>
    %cst_35 = arith.constant 5.000000e-01 : f32
    %47 = vector.broadcast %cst_35 : f32 to vector<16x32xf32>
    %48 = arith.mulf %47, %46 : vector<16x32xf32>
    %49 = math.tanh %48 : vector<16x32xf32>
    %cst_36 = arith.constant 5.000000e-01 : f32
    %50 = vector.broadcast %cst_36 : f32 to vector<16x32xf32>
    %51 = arith.mulf %50, %49 : vector<16x32xf32>
    %cst_37 = arith.constant 5.000000e-01 : f32
    %52 = vector.broadcast %cst_37 : f32 to vector<16x32xf32>
    %53 = arith.addf %51, %52 : vector<16x32xf32>
    %54 = arith.mulf %46, %53 : vector<16x32xf32>
    %55 = arith.truncf %38 : vector<16x128xf32> to vector<16x128xbf16>
    %c0_38 = arith.constant 0 : index
    %c0_39 = arith.constant 0 : index
    %56 = vector.load %arg4[%c0_38, %c0_39] : memref<128x512xbf16, #tpu.memory_space<vmem>>, vector<128x512xbf16>
    %cst_40 = arith.constant dense<0.000000e+00> : vector<16x512xf32>
    %57 = tpu.matmul %55, %56, %cst_40 {dimension_numbers = #tpu.dot_dimension_numbers<[1], [0], [0], [1], [0, 0, 1, 1], [], []>} : vector<16x128xbf16>, vector<128x512xbf16>, vector<16x512xf32> -> vector<16x512xf32>
    %58 = arith.truncf %54 : vector<16x32xf32> to vector<16x32xbf16>
    %c0_41 = arith.constant 0 : index
    %c0_42 = arith.constant 0 : index
    %59 = vector.load %arg5[%c0_41, %c0_42] : memref<32x512xbf16, #tpu.memory_space<vmem>>, vector<32x512xbf16>
    %cst_43 = arith.constant dense<0.000000e+00> : vector<16x512xf32>
    %60 = tpu.matmul %58, %59, %cst_43 {dimension_numbers = #tpu.dot_dimension_numbers<[1], [0], [0], [1], [0, 0, 1, 1], [], []>} : vector<16x32xbf16>, vector<32x512xbf16>, vector<16x512xf32> -> vector<16x512xf32>
    %61 = tpu.concatenate %22, %57, %60 in 0 : vector<16x512xf32>, vector<16x512xf32>, vector<16x512xf32> -> vector<48x512xf32>
    %62 = arith.truncf %61 : vector<48x512xf32> to vector<48x512xbf16>
    %c48 = arith.constant 48 : index
    %c0_44 = arith.constant 0 : index
    %63 = vector.load %arg7[%c48, %c0_44] : memref<120x128xf32, #tpu.memory_space<vmem>>, vector<16x48xf32>
    %64 = arith.truncf %63 : vector<16x48xf32> to vector<16x48xbf16>
    %cst_45 = arith.constant dense<0.000000e+00> : vector<16x512xf32>
    %65 = tpu.matmul %64, %62, %cst_45 {dimension_numbers = #tpu.dot_dimension_numbers<[1], [0], [0], [1], [0, 0, 1, 1], [], []>} : vector<16x48xbf16>, vector<48x512xbf16>, vector<16x512xf32> -> vector<16x512xf32>
    %c48_46 = arith.constant 48 : index
    %c0_47 = arith.constant 0 : index
    %66 = vector.load %arg8[%c48_46, %c0_47] : memref<104x1xf32, #tpu.memory_space<vmem>>, vector<16x1xf32>
    %67 = vector.broadcast %66 : vector<16x1xf32> to vector<16x512xf32>
    %68 = arith.addf %65, %67 : vector<16x512xf32>
    %cst_48 = arith.constant 5.000000e-01 : f32
    %69 = vector.broadcast %cst_48 : f32 to vector<16x512xf32>
    %70 = arith.mulf %69, %68 : vector<16x512xf32>
    %71 = math.tanh %70 : vector<16x512xf32>
    %cst_49 = arith.constant 5.000000e-01 : f32
    %72 = vector.broadcast %cst_49 : f32 to vector<16x512xf32>
    %73 = arith.mulf %72, %71 : vector<16x512xf32>
    %cst_50 = arith.constant 5.000000e-01 : f32
    %74 = vector.broadcast %cst_50 : f32 to vector<16x512xf32>
    %75 = arith.addf %73, %74 : vector<16x512xf32>
    %76 = arith.mulf %68, %75 : vector<16x512xf32>
    %c64 = arith.constant 64 : index
    %c0_51 = arith.constant 0 : index
    %77 = vector.load %arg7[%c64, %c0_51] : memref<120x128xf32, #tpu.memory_space<vmem>>, vector<8x16xf32>
    %78 = arith.truncf %77 : vector<8x16xf32> to vector<8x16xbf16>
    %79 = arith.truncf %76 : vector<16x512xf32> to vector<16x512xbf16>
    %cst_52 = arith.constant dense<0.000000e+00> : vector<8x512xf32>
    %80 = tpu.matmul %78, %79, %cst_52 {dimension_numbers = #tpu.dot_dimension_numbers<[1], [0], [0], [1], [0, 0, 1, 1], [], []>} : vector<8x16xbf16>, vector<16x512xbf16>, vector<8x512xf32> -> vector<8x512xf32>
    %c64_53 = arith.constant 64 : index
    %c0_54 = arith.constant 0 : index
    %81 = vector.load %arg8[%c64_53, %c0_54] : memref<104x1xf32, #tpu.memory_space<vmem>>, vector<8x1xf32>
    %82 = vector.broadcast %81 : vector<8x1xf32> to vector<8x512xf32>
    %83 = arith.addf %80, %82 : vector<8x512xf32>
    %cst_55 = arith.constant 5.000000e-01 : f32
    %84 = vector.broadcast %cst_55 : f32 to vector<8x512xf32>
    %85 = arith.mulf %84, %83 : vector<8x512xf32>
    %86 = math.tanh %85 : vector<8x512xf32>
    %cst_56 = arith.constant 5.000000e-01 : f32
    %87 = vector.broadcast %cst_56 : f32 to vector<8x512xf32>
    %88 = arith.mulf %87, %86 : vector<8x512xf32>
    %cst_57 = arith.constant 5.000000e-01 : f32
    %89 = vector.broadcast %cst_57 : f32 to vector<8x512xf32>
    %90 = arith.addf %88, %89 : vector<8x512xf32>
    %91 = arith.mulf %83, %90 : vector<8x512xf32>
    %92 = vector.extract_strided_slice %91 {offsets = [0, 0], sizes = [8, 256], strides = [1, 1]} : vector<8x512xf32> to vector<8x256xf32>
    %c0_58 = arith.constant 0 : index
    %c128 = arith.constant 128 : index
    %93 = vector.load %arg10[%c0_58, %c128] : memref<8x1024xf32, #tpu.memory_space<vmem>>, vector<8x256xf32>
    tpu.vector_store %arg10[%c0_58, %c128], %92 {strides = array<i32>} : memref<8x1024xf32, #tpu.memory_space<vmem>>, vector<8x256xf32>,
    %94 = vector.extract_strided_slice %91 {offsets = [0, 256], sizes = [8, 256], strides = [1, 1]} : vector<8x512xf32> to vector<8x256xf32>
    %c0_59 = arith.constant 0 : index
    %c640 = arith.constant 640 : index
    %95 = vector.load %arg10[%c0_59, %c640] : memref<8x1024xf32, #tpu.memory_space<vmem>>, vector<8x256xf32>
    tpu.vector_store %arg10[%c0_59, %c640], %94 {strides = array<i32>} : memref<8x1024xf32, #tpu.memory_space<vmem>>, vector<8x256xf32>,
    %c0_60 = arith.constant 0 : index
    %c111 = arith.constant 111 : index
    %96 = vector.load %arg10[%c0_60, %c111] : memref<8x1024xf32, #tpu.memory_space<vmem>>, vector<8x256xf32>
    %97 = vector.broadcast %5 : vector<1x256xf32> to vector<8x256xf32>
    %98 = arith.mulf %96, %97 : vector<8x256xf32>
    %c0_61 = arith.constant 0 : index
    %c0_62 = arith.constant 0 : index
    %99 = vector.load %arg11[%c0_61, %c0_62] : memref<72x512xf32, #tpu.memory_space<vmem>>, vector<8x256xf32>
    tpu.vector_store %arg11[%c0_61, %c0_62], %98 {strides = array<i32>} : memref<72x512xf32, #tpu.memory_space<vmem>>, vector<8x256xf32>,
    %c0_63 = arith.constant 0 : index
    %c623 = arith.constant 623 : index
    %100 = vector.load %arg10[%c0_63, %c623] : memref<8x1024xf32, #tpu.memory_space<vmem>>, vector<8x256xf32>
    %101 = vector.broadcast %5 : vector<1x256xf32> to vector<8x256xf32>
    %102 = arith.mulf %100, %101 : vector<8x256xf32>
    %c0_64 = arith.constant 0 : index
    %c256 = arith.constant 256 : index
    %103 = vector.load %arg11[%c0_64, %c256] : memref<72x512xf32, #tpu.memory_space<vmem>>, vector<8x256xf32>
    tpu.vector_store %arg11[%c0_64, %c256], %102 {strides = array<i32>} : memref<72x512xf32, #tpu.memory_space<vmem>>, vector<8x256xf32>,
    %c0_65 = arith.constant 0 : index
    %c112 = arith.constant 112 : index
    %104 = vector.load %arg10[%c0_65, %c112] : memref<8x1024xf32, #tpu.memory_space<vmem>>, vector<8x256xf32>
    %c8 = arith.constant 8 : index
    %c0_66 = arith.constant 0 : index
    %105 = vector.load %arg11[%c8, %c0_66] : memref<72x512xf32, #tpu.memory_space<vmem>>, vector<8x256xf32>
    tpu.vector_store %arg11[%c8, %c0_66], %104 {strides = array<i32>} : memref<72x512xf32, #tpu.memory_space<vmem>>, vector<8x256xf32>,
    %c0_67 = arith.constant 0 : index
    %c624 = arith.constant 624 : index
    %106 = vector.load %arg10[%c0_67, %c624] : memref<8x1024xf32, #tpu.memory_space<vmem>>, vector<8x256xf32>
    %c8_68 = arith.constant 8 : index
    %c256_69 = arith.constant 256 : index
    %107 = vector.load %arg11[%c8_68, %c256_69] : memref<72x512xf32, #tpu.memory_space<vmem>>, vector<8x256xf32>
    tpu.vector_store %arg11[%c8_68, %c256_69], %106 {strides = array<i32>} : memref<72x512xf32, #tpu.memory_space<vmem>>, vector<8x256xf32>,
    %c0_70 = arith.constant 0 : index
    %c113 = arith.constant 113 : index
    %108 = vector.load %arg10[%c0_70, %c113] : memref<8x1024xf32, #tpu.memory_space<vmem>>, vector<8x256xf32>
    %109 = vector.broadcast %6 : vector<1x256xf32> to vector<8x256xf32>
    %110 = arith.mulf %108, %109 : vector<8x256xf32>
    %c16_71 = arith.constant 16 : index
    %c0_72 = arith.constant 0 : index
    %111 = vector.load %arg11[%c16_71, %c0_72] : memref<72x512xf32, #tpu.memory_space<vmem>>, vector<8x256xf32>
    tpu.vector_store %arg11[%c16_71, %c0_72], %110 {strides = array<i32>} : memref<72x512xf32, #tpu.memory_space<vmem>>, vector<8x256xf32>,
    %c0_73 = arith.constant 0 : index
    %c625 = arith.constant 625 : index
    %112 = vector.load %arg10[%c0_73, %c625] : memref<8x1024xf32, #tpu.memory_space<vmem>>, vector<8x256xf32>
    %113 = vector.broadcast %6 : vector<1x256xf32> to vector<8x256xf32>
    %114 = arith.mulf %112, %113 : vector<8x256xf32>
    %c16_74 = arith.constant 16 : index
    %c256_75 = arith.constant 256 : index
    %115 = vector.load %arg11[%c16_74, %c256_75] : memref<72x512xf32, #tpu.memory_space<vmem>>, vector<8x256xf32>
    tpu.vector_store %arg11[%c16_74, %c256_75], %114 {strides = array<i32>} : memref<72x512xf32, #tpu.memory_space<vmem>>, vector<8x256xf32>,
    %c0_76 = arith.constant 0 : index
    %c127 = arith.constant 127 : index
    %116 = vector.load %arg10[%c0_76, %c127] : memref<8x1024xf32, #tpu.memory_space<vmem>>, vector<8x256xf32>
    %117 = vector.broadcast %5 : vector<1x256xf32> to vector<8x256xf32>
    %118 = arith.mulf %116, %117 : vector<8x256xf32>
    %c24 = arith.constant 24 : index
    %c0_77 = arith.constant 0 : index
    %119 = vector.load %arg11[%c24, %c0_77] : memref<72x512xf32, #tpu.memory_space<vmem>>, vector<8x256xf32>
    tpu.vector_store %arg11[%c24, %c0_77], %118 {strides = array<i32>} : memref<72x512xf32, #tpu.memory_space<vmem>>, vector<8x256xf32>,
    %c0_78 = arith.constant 0 : index
    %c639 = arith.constant 639 : index
    %120 = vector.load %arg10[%c0_78, %c639] : memref<8x1024xf32, #tpu.memory_space<vmem>>, vector<8x256xf32>
    %121 = vector.broadcast %5 : vector<1x256xf32> to vector<8x256xf32>
    %122 = arith.mulf %120, %121 : vector<8x256xf32>
    %c24_79 = arith.constant 24 : index
    %c256_80 = arith.constant 256 : index
    %123 = vector.load %arg11[%c24_79, %c256_80] : memref<72x512xf32, #tpu.memory_space<vmem>>, vector<8x256xf32>
    tpu.vector_store %arg11[%c24_79, %c256_80], %122 {strides = array<i32>} : memref<72x512xf32, #tpu.memory_space<vmem>>, vector<8x256xf32>,
    %c0_81 = arith.constant 0 : index
    %c128_82 = arith.constant 128 : index
    %124 = vector.load %arg10[%c0_81, %c128_82] : memref<8x1024xf32, #tpu.memory_space<vmem>>, vector<8x256xf32>
    %c32_83 = arith.constant 32 : index
    %c0_84 = arith.constant 0 : index
    %125 = vector.load %arg11[%c32_83, %c0_84] : memref<72x512xf32, #tpu.memory_space<vmem>>, vector<8x256xf32>
    tpu.vector_store %arg11[%c32_83, %c0_84], %124 {strides = array<i32>} : memref<72x512xf32, #tpu.memory_space<vmem>>, vector<8x256xf32>,
    %c0_85 = arith.constant 0 : index
    %c640_86 = arith.constant 640 : index
    %126 = vector.load %arg10[%c0_85, %c640_86] : memref<8x1024xf32, #tpu.memory_space<vmem>>, vector<8x256xf32>
    %c32_87 = arith.constant 32 : index
    %c256_88 = arith.constant 256 : index
    %127 = vector.load %arg11[%c32_87, %c256_88] : memref<72x512xf32, #tpu.memory_space<vmem>>, vector<8x256xf32>
    tpu.vector_store %arg11[%c32_87, %c256_88], %126 {strides = array<i32>} : memref<72x512xf32, #tpu.memory_space<vmem>>, vector<8x256xf32>,
    %c0_89 = arith.constant 0 : index
    %c129 = arith.constant 129 : index
    %128 = vector.load %arg10[%c0_89, %c129] : memref<8x1024xf32, #tpu.memory_space<vmem>>, vector<8x256xf32>
    %129 = vector.broadcast %6 : vector<1x256xf32> to vector<8x256xf32>
    %130 = arith.mulf %128, %129 : vector<8x256xf32>
    %c40 = arith.constant 40 : index
    %c0_90 = arith.constant 0 : index
    %131 = vector.load %arg11[%c40, %c0_90] : memref<72x512xf32, #tpu.memory_space<vmem>>, vector<8x256xf32>
    tpu.vector_store %arg11[%c40, %c0_90], %130 {strides = array<i32>} : memref<72x512xf32, #tpu.memory_space<vmem>>, vector<8x256xf32>,
    %c0_91 = arith.constant 0 : index
    %c641 = arith.constant 641 : index
    %132 = vector.load %arg10[%c0_91, %c641] : memref<8x1024xf32, #tpu.memory_space<vmem>>, vector<8x256xf32>
    %133 = vector.broadcast %6 : vector<1x256xf32> to vector<8x256xf32>
    %134 = arith.mulf %132, %133 : vector<8x256xf32>
    %c40_92 = arith.constant 40 : index
    %c256_93 = arith.constant 256 : index
    %135 = vector.load %arg11[%c40_92, %c256_93] : memref<72x512xf32, #tpu.memory_space<vmem>>, vector<8x256xf32>
    tpu.vector_store %arg11[%c40_92, %c256_93], %134 {strides = array<i32>} : memref<72x512xf32, #tpu.memory_space<vmem>>, vector<8x256xf32>,
    %c0_94 = arith.constant 0 : index
    %c143 = arith.constant 143 : index
    %136 = vector.load %arg10[%c0_94, %c143] : memref<8x1024xf32, #tpu.memory_space<vmem>>, vector<8x256xf32>
    %137 = vector.broadcast %5 : vector<1x256xf32> to vector<8x256xf32>
    %138 = arith.mulf %136, %137 : vector<8x256xf32>
    %c48_95 = arith.constant 48 : index
    %c0_96 = arith.constant 0 : index
    %139 = vector.load %arg11[%c48_95, %c0_96] : memref<72x512xf32, #tpu.memory_space<vmem>>, vector<8x256xf32>
    tpu.vector_store %arg11[%c48_95, %c0_96], %138 {strides = array<i32>} : memref<72x512xf32, #tpu.memory_space<vmem>>, vector<8x256xf32>,
    %c0_97 = arith.constant 0 : index
    %c655 = arith.constant 655 : index
    %140 = vector.load %arg10[%c0_97, %c655] : memref<8x1024xf32, #tpu.memory_space<vmem>>, vector<8x256xf32>
    %141 = vector.broadcast %5 : vector<1x256xf32> to vector<8x256xf32>
    %142 = arith.mulf %140, %141 : vector<8x256xf32>
    %c48_98 = arith.constant 48 : index
    %c256_99 = arith.constant 256 : index
    %143 = vector.load %arg11[%c48_98, %c256_99] : memref<72x512xf32, #tpu.memory_space<vmem>>, vector<8x256xf32>
    tpu.vector_store %arg11[%c48_98, %c256_99], %142 {strides = array<i32>} : memref<72x512xf32, #tpu.memory_space<vmem>>, vector<8x256xf32>,
    %c0_100 = arith.constant 0 : index
    %c144 = arith.constant 144 : index
    %144 = vector.load %arg10[%c0_100, %c144] : memref<8x1024xf32, #tpu.memory_space<vmem>>, vector<8x256xf32>
    %c56 = arith.constant 56 : index
    %c0_101 = arith.constant 0 : index
    %145 = vector.load %arg11[%c56, %c0_101] : memref<72x512xf32, #tpu.memory_space<vmem>>, vector<8x256xf32>
    tpu.vector_store %arg11[%c56, %c0_101], %144 {strides = array<i32>} : memref<72x512xf32, #tpu.memory_space<vmem>>, vector<8x256xf32>,
    %c0_102 = arith.constant 0 : index
    %c656 = arith.constant 656 : index
    %146 = vector.load %arg10[%c0_102, %c656] : memref<8x1024xf32, #tpu.memory_space<vmem>>, vector<8x256xf32>
    %c56_103 = arith.constant 56 : index
    %c256_104 = arith.constant 256 : index
    %147 = vector.load %arg11[%c56_103, %c256_104] : memref<72x512xf32, #tpu.memory_space<vmem>>, vector<8x256xf32>
    tpu.vector_store %arg11[%c56_103, %c256_104], %146 {strides = array<i32>} : memref<72x512xf32, #tpu.memory_space<vmem>>, vector<8x256xf32>,
    %c0_105 = arith.constant 0 : index
    %c145 = arith.constant 145 : index
    %148 = vector.load %arg10[%c0_105, %c145] : memref<8x1024xf32, #tpu.memory_space<vmem>>, vector<8x256xf32>
    %149 = vector.broadcast %6 : vector<1x256xf32> to vector<8x256xf32>
    %150 = arith.mulf %148, %149 : vector<8x256xf32>
    %c64_106 = arith.constant 64 : index
    %c0_107 = arith.constant 0 : index
    %151 = vector.load %arg11[%c64_106, %c0_107] : memref<72x512xf32, #tpu.memory_space<vmem>>, vector<8x256xf32>
    tpu.vector_store %arg11[%c64_106, %c0_107], %150 {strides = array<i32>} : memref<72x512xf32, #tpu.memory_space<vmem>>, vector<8x256xf32>,
    %c0_108 = arith.constant 0 : index
    %c657 = arith.constant 657 : index
    %152 = vector.load %arg10[%c0_108, %c657] : memref<8x1024xf32, #tpu.memory_space<vmem>>, vector<8x256xf32>
    %153 = vector.broadcast %6 : vector<1x256xf32> to vector<8x256xf32>
    %154 = arith.mulf %152, %153 : vector<8x256xf32>
    %c64_109 = arith.constant 64 : index
    %c256_110 = arith.constant 256 : index
    %155 = vector.load %arg11[%c64_109, %c256_110] : memref<72x512xf32, #tpu.memory_space<vmem>>, vector<8x256xf32>
    tpu.vector_store %arg11[%c64_109, %c256_110], %154 {strides = array<i32>} : memref<72x512xf32, #tpu.memory_space<vmem>>, vector<8x256xf32>,
    %c72 = arith.constant 72 : index
    %c0_111 = arith.constant 0 : index
    %156 = vector.load %arg7[%c72, %c0_111] : memref<120x128xf32, #tpu.memory_space<vmem>>, vector<8x72xf32>
    %157 = arith.truncf %156 : vector<8x72xf32> to vector<8x72xbf16>
    %c0_112 = arith.constant 0 : index
    %c0_113 = arith.constant 0 : index
    %158 = vector.load %arg11[%c0_112, %c0_113] : memref<72x512xf32, #tpu.memory_space<vmem>>, vector<72x512xf32>
    %159 = arith.truncf %158 : vector<72x512xf32> to vector<72x512xbf16>
    %cst_114 = arith.constant dense<0.000000e+00> : vector<8x512xf32>
    %160 = tpu.matmul %157, %159, %cst_114 {dimension_numbers = #tpu.dot_dimension_numbers<[1], [0], [0], [1], [0, 0, 1, 1], [], []>} : vector<8x72xbf16>, vector<72x512xbf16>, vector<8x512xf32> -> vector<8x512xf32>
    %cst_115 = arith.constant 5.000000e-01 : f32
    %161 = vector.broadcast %cst_115 : f32 to vector<8x512xf32>
    %162 = arith.mulf %161, %160 : vector<8x512xf32>
    %163 = math.tanh %162 : vector<8x512xf32>
    %cst_116 = arith.constant 5.000000e-01 : f32
    %164 = vector.broadcast %cst_116 : f32 to vector<8x512xf32>
    %165 = arith.mulf %164, %163 : vector<8x512xf32>
    %cst_117 = arith.constant 5.000000e-01 : f32
    %166 = vector.broadcast %cst_117 : f32 to vector<8x512xf32>
    %167 = arith.addf %165, %166 : vector<8x512xf32>
    %168 = arith.mulf %160, %167 : vector<8x512xf32>
    %c80 = arith.constant 80 : index
    %c0_118 = arith.constant 0 : index
    %169 = vector.load %arg7[%c80, %c0_118] : memref<120x128xf32, #tpu.memory_space<vmem>>, vector<8x8xf32>
    %170 = arith.truncf %169 : vector<8x8xf32> to vector<8x8xbf16>
    %171 = arith.truncf %168 : vector<8x512xf32> to vector<8x512xbf16>
    %cst_119 = arith.constant dense<0.000000e+00> : vector<8x512xf32>
    %172 = tpu.matmul %170, %171, %cst_119 {dimension_numbers = #tpu.dot_dimension_numbers<[1], [0], [0], [1], [0, 0, 1, 1], [], []>} : vector<8x8xbf16>, vector<8x512xbf16>, vector<8x512xf32> -> vector<8x512xf32>
    %c72_120 = arith.constant 72 : index
    %c0_121 = arith.constant 0 : index
    %173 = vector.load %arg8[%c72_120, %c0_121] : memref<104x1xf32, #tpu.memory_space<vmem>>, vector<8x1xf32>
    %174 = vector.broadcast %173 : vector<8x1xf32> to vector<8x512xf32>
    %175 = arith.addf %172, %174 : vector<8x512xf32>
    %cst_122 = arith.constant 5.000000e-01 : f32
    %176 = vector.broadcast %cst_122 : f32 to vector<8x512xf32>
    %177 = arith.mulf %176, %175 : vector<8x512xf32>
    %178 = math.tanh %177 : vector<8x512xf32>
    %cst_123 = arith.constant 5.000000e-01 : f32
    %179 = vector.broadcast %cst_123 : f32 to vector<8x512xf32>
    %180 = arith.mulf %179, %178 : vector<8x512xf32>
    %cst_124 = arith.constant 5.000000e-01 : f32
    %181 = vector.broadcast %cst_124 : f32 to vector<8x512xf32>
    %182 = arith.addf %180, %181 : vector<8x512xf32>
    %183 = arith.mulf %175, %182 : vector<8x512xf32>
    %184 = vector.extract_strided_slice %183 {offsets = [0, 0], sizes = [8, 256], strides = [1, 1]} : vector<8x512xf32> to vector<8x256xf32>
    %c0_125 = arith.constant 0 : index
    %c128_126 = arith.constant 128 : index
    %185 = vector.load %arg10[%c0_125, %c128_126] : memref<8x1024xf32, #tpu.memory_space<vmem>>, vector<8x256xf32>
    tpu.vector_store %arg10[%c0_125, %c128_126], %184 {strides = array<i32>} : memref<8x1024xf32, #tpu.memory_space<vmem>>, vector<8x256xf32>,
    %186 = vector.extract_strided_slice %183 {offsets = [0, 256], sizes = [8, 256], strides = [1, 1]} : vector<8x512xf32> to vector<8x256xf32>
    %c0_127 = arith.constant 0 : index
    %c640_128 = arith.constant 640 : index
    %187 = vector.load %arg10[%c0_127, %c640_128] : memref<8x1024xf32, #tpu.memory_space<vmem>>, vector<8x256xf32>
    tpu.vector_store %arg10[%c0_127, %c640_128], %186 {strides = array<i32>} : memref<8x1024xf32, #tpu.memory_space<vmem>>, vector<8x256xf32>,
    %c0_129 = arith.constant 0 : index
    %c111_130 = arith.constant 111 : index
    %188 = vector.load %arg10[%c0_129, %c111_130] : memref<8x1024xf32, #tpu.memory_space<vmem>>, vector<8x256xf32>
    %189 = vector.broadcast %5 : vector<1x256xf32> to vector<8x256xf32>
    %190 = arith.mulf %188, %189 : vector<8x256xf32>
    %c0_131 = arith.constant 0 : index
    %c0_132 = arith.constant 0 : index
    %191 = vector.load %arg11[%c0_131, %c0_132] : memref<72x512xf32, #tpu.memory_space<vmem>>, vector<8x256xf32>
    tpu.vector_store %arg11[%c0_131, %c0_132], %190 {strides = array<i32>} : memref<72x512xf32, #tpu.memory_space<vmem>>, vector<8x256xf32>,
    %c0_133 = arith.constant 0 : index
    %c623_134 = arith.constant 623 : index
    %192 = vector.load %arg10[%c0_133, %c623_134] : memref<8x1024xf32, #tpu.memory_space<vmem>>, vector<8x256xf32>
    %193 = vector.broadcast %5 : vector<1x256xf32> to vector<8x256xf32>
    %194 = arith.mulf %192, %193 : vector<8x256xf32>
    %c0_135 = arith.constant 0 : index
    %c256_136 = arith.constant 256 : index
    %195 = vector.load %arg11[%c0_135, %c256_136] : memref<72x512xf32, #tpu.memory_space<vmem>>, vector<8x256xf32>
    tpu.vector_store %arg11[%c0_135, %c256_136], %194 {strides = array<i32>} : memref<72x512xf32, #tpu.memory_space<vmem>>, vector<8x256xf32>,
    %c0_137 = arith.constant 0 : index
    %c112_138 = arith.constant 112 : index
    %196 = vector.load %arg10[%c0_137, %c112_138] : memref<8x1024xf32, #tpu.memory_space<vmem>>, vector<8x256xf32>
    %c8_139 = arith.constant 8 : index
    %c0_140 = arith.constant 0 : index
    %197 = vector.load %arg11[%c8_139, %c0_140] : memref<72x512xf32, #tpu.memory_space<vmem>>, vector<8x256xf32>
    tpu.vector_store %arg11[%c8_139, %c0_140], %196 {strides = array<i32>} : memref<72x512xf32, #tpu.memory_space<vmem>>, vector<8x256xf32>,
    %c0_141 = arith.constant 0 : index
    %c624_142 = arith.constant 624 : index
    %198 = vector.load %arg10[%c0_141, %c624_142] : memref<8x1024xf32, #tpu.memory_space<vmem>>, vector<8x256xf32>
    %c8_143 = arith.constant 8 : index
    %c256_144 = arith.constant 256 : index
    %199 = vector.load %arg11[%c8_143, %c256_144] : memref<72x512xf32, #tpu.memory_space<vmem>>, vector<8x256xf32>
    tpu.vector_store %arg11[%c8_143, %c256_144], %198 {strides = array<i32>} : memref<72x512xf32, #tpu.memory_space<vmem>>, vector<8x256xf32>,
    %c0_145 = arith.constant 0 : index
    %c113_146 = arith.constant 113 : index
    %200 = vector.load %arg10[%c0_145, %c113_146] : memref<8x1024xf32, #tpu.memory_space<vmem>>, vector<8x256xf32>
    %201 = vector.broadcast %6 : vector<1x256xf32> to vector<8x256xf32>
    %202 = arith.mulf %200, %201 : vector<8x256xf32>
    %c16_147 = arith.constant 16 : index
    %c0_148 = arith.constant 0 : index
    %203 = vector.load %arg11[%c16_147, %c0_148] : memref<72x512xf32, #tpu.memory_space<vmem>>, vector<8x256xf32>
    tpu.vector_store %arg11[%c16_147, %c0_148], %202 {strides = array<i32>} : memref<72x512xf32, #tpu.memory_space<vmem>>, vector<8x256xf32>,
    %c0_149 = arith.constant 0 : index
    %c625_150 = arith.constant 625 : index
    %204 = vector.load %arg10[%c0_149, %c625_150] : memref<8x1024xf32, #tpu.memory_space<vmem>>, vector<8x256xf32>
    %205 = vector.broadcast %6 : vector<1x256xf32> to vector<8x256xf32>
    %206 = arith.mulf %204, %205 : vector<8x256xf32>
    %c16_151 = arith.constant 16 : index
    %c256_152 = arith.constant 256 : index
    %207 = vector.load %arg11[%c16_151, %c256_152] : memref<72x512xf32, #tpu.memory_space<vmem>>, vector<8x256xf32>
    tpu.vector_store %arg11[%c16_151, %c256_152], %206 {strides = array<i32>} : memref<72x512xf32, #tpu.memory_space<vmem>>, vector<8x256xf32>,
    %c0_153 = arith.constant 0 : index
    %c127_154 = arith.constant 127 : index
    %208 = vector.load %arg10[%c0_153, %c127_154] : memref<8x1024xf32, #tpu.memory_space<vmem>>, vector<8x256xf32>
    %209 = vector.broadcast %5 : vector<1x256xf32> to vector<8x256xf32>
    %210 = arith.mulf %208, %209 : vector<8x256xf32>
    %c24_155 = arith.constant 24 : index
    %c0_156 = arith.constant 0 : index
    %211 = vector.load %arg11[%c24_155, %c0_156] : memref<72x512xf32, #tpu.memory_space<vmem>>, vector<8x256xf32>
    tpu.vector_store %arg11[%c24_155, %c0_156], %210 {strides = array<i32>} : memref<72x512xf32, #tpu.memory_space<vmem>>, vector<8x256xf32>,
    %c0_157 = arith.constant 0 : index
    %c639_158 = arith.constant 639 : index
    %212 = vector.load %arg10[%c0_157, %c639_158] : memref<8x1024xf32, #tpu.memory_space<vmem>>, vector<8x256xf32>
    %213 = vector.broadcast %5 : vector<1x256xf32> to vector<8x256xf32>
    %214 = arith.mulf %212, %213 : vector<8x256xf32>
    %c24_159 = arith.constant 24 : index
    %c256_160 = arith.constant 256 : index
    %215 = vector.load %arg11[%c24_159, %c256_160] : memref<72x512xf32, #tpu.memory_space<vmem>>, vector<8x256xf32>
    tpu.vector_store %arg11[%c24_159, %c256_160], %214 {strides = array<i32>} : memref<72x512xf32, #tpu.memory_space<vmem>>, vector<8x256xf32>,
    %c0_161 = arith.constant 0 : index
    %c128_162 = arith.constant 128 : index
    %216 = vector.load %arg10[%c0_161, %c128_162] : memref<8x1024xf32, #tpu.memory_space<vmem>>, vector<8x256xf32>
    %c32_163 = arith.constant 32 : index
    %c0_164 = arith.constant 0 : index
    %217 = vector.load %arg11[%c32_163, %c0_164] : memref<72x512xf32, #tpu.memory_space<vmem>>, vector<8x256xf32>
    tpu.vector_store %arg11[%c32_163, %c0_164], %216 {strides = array<i32>} : memref<72x512xf32, #tpu.memory_space<vmem>>, vector<8x256xf32>,
    %c0_165 = arith.constant 0 : index
    %c640_166 = arith.constant 640 : index
    %218 = vector.load %arg10[%c0_165, %c640_166] : memref<8x1024xf32, #tpu.memory_space<vmem>>, vector<8x256xf32>
    %c32_167 = arith.constant 32 : index
    %c256_168 = arith.constant 256 : index
    %219 = vector.load %arg11[%c32_167, %c256_168] : memref<72x512xf32, #tpu.memory_space<vmem>>, vector<8x256xf32>
    tpu.vector_store %arg11[%c32_167, %c256_168], %218 {strides = array<i32>} : memref<72x512xf32, #tpu.memory_space<vmem>>, vector<8x256xf32>,
    %c0_169 = arith.constant 0 : index
    %c129_170 = arith.constant 129 : index
    %220 = vector.load %arg10[%c0_169, %c129_170] : memref<8x1024xf32, #tpu.memory_space<vmem>>, vector<8x256xf32>
    %221 = vector.broadcast %6 : vector<1x256xf32> to vector<8x256xf32>
    %222 = arith.mulf %220, %221 : vector<8x256xf32>
    %c40_171 = arith.constant 40 : index
    %c0_172 = arith.constant 0 : index
    %223 = vector.load %arg11[%c40_171, %c0_172] : memref<72x512xf32, #tpu.memory_space<vmem>>, vector<8x256xf32>
    tpu.vector_store %arg11[%c40_171, %c0_172], %222 {strides = array<i32>} : memref<72x512xf32, #tpu.memory_space<vmem>>, vector<8x256xf32>,
    %c0_173 = arith.constant 0 : index
    %c641_174 = arith.constant 641 : index
    %224 = vector.load %arg10[%c0_173, %c641_174] : memref<8x1024xf32, #tpu.memory_space<vmem>>, vector<8x256xf32>
    %225 = vector.broadcast %6 : vector<1x256xf32> to vector<8x256xf32>
    %226 = arith.mulf %224, %225 : vector<8x256xf32>
    %c40_175 = arith.constant 40 : index
    %c256_176 = arith.constant 256 : index
    %227 = vector.load %arg11[%c40_175, %c256_176] : memref<72x512xf32, #tpu.memory_space<vmem>>, vector<8x256xf32>
    tpu.vector_store %arg11[%c40_175, %c256_176], %226 {strides = array<i32>} : memref<72x512xf32, #tpu.memory_space<vmem>>, vector<8x256xf32>,
    %c0_177 = arith.constant 0 : index
    %c143_178 = arith.constant 143 : index
    %228 = vector.load %arg10[%c0_177, %c143_178] : memref<8x1024xf32, #tpu.memory_space<vmem>>, vector<8x256xf32>
    %229 = vector.broadcast %5 : vector<1x256xf32> to vector<8x256xf32>
    %230 = arith.mulf %228, %229 : vector<8x256xf32>
    %c48_179 = arith.constant 48 : index
    %c0_180 = arith.constant 0 : index
    %231 = vector.load %arg11[%c48_179, %c0_180] : memref<72x512xf32, #tpu.memory_space<vmem>>, vector<8x256xf32>
    tpu.vector_store %arg11[%c48_179, %c0_180], %230 {strides = array<i32>} : memref<72x512xf32, #tpu.memory_space<vmem>>, vector<8x256xf32>,
    %c0_181 = arith.constant 0 : index
    %c655_182 = arith.constant 655 : index
    %232 = vector.load %arg10[%c0_181, %c655_182] : memref<8x1024xf32, #tpu.memory_space<vmem>>, vector<8x256xf32>
    %233 = vector.broadcast %5 : vector<1x256xf32> to vector<8x256xf32>
    %234 = arith.mulf %232, %233 : vector<8x256xf32>
    %c48_183 = arith.constant 48 : index
    %c256_184 = arith.constant 256 : index
    %235 = vector.load %arg11[%c48_183, %c256_184] : memref<72x512xf32, #tpu.memory_space<vmem>>, vector<8x256xf32>
    tpu.vector_store %arg11[%c48_183, %c256_184], %234 {strides = array<i32>} : memref<72x512xf32, #tpu.memory_space<vmem>>, vector<8x256xf32>,
    %c0_185 = arith.constant 0 : index
    %c144_186 = arith.constant 144 : index
    %236 = vector.load %arg10[%c0_185, %c144_186] : memref<8x1024xf32, #tpu.memory_space<vmem>>, vector<8x256xf32>
    %c56_187 = arith.constant 56 : index
    %c0_188 = arith.constant 0 : index
    %237 = vector.load %arg11[%c56_187, %c0_188] : memref<72x512xf32, #tpu.memory_space<vmem>>, vector<8x256xf32>
    tpu.vector_store %arg11[%c56_187, %c0_188], %236 {strides = array<i32>} : memref<72x512xf32, #tpu.memory_space<vmem>>, vector<8x256xf32>,
    %c0_189 = arith.constant 0 : index
    %c656_190 = arith.constant 656 : index
    %238 = vector.load %arg10[%c0_189, %c656_190] : memref<8x1024xf32, #tpu.memory_space<vmem>>, vector<8x256xf32>
    %c56_191 = arith.constant 56 : index
    %c256_192 = arith.constant 256 : index
    %239 = vector.load %arg11[%c56_191, %c256_192] : memref<72x512xf32, #tpu.memory_space<vmem>>, vector<8x256xf32>
    tpu.vector_store %arg11[%c56_191, %c256_192], %238 {strides = array<i32>} : memref<72x512xf32, #tpu.memory_space<vmem>>, vector<8x256xf32>,
    %c0_193 = arith.constant 0 : index
    %c145_194 = arith.constant 145 : index
    %240 = vector.load %arg10[%c0_193, %c145_194] : memref<8x1024xf32, #tpu.memory_space<vmem>>, vector<8x256xf32>
    %241 = vector.broadcast %6 : vector<1x256xf32> to vector<8x256xf32>
    %242 = arith.mulf %240, %241 : vector<8x256xf32>
    %c64_195 = arith.constant 64 : index
    %c0_196 = arith.constant 0 : index
    %243 = vector.load %arg11[%c64_195, %c0_196] : memref<72x512xf32, #tpu.memory_space<vmem>>, vector<8x256xf32>
    tpu.vector_store %arg11[%c64_195, %c0_196], %242 {strides = array<i32>} : memref<72x512xf32, #tpu.memory_space<vmem>>, vector<8x256xf32>,
    %c0_197 = arith.constant 0 : index
    %c657_198 = arith.constant 657 : index
    %244 = vector.load %arg10[%c0_197, %c657_198] : memref<8x1024xf32, #tpu.memory_space<vmem>>, vector<8x256xf32>
    %245 = vector.broadcast %6 : vector<1x256xf32> to vector<8x256xf32>
    %246 = arith.mulf %244, %245 : vector<8x256xf32>
    %c64_199 = arith.constant 64 : index
    %c256_200 = arith.constant 256 : index
    %247 = vector.load %arg11[%c64_199, %c256_200] : memref<72x512xf32, #tpu.memory_space<vmem>>, vector<8x256xf32>
    tpu.vector_store %arg11[%c64_199, %c256_200], %246 {strides = array<i32>} : memref<72x512xf32, #tpu.memory_space<vmem>>, vector<8x256xf32>,
    %c88 = arith.constant 88 : index
    %c0_201 = arith.constant 0 : index
    %248 = vector.load %arg7[%c88, %c0_201] : memref<120x128xf32, #tpu.memory_space<vmem>>, vector<8x72xf32>
    %249 = arith.truncf %248 : vector<8x72xf32> to vector<8x72xbf16>
    %c0_202 = arith.constant 0 : index
    %c0_203 = arith.constant 0 : index
    %250 = vector.load %arg11[%c0_202, %c0_203] : memref<72x512xf32, #tpu.memory_space<vmem>>, vector<72x512xf32>
    %251 = arith.truncf %250 : vector<72x512xf32> to vector<72x512xbf16>
    %cst_204 = arith.constant dense<0.000000e+00> : vector<8x512xf32>
    %252 = tpu.matmul %249, %251, %cst_204 {dimension_numbers = #tpu.dot_dimension_numbers<[1], [0], [0], [1], [0, 0, 1, 1], [], []>} : vector<8x72xbf16>, vector<72x512xbf16>, vector<8x512xf32> -> vector<8x512xf32>
    %cst_205 = arith.constant 5.000000e-01 : f32
    %253 = vector.broadcast %cst_205 : f32 to vector<8x512xf32>
    %254 = arith.mulf %253, %252 : vector<8x512xf32>
    %255 = math.tanh %254 : vector<8x512xf32>
    %cst_206 = arith.constant 5.000000e-01 : f32
    %256 = vector.broadcast %cst_206 : f32 to vector<8x512xf32>
    %257 = arith.mulf %256, %255 : vector<8x512xf32>
    %cst_207 = arith.constant 5.000000e-01 : f32
    %258 = vector.broadcast %cst_207 : f32 to vector<8x512xf32>
    %259 = arith.addf %257, %258 : vector<8x512xf32>
    %260 = arith.mulf %252, %259 : vector<8x512xf32>
    %261 = tpu.concatenate %76, %168, %260 in 0 : vector<16x512xf32>, vector<8x512xf32>, vector<8x512xf32> -> vector<32x512xf32>
    %262 = arith.truncf %261 : vector<32x512xf32> to vector<32x512xbf16>
    %c96 = arith.constant 96 : index
    %c0_208 = arith.constant 0 : index
    %263 = vector.load %arg7[%c96, %c0_208] : memref<120x128xf32, #tpu.memory_space<vmem>>, vector<8x32xf32>
    %264 = arith.truncf %263 : vector<8x32xf32> to vector<8x32xbf16>
    %cst_209 = arith.constant dense<0.000000e+00> : vector<8x512xf32>
    %265 = tpu.matmul %264, %262, %cst_209 {dimension_numbers = #tpu.dot_dimension_numbers<[1], [0], [0], [1], [0, 0, 1, 1], [], []>} : vector<8x32xbf16>, vector<32x512xbf16>, vector<8x512xf32> -> vector<8x512xf32>
    %c80_210 = arith.constant 80 : index
    %c0_211 = arith.constant 0 : index
    %266 = vector.load %arg8[%c80_210, %c0_211] : memref<104x1xf32, #tpu.memory_space<vmem>>, vector<8x1xf32>
    %267 = vector.broadcast %266 : vector<8x1xf32> to vector<8x512xf32>
    %268 = arith.addf %265, %267 : vector<8x512xf32>
    %cst_212 = arith.constant 5.000000e-01 : f32
    %269 = vector.broadcast %cst_212 : f32 to vector<8x512xf32>
    %270 = arith.mulf %269, %268 : vector<8x512xf32>
    %271 = math.tanh %270 : vector<8x512xf32>
    %cst_213 = arith.constant 5.000000e-01 : f32
    %272 = vector.broadcast %cst_213 : f32 to vector<8x512xf32>
    %273 = arith.mulf %272, %271 : vector<8x512xf32>
    %cst_214 = arith.constant 5.000000e-01 : f32
    %274 = vector.broadcast %cst_214 : f32 to vector<8x512xf32>
    %275 = arith.addf %273, %274 : vector<8x512xf32>
    %276 = arith.mulf %268, %275 : vector<8x512xf32>
    %277 = tpu.concatenate %260, %276 in 0 : vector<8x512xf32>, vector<8x512xf32> -> vector<16x512xf32>
    %278 = arith.truncf %277 : vector<16x512xf32> to vector<16x512xbf16>
    %c104 = arith.constant 104 : index
    %c0_215 = arith.constant 0 : index
    %279 = vector.load %arg7[%c104, %c0_215] : memref<120x128xf32, #tpu.memory_space<vmem>>, vector<16x16xf32>
    %280 = arith.truncf %279 : vector<16x16xf32> to vector<16x16xbf16>
    %cst_216 = arith.constant dense<0.000000e+00> : vector<16x512xf32>
    %281 = tpu.matmul %280, %278, %cst_216 {dimension_numbers = #tpu.dot_dimension_numbers<[1], [0], [0], [1], [0, 0, 1, 1], [], []>} : vector<16x16xbf16>, vector<16x512xbf16>, vector<16x512xf32> -> vector<16x512xf32>
    %c88_217 = arith.constant 88 : index
    %c0_218 = arith.constant 0 : index
    %282 = vector.load %arg8[%c88_217, %c0_218] : memref<104x1xf32, #tpu.memory_space<vmem>>, vector<16x1xf32>
    %283 = vector.broadcast %282 : vector<16x1xf32> to vector<16x512xf32>
    %284 = arith.addf %281, %283 : vector<16x512xf32>
    %cst_219 = arith.constant 5.000000e-01 : f32
    %285 = vector.broadcast %cst_219 : f32 to vector<16x512xf32>
    %286 = arith.mulf %285, %284 : vector<16x512xf32>
    %287 = math.tanh %286 : vector<16x512xf32>
    %cst_220 = arith.constant 5.000000e-01 : f32
    %288 = vector.broadcast %cst_220 : f32 to vector<16x512xf32>
    %289 = arith.mulf %288, %287 : vector<16x512xf32>
    %cst_221 = arith.constant 5.000000e-01 : f32
    %290 = vector.broadcast %cst_221 : f32 to vector<16x512xf32>
    %291 = arith.addf %289, %290 : vector<16x512xf32>
    %292 = arith.mulf %284, %291 : vector<16x512xf32>
    %c0_222 = arith.constant 0 : index
    %c0_223 = arith.constant 0 : index
    %c0_224 = arith.constant 0 : index
    %293 = vector.load %arg9[%c0_222, %c0_223, %c0_224] : memref<1x16x512xf32, #tpu.memory_space<vmem>>, vector<1x16x512xf32>
    %294 = vector.shape_cast %293 : vector<1x16x512xf32> to vector<16x512xf32>
    %295 = vector.shape_cast %292 : vector<16x512xf32> to vector<1x16x512xf32>
    tpu.vector_store %arg9[%c0_222, %c0_223, %c0_224], %295 {strides = array<i32>} : memref<1x16x512xf32, #tpu.memory_space<vmem>>, vector<1x16x512xf32>,
    return
  }
  func.func @transform_0(%arg0: i32) -> (i32, i32, i32) {
    %c0_i32 = arith.constant 0 : i32
    %c0_i32_0 = arith.constant 0 : i32
    %c0_i32_1 = arith.constant 0 : i32
    return %arg0, %c0_i32, %c0_i32_0 : i32, i32, i32
  }
  func.func @transform_1(%arg0: i32) -> (i32, i32, i32) {
    %c0_i32 = arith.constant 0 : i32
    %c0_i32_0 = arith.constant 0 : i32
    %c0_i32_1 = arith.constant 0 : i32
    return %arg0, %c0_i32, %c0_i32_0 : i32, i32, i32
  }
  func.func @transform_2(%arg0: i32) -> (i32, i32, i32) {
    %c0_i32 = arith.constant 0 : i32
    %c0_i32_0 = arith.constant 0 : i32
    %c0_i32_1 = arith.constant 0 : i32
    return %arg0, %c0_i32, %c0_i32_0 : i32, i32, i32
  }
  func.func @transform_3(%arg0: i32) -> (i32, i32) {
    %c0_i32 = arith.constant 0 : i32
    %c0_i32_0 = arith.constant 0 : i32
    %c0_i32_1 = arith.constant 0 : i32
    return %c0_i32, %c0_i32_0 : i32, i32
  }
  func.func @transform_4(%arg0: i32) -> (i32, i32) {
    %c0_i32 = arith.constant 0 : i32
    %c0_i32_0 = arith.constant 0 : i32
    %c0_i32_1 = arith.constant 0 : i32
    return %c0_i32, %c0_i32_0 : i32, i32
  }
  func.func @transform_5(%arg0: i32) -> (i32, i32) {
    %c0_i32 = arith.constant 0 : i32
    %c0_i32_0 = arith.constant 0 : i32
    %c0_i32_1 = arith.constant 0 : i32
    return %c0_i32, %c0_i32_0 : i32, i32
  }
  func.func @transform_6(%arg0: i32) -> (i32, i32) {
    %c0_i32 = arith.constant 0 : i32
    %c0_i32_0 = arith.constant 0 : i32
    %c0_i32_1 = arith.constant 0 : i32
    return %c0_i32, %c0_i32_0 : i32, i32
  }
  func.func @transform_7(%arg0: i32) -> (i32, i32) {
    %c0_i32 = arith.constant 0 : i32
    %c0_i32_0 = arith.constant 0 : i32
    %c0_i32_1 = arith.constant 0 : i32
    return %c0_i32, %c0_i32_0 : i32, i32
  }
  func.func @transform_8(%arg0: i32) -> (i32, i32, i32) {
    %c0_i32 = arith.constant 0 : i32
    %c0_i32_0 = arith.constant 0 : i32
    %c0_i32_1 = arith.constant 0 : i32
    return %arg0, %c0_i32, %c0_i32_0 : i32, i32, i32
  }
}

</mosaic_0001>

<llo_original>
// kernel: tpu_custom_call.1
$region0: #{tpu_custom_call.1}
  #allocation0 [shape = 'u32[]', space=smem, size = 0x4, offset = 0x4, fixed_abs, tag = 'smem constant byte address 0x4 - core index']
  #allocation1 [shape = 'u32[144,128]{1,0:T(1,128)}', space=vmem, size = 0x12000, scoped, tag = 'internal scratch']
  #allocation2 [shape = 'f32[8,1024]{1,0:T(8,128)}', space=vmem, size = 0x8000, scoped, tag = 'scratch operand']
  #allocation3 [shape = 'f32[72,512]{1,0:T(8,128)}', space=vmem, size = 0x24000, scoped, tag = 'scratch operand']
  %s0 = inlined_call_operand.hbm [shape: bf16[1,8,512], index: 0, kind: input, shape index: {}]
  %s1 = inlined_call_operand.hbm [shape: bf16[1,16,128], index: 1, kind: input, shape index: {}]
  %s2 = inlined_call_operand.hbm [shape: bf16[1,32,32], index: 2, kind: input, shape index: {}]
  %s3 = inlined_call_operand.hbm [shape: bf16[128,512], index: 3, kind: input, shape index: {}]
  %s4 = inlined_call_operand.hbm [shape: bf16[32,512], index: 4, kind: input, shape index: {}]
  %s5 = inlined_call_operand.vmem [shape: f32[2,256], index: 5, kind: input, shape index: {}]
  %s6 = inlined_call_operand.vmem [shape: f32[120,128], index: 6, kind: input, shape index: {}]
  %s7 = inlined_call_operand.vmem [shape: f32[104,1], index: 7, kind: input, shape index: {}]
  %s8 = inlined_call_operand.hbm [shape: f32[1,16,512], index: 8, kind: output, shape index: {}]
  %s9 = sld [smem:[#allocation0]]
  $region62: #{tpu_custom_call.1} parent=0
    _
  %s11 = ssub.s32 1, %s9
  %s12 = scalar_select 0, %s11, %s9
  $region1: #{tpu_custom_call.1} parent=0
    #allocation4 [shape = 'u8[8192]{0}', space=vmem, size = 0x2000, scoped, tag = 'input window, operand 0, single buffered']
    #allocation5 [shape = 's32[1]{0}', space=sflag, size = 0x4, scoped, tag = 'scoped memory for tpu_custom_call.1']
    #allocation6 [shape = 's32[1]{0}', space=sflag, size = 0x4, scoped, tag = 'scoped memory for tpu_custom_call.1']
    #allocation7 [shape = 'u8[4096]{0}', space=vmem, size = 0x1000, scoped, tag = 'input window, operand 1, single buffered']
    #allocation8 [shape = 's32[1]{0}', space=sflag, size = 0x4, scoped, tag = 'scoped memory for tpu_custom_call.1']
    #allocation9 [shape = 'u8[8192]{0}', space=vmem, size = 0x2000, scoped, tag = 'input window, operand 2, single buffered']
    #allocation10 [shape = 'u8[131072]{0}', space=vmem, size = 0x20000, scoped, tag = 'input window, operand 3, single buffered']
    #allocation11 [shape = 's32[1]{0}', space=sflag, size = 0x4, scoped, tag = 'scoped memory for tpu_custom_call.1']
    #allocation12 [shape = 'u8[32768]{0}', space=vmem, size = 0x8000, scoped, tag = 'input window, operand 4, single buffered']
    #allocation13 [shape = 'u8[32768]{0}', space=vmem, size = 0x8000, scoped, tag = 'output window, operand 0, single buffered']
    %13 = vsyncpa [#allocation5], 0
    %14 = vsyncpa [#allocation8], 0
    %15 = vsyncpa [#allocation11], 0
    %16 = vsyncpa [#allocation6], 0
    // Predicated region
    $region2: #{tpu_custom_call.1} parent=1 // pred_check
      _
    $region3: #{tpu_custom_call.1} parent=1 // pred_check_branch
      %18 = sbr.rel (0) target = $region5
    $region4: #{tpu_custom_call.1} parent=1 // pred_region
      %s20 = ssub.s32 256, 256
      %21 = vsyncadd [#allocation5], %s20
      %s23 = sshll.u32 [#allocation4], 4
      %s24 = int_to_ptr.vmem [resolvable:$true] %s23
      %26 = dma.hbm_to_vmem [thread:$0]  %s0, 256, %s24, [#allocation5]
    $region5: #{tpu_custom_call.1} parent=1 // pred_fallthru
      _
    // Predicated region
    $region6: #{tpu_custom_call.1} parent=1 // pred_check
      _
    $region7: #{tpu_custom_call.1} parent=1 // pred_check_branch
      %28 = sbr.rel (0) target = $region9
    $region8: #{tpu_custom_call.1} parent=1 // pred_region
      %s30 = ssub.s32 128, 128
      %31 = vsyncadd [#allocation8], %s30
      %s32 = sshll.u32 [#allocation7], 4
      %s33 = int_to_ptr.vmem [resolvable:$true] %s32
      %38 = dma.hbm_to_vmem [thread:$0]  %s1, 128, %s33, [#allocation8], 64, 64, 4
    $region9: #{tpu_custom_call.1} parent=1 // pred_fallthru
      _
    // Predicated region
    $region10: #{tpu_custom_call.1} parent=1 // pred_check
      _
    $region11: #{tpu_custom_call.1} parent=1 // pred_check_branch
      %40 = sbr.rel (0) target = $region13
    $region12: #{tpu_custom_call.1} parent=1 // pred_region
      %s42 = ssub.s32 256, 256
      %43 = vsyncadd [#allocation8], %s42
      %s44 = sshll.u32 [#allocation9], 4
      %s45 = int_to_ptr.vmem [resolvable:$true] %s44
      %50 = dma.hbm_to_vmem [thread:$0]  %s2, 256, %s45, [#allocation8], 64, 64, 4
    $region13: #{tpu_custom_call.1} parent=1 // pred_fallthru
      _
    // Predicated region
    $region14: #{tpu_custom_call.1} parent=1 // pred_check
      _
    $region15: #{tpu_custom_call.1} parent=1 // pred_check_branch
      %52 = sbr.rel (0) target = $region17
    $region16: #{tpu_custom_call.1} parent=1 // pred_region
      %s54 = ssub.s32 4096, 4096
      %55 = vsyncadd [#allocation11], %s54
      %s56 = sshll.u32 [#allocation10], 4
      %s57 = int_to_ptr.vmem [resolvable:$true] %s56
      %62 = dma.hbm_to_vmem [thread:$0]  %s3, 4096, %s57, [#allocation11], 256, 256, 16
    $region17: #{tpu_custom_call.1} parent=1 // pred_fallthru
      _
    // Predicated region
    $region18: #{tpu_custom_call.1} parent=1 // pred_check
      _
    $region19: #{tpu_custom_call.1} parent=1 // pred_check_branch
      %64 = sbr.rel (0) target = $region21
    $region20: #{tpu_custom_call.1} parent=1 // pred_region
      %s66 = ssub.s32 1024, 1024
      %67 = vsyncadd [#allocation11], %s66
      %s68 = sshll.u32 [#allocation12], 4
      %s69 = int_to_ptr.vmem [resolvable:$true] %s68
      %74 = dma.hbm_to_vmem [thread:$0]  %s4, 1024, %s69, [#allocation11], 256, 256, 16
    $region21: #{tpu_custom_call.1} parent=1 // pred_fallthru
      _
    // Predicated region
    $region22: #{tpu_custom_call.1} parent=1 // pred_check
      _
    $region23: #{tpu_custom_call.1} parent=1 // pred_check_branch
      %76 = sbr.rel (0) target = $region25
    $region24: #{tpu_custom_call.1} parent=1 // pred_region
      _
    $region25: #{tpu_custom_call.1} parent=1 // pred_fallthru
      _
    // Predicated region
    $region26: #{tpu_custom_call.1} parent=1 // pred_check
      _
    $region27: #{tpu_custom_call.1} parent=1 // pred_check_branch
      %78 = sbr.rel (0) target = $region29
    $region28: #{tpu_custom_call.1} parent=1 // pred_region
      _
    $region29: #{tpu_custom_call.1} parent=1 // pred_fallthru
      _
    // Predicated region
    $region30: #{tpu_custom_call.1} parent=1 // pred_check
      _
    $region31: #{tpu_custom_call.1} parent=1 // pred_check_branch
      %80 = sbr.rel (0) target = $region33
    $region32: #{tpu_custom_call.1} parent=1 // pred_region
      _
    $region33: #{tpu_custom_call.1} parent=1 // pred_fallthru
      _
    // Predicated region
    $region34: #{tpu_custom_call.1} parent=1 // pred_check
      _
    $region35: #{tpu_custom_call.1} parent=1 // pred_check_branch
      %82 = sbr.rel (0) target = $region37
    $region36: #{tpu_custom_call.1} parent=1 // pred_region
      %83 = dma.done [#allocation5], 256
    $region37: #{tpu_custom_call.1} parent=1 // pred_fallthru
      _
    // Predicated region
    $region38: #{tpu_custom_call.1} parent=1 // pred_check
      _
    $region39: #{tpu_custom_call.1} parent=1 // pred_check_branch
      %85 = sbr.rel (0) target = $region41
    $region40: #{tpu_custom_call.1} parent=1 // pred_region
      %86 = dma.done [#allocation8], 128
    $region41: #{tpu_custom_call.1} parent=1 // pred_fallthru
      _
    // Predicated region
    $region42: #{tpu_custom_call.1} parent=1 // pred_check
      _
    $region43: #{tpu_custom_call.1} parent=1 // pred_check_branch
      %88 = sbr.rel (0) target = $region45
    $region44: #{tpu_custom_call.1} parent=1 // pred_region
      %89 = dma.done [#allocation8], 256
    $region45: #{tpu_custom_call.1} parent=1 // pred_fallthru
      _
    // Predicated region
    $region46: #{tpu_custom_call.1} parent=1 // pred_check
      _
    $region47: #{tpu_custom_call.1} parent=1 // pred_check_branch
      %91 = sbr.rel (0) target = $region49
    $region48: #{tpu_custom_call.1} parent=1 // pred_region
      %92 = dma.done [#allocation11], 4096
    $region49: #{tpu_custom_call.1} parent=1 // pred_fallthru
      _
    // Predicated region
    $region50: #{tpu_custom_call.1} parent=1 // pred_check
      _
    $region51: #{tpu_custom_call.1} parent=1 // pred_check_branch
      %94 = sbr.rel (0) target = $region53
    $region52: #{tpu_custom_call.1} parent=1 // pred_region
      %95 = dma.done [#allocation11], 1024
    $region53: #{tpu_custom_call.1} parent=1 // pred_fallthru
      _
    %97 = vst [vmem:[#allocation2] sm:$0xff] 0.0
    %98 = vst [vmem:[#allocation2 + $0x18] sm:$0xff] 0.0
    %99 = vst [vmem:[#allocation2 + $0x20] sm:$0xff] 0.0
    %100 = vst [vmem:[#allocation2 + $0x38] sm:$0xff] 0.0
    %v101 = vld [vmem:[%s5] ss:$2 sm:$0x3]
    %s102 = scalar_lea.vmem %s5, 1
    %v103 = vld [vmem:[%s102] ss:$2 sm:$0x3]
    %v104 = vld [vmem:[%s6] sm:$0xff]
    %v105 = vld [vmem:[%s6 + $0x8] sm:$0xff]
    %v106 = vpack.c.bf16 %v105, %v104
    %v107 = vld [vmem:[#allocation4] sm:$0xff]
    %v108 = vld [vmem:[#allocation4 + $0x8] sm:$0xff]
    %v109 = vld [vmem:[%s7] sm:$0xff]
    %v110 = vld [vmem:[%s7 + $0x8] sm:$0xff]
    %112 = vset.pattern.permute.xlu0 0
    %113 = vperm.xlu0 %112, %v109
    %v114 = vpop.permute.xlu0 %113
    %117 = vset.pattern.permute.xlu0 0
    %118 = vperm.xlu0 %117, %v110
    %v119 = vpop.permute.xlu0 %118
    %v123 = vunpack.c.l.b16 %v107
    %v124 = vunpack.c.h.b16 %v107
    %v125 = vunpack.c.l.b16 %v108
    %v126 = vunpack.c.h.b16 %v108
    %v127 = vpack.c.b16 %v123, %v123
    %v128 = vpack.c.b16 %v124, %v124
    %v129 = vpack.c.b16 %v125, %v125
    %v130 = vpack.c.b16 %v126, %v126
    %vm131 = vcmask 64512
    %v133 = vsel %vm131, %v106, 0
    %vm135 = vcmask 1043456
    %v137 = vsel %vm135, %v127, 0
    %v140 = vsel %vm135, %v128, 0
    %v143 = vsel %vm135, %v129, 0
    %v146 = vsel %vm135, %v130, 0
    %148 = vmatprep.subr.bf16.mxu0 %v140
    %149 = vmatpush1.bf16.msra.mxu0 %v137
    %150 = vmatprep.subr.bf16.mxu0 0
    %151 = vmatpush1.bf16.msra.mxu0 0
    %152 = vmatprep.subr.bf16.mxu0 0
    %153 = vmatpush1.bf16.msra.mxu0 0
    %154 = vmatprep.subr.bf16.mxu0 0
    %155 = vmatpush1.bf16.msra.mxu0 0
    %156 = vmatprep.subr.bf16.mxu0 0
    %157 = vmatpush1.bf16.msra.mxu0 0
    %158 = vmatprep.subr.bf16.mxu0 0
    %159 = vmatpush1.bf16.msra.mxu0 0
    %160 = vmatprep.subr.bf16.mxu0 0
    %161 = vmatpush1.bf16.msra.mxu0 0
    %162 = vmatprep.subr.bf16.mxu0 0
    %163 = vmatpush1.bf16.msra.mxu0 0
    %164 = vmatprep.subr.bf16.mxu0 0
    %165 = vmatpush1.bf16.msra.mxu0 0
    %166 = vmatprep.subr.bf16.mxu0 0
    %167 = vmatpush1.bf16.msra.mxu0 0
    %168 = vmatprep.subr.bf16.mxu0 0
    %169 = vmatpush1.bf16.msra.mxu0 0
    %170 = vmatprep.subr.bf16.mxu0 0
    %171 = vmatpush1.bf16.msra.mxu0 0
    %172 = vmatprep.subr.bf16.mxu0 0
    %173 = vmatpush1.bf16.msra.mxu0 0
    %174 = vmatprep.subr.bf16.mxu0 0
    %175 = vmatpush1.bf16.msra.mxu0 0
    %176 = vmatprep.subr.bf16.mxu0 0
    %177 = vmatpush1.bf16.msra.mxu0 0
    %178 = vmatprep.subr.bf16.mxu0 0
    %179 = vmatpush1.bf16.msra.mxu0 0
    %180 = vmatprep.mubr.bf16.mxu0 0
    %181 = vmatmul.mubr.bf16.gmra.mrb[0].mxu0 %v133
    %v182 = vpop.f32.mrb[0].mxu0
    %v183 = vadd.f32 %v114, %v182
    %v184 = vpop.f32.mrb[0].mxu0
    %v185 = vadd.f32 %v114, %v184
    %v186 = vpop.f32.mrb[0].mxu0
    %v187 = vadd.f32 %v119, %v186
    %v188 = vpop.f32.mrb[0].mxu0
    %v189 = vadd.f32 %v119, %v188
    %190 = vdwg.mxu0
    %191 = vmatprep.subr.bf16.mxu0 %v146
    %192 = vmatpush1.bf16.msra.mxu0 %v143
    %193 = vmatprep.subr.bf16.mxu0 0
    %194 = vmatpush1.bf16.msra.mxu0 0
    %195 = vmatprep.subr.bf16.mxu0 0
    %196 = vmatpush1.bf16.msra.mxu0 0
    %197 = vmatprep.subr.bf16.mxu0 0
    %198 = vmatpush1.bf16.msra.mxu0 0
    %199 = vmatprep.subr.bf16.mxu0 0
    %200 = vmatpush1.bf16.msra.mxu0 0
    %201 = vmatprep.subr.bf16.mxu0 0
    %202 = vmatpush1.bf16.msra.mxu0 0
    %203 = vmatprep.subr.bf16.mxu0 0
    %204 = vmatpush1.bf16.msra.mxu0 0
    %205 = vmatprep.subr.bf16.mxu0 0
    %206 = vmatpush1.bf16.msra.mxu0 0
    %207 = vmatprep.subr.bf16.mxu0 0
    %208 = vmatpush1.bf16.msra.mxu0 0
    %209 = vmatprep.subr.bf16.mxu0 0
    %210 = vmatpush1.bf16.msra.mxu0 0
    %211 = vmatprep.subr.bf16.mxu0 0
    %212 = vmatpush1.bf16.msra.mxu0 0
    %213 = vmatprep.subr.bf16.mxu0 0
    %214 = vmatpush1.bf16.msra.mxu0 0
    %215 = vmatprep.subr.bf16.mxu0 0
    %216 = vmatpush1.bf16.msra.mxu0 0
    %217 = vmatprep.subr.bf16.mxu0 0
    %218 = vmatpush1.bf16.msra.mxu0 0
    %219 = vmatprep.subr.bf16.mxu0 0
    %220 = vmatpush1.bf16.msra.mxu0 0
    %221 = vmatprep.subr.bf16.mxu0 0
    %222 = vmatpush1.bf16.msra.mxu0 0
    %223 = vmatprep.mubr.bf16.mxu0 0
    %224 = vmatmul.mubr.bf16.gmra.mrb[0].mxu0 %v133
    %v225 = vpop.f32.mrb[0].mxu0
    %v226 = vadd.f32 %v114, %v225
    %v227 = vpop.f32.mrb[0].mxu0
    %v228 = vadd.f32 %v114, %v227
    %v229 = vpop.f32.mrb[0].mxu0
    %v230 = vadd.f32 %v119, %v229
    %v231 = vpop.f32.mrb[0].mxu0
    %v232 = vadd.f32 %v119, %v231
    %233 = vdwg.mxu0
    %v234 = vmul.f32 %v183, 0.5
    %v235 = vmul.f32 %v185, 0.5
    %v236 = vmul.f32 %v226, 0.5
    %v237 = vmul.f32 %v228, 0.5
    %v238 = vmul.f32 %v187, 0.5
    %v239 = vmul.f32 %v189, 0.5
    %v240 = vmul.f32 %v230, 0.5
    %v241 = vmul.f32 %v232, 0.5
    %v242 = vtanh.pop %v234
    %v243 = vtanh.pop %v235
    %v244 = vtanh.pop %v236
    %v245 = vtanh.pop %v237
    %v246 = vtanh.pop %v238
    %v247 = vtanh.pop %v239
    %v248 = vtanh.pop %v240
    %v249 = vtanh.pop %v241
    %v250 = vmul.f32 %v242, 0.5
    %v251 = vmul.f32 %v243, 0.5
    %v252 = vmul.f32 %v244, 0.5
    %v253 = vmul.f32 %v245, 0.5
    %v254 = vmul.f32 %v246, 0.5
    %v255 = vmul.f32 %v247, 0.5
    %v256 = vmul.f32 %v248, 0.5
    %v257 = vmul.f32 %v249, 0.5
    %v258 = vadd.f32 %v250, 0.5
    %v259 = vadd.f32 %v251, 0.5
    %v260 = vadd.f32 %v252, 0.5
    %v261 = vadd.f32 %v253, 0.5
    %v262 = vadd.f32 %v254, 0.5
    %v263 = vadd.f32 %v255, 0.5
    %v264 = vadd.f32 %v256, 0.5
    %v265 = vadd.f32 %v257, 0.5
    %v266 = vmul.f32 %v183, %v258
    %v267 = vmul.f32 %v185, %v259
    %v268 = vmul.f32 %v226, %v260
    %v269 = vmul.f32 %v228, %v261
    %v270 = vmul.f32 %v187, %v262
    %v271 = vmul.f32 %v189, %v263
    %v272 = vmul.f32 %v230, %v264
    %v273 = vmul.f32 %v232, %v265
    %v274 = vld [vmem:[%s6 + $0x10] sm:$0xff]
    %v275 = vld [vmem:[%s6 + $0x18] sm:$0xff]
    %v276 = vpack.c.bf16 %v275, %v274
    %v277 = vld [vmem:[#allocation7] sm:$0xf]
    %v278 = vld [vmem:[#allocation7 + $0x4] sm:$0xf]
    %v279 = vld [vmem:[%s7 + $0x10] sm:$0xff]
    %v280 = vld [vmem:[%s7 + $0x18] sm:$0xff]
    %282 = vset.pattern.permute.xlu0 0
    %283 = vperm.xlu0 %282, %v279
    %v284 = vpop.permute.xlu0 %283
    %287 = vset.pattern.permute.xlu0 0
    %288 = vperm.xlu0 %287, %v280
    %v289 = vpop.permute.xlu0 %288
    %v293 = vunpack.c.l.b16 %v277
    %v294 = vunpack.c.l.b16 %v278
    %v295 = vpack.c.b16 %v294, %v293
    %vm297 = vcmask 130048
    %v299 = vsel %vm297, %v276, 0
    %301 = vmatprep.subr.bf16.mxu0 0
    %302 = vmatpush1.bf16.msra.mxu0 %v295
    %303 = vmatprep.subr.bf16.mxu0 0
    %304 = vmatpush1.bf16.msra.mxu0 0
    %305 = vmatprep.subr.bf16.mxu0 0
    %306 = vmatpush1.bf16.msra.mxu0 0
    %307 = vmatprep.subr.bf16.mxu0 0
    %308 = vmatpush1.bf16.msra.mxu0 0
    %309 = vmatprep.subr.bf16.mxu0 0
    %310 = vmatpush1.bf16.msra.mxu0 0
    %311 = vmatprep.subr.bf16.mxu0 0
    %312 = vmatpush1.bf16.msra.mxu0 0
    %313 = vmatprep.subr.bf16.mxu0 0
    %314 = vmatpush1.bf16.msra.mxu0 0
    %315 = vmatprep.subr.bf16.mxu0 0
    %316 = vmatpush1.bf16.msra.mxu0 0
    %317 = vmatprep.subr.bf16.mxu0 0
    %318 = vmatpush1.bf16.msra.mxu0 0
    %319 = vmatprep.subr.bf16.mxu0 0
    %320 = vmatpush1.bf16.msra.mxu0 0
    %321 = vmatprep.subr.bf16.mxu0 0
    %322 = vmatpush1.bf16.msra.mxu0 0
    %323 = vmatprep.subr.bf16.mxu0 0
    %324 = vmatpush1.bf16.msra.mxu0 0
    %325 = vmatprep.subr.bf16.mxu0 0
    %326 = vmatpush1.bf16.msra.mxu0 0
    %327 = vmatprep.subr.bf16.mxu0 0
    %328 = vmatpush1.bf16.msra.mxu0 0
    %329 = vmatprep.subr.bf16.mxu0 0
    %330 = vmatpush1.bf16.msra.mxu0 0
    %331 = vmatprep.subr.bf16.mxu0 0
    %332 = vmatpush1.bf16.msra.mxu0 0
    %333 = vmatprep.mubr.bf16.mxu0 0
    %334 = vmatmul.mubr.bf16.gmra.mrb[0].mxu0 %v299
    %v335 = vpop.f32.mrb[0].mxu0
    %v336 = vadd.f32 %v284, %v335
    %v337 = vpop.f32.mrb[0].mxu0
    %v338 = vpop.f32.mrb[0].mxu0
    %v339 = vadd.f32 %v289, %v338
    %v340 = vpop.f32.mrb[0].mxu0
    %341 = vdwg.mxu0
    %v342 = vmul.f32 %v336, 0.5
    %v343 = vmul.f32 %v339, 0.5
    %v344 = vtanh.pop %v342
    %v345 = vtanh.pop %v343
    %v346 = vmul.f32 %v344, 0.5
    %v347 = vmul.f32 %v345, 0.5
    %v348 = vadd.f32 %v346, 0.5
    %v349 = vadd.f32 %v347, 0.5
    %v350 = vmul.f32 %v336, %v348
    %v351 = vmul.f32 %v339, %v349
    %v352 = vld [vmem:[%s6 + $0x20] sm:$0xff]
    %v353 = vld [vmem:[%s6 + $0x28] sm:$0xff]
    %v354 = vpack.c.bf16 %v353, %v352
    %v355 = vld [vmem:[#allocation9] sm:$0xf]
    %v356 = vld [vmem:[#allocation9 + $0x4] sm:$0xf]
    %v357 = vld [vmem:[#allocation9 + $0x8] sm:$0xf]
    %v358 = vld [vmem:[#allocation9 + $0xc] sm:$0xf]
    %v359 = vld [vmem:[%s7 + $0x20] sm:$0xff]
    %v360 = vld [vmem:[%s7 + $0x28] sm:$0xff]
    %362 = vset.pattern.permute.xlu0 0
    %363 = vperm.xlu0 %362, %v359
    %v364 = vpop.permute.xlu0 %363
    %367 = vset.pattern.permute.xlu0 0
    %368 = vperm.xlu0 %367, %v360
    %v369 = vpop.permute.xlu0 %368
    %v375 = vunpack.c.l.b16 %v355
    %v376 = vunpack.c.l.b16 %v356
    %v377 = vunpack.c.l.b16 %v357
    %v378 = vunpack.c.l.b16 %v358
    %v379 = vpack.c.b16 %v376, %v375
    %v380 = vpack.c.b16 %v378, %v377
    %vm383 = vcmask 261120
    %v385 = vsel %vm383, %v354, 0
    %387 = vmatprep.subr.bf16.mxu0 0
    %388 = vmatpush1.bf16.msra.mxu0 %v379
    %389 = vmatprep.subr.bf16.mxu0 0
    %390 = vmatpush1.bf16.msra.mxu0 %v380
    %391 = vmatprep.subr.bf16.mxu0 0
    %392 = vmatpush1.bf16.msra.mxu0 0
    %393 = vmatprep.subr.bf16.mxu0 0
    %394 = vmatpush1.bf16.msra.mxu0 0
    %395 = vmatprep.subr.bf16.mxu0 0
    %396 = vmatpush1.bf16.msra.mxu0 0
    %397 = vmatprep.subr.bf16.mxu0 0
    %398 = vmatpush1.bf16.msra.mxu0 0
    %399 = vmatprep.subr.bf16.mxu0 0
    %400 = vmatpush1.bf16.msra.mxu0 0
    %401 = vmatprep.subr.bf16.mxu0 0
    %402 = vmatpush1.bf16.msra.mxu0 0
    %403 = vmatprep.subr.bf16.mxu0 0
    %404 = vmatpush1.bf16.msra.mxu0 0
    %405 = vmatprep.subr.bf16.mxu0 0
    %406 = vmatpush1.bf16.msra.mxu0 0
    %407 = vmatprep.subr.bf16.mxu0 0
    %408 = vmatpush1.bf16.msra.mxu0 0
    %409 = vmatprep.subr.bf16.mxu0 0
    %410 = vmatpush1.bf16.msra.mxu0 0
    %411 = vmatprep.subr.bf16.mxu0 0
    %412 = vmatpush1.bf16.msra.mxu0 0
    %413 = vmatprep.subr.bf16.mxu0 0
    %414 = vmatpush1.bf16.msra.mxu0 0
    %415 = vmatprep.subr.bf16.mxu0 0
    %416 = vmatpush1.bf16.msra.mxu0 0
    %417 = vmatprep.subr.bf16.mxu0 0
    %418 = vmatpush1.bf16.msra.mxu0 0
    %419 = vmatprep.mubr.bf16.mxu0 0
    %420 = vmatmul.mubr.bf16.gmra.mrb[0].mxu0 %v385
    %v421 = vpop.f32.mrb[0].mxu0
    %v422 = vadd.f32 %v364, %v421
    %v423 = vpop.f32.mrb[0].mxu0
    %v424 = vpop.f32.mrb[0].mxu0
    %v425 = vadd.f32 %v369, %v424
    %v426 = vpop.f32.mrb[0].mxu0
    %427 = vdwg.mxu0
    %v428 = vmul.f32 %v422, 0.5
    %v429 = vmul.f32 %v425, 0.5
    %v430 = vtanh.pop %v428
    %v431 = vtanh.pop %v429
    %v432 = vmul.f32 %v430, 0.5
    %v433 = vmul.f32 %v431, 0.5
    %v434 = vadd.f32 %v432, 0.5
    %v435 = vadd.f32 %v433, 0.5
    %v436 = vmul.f32 %v422, %v434
    %v437 = vmul.f32 %v425, %v435
    %v438 = vpack.c.bf16 %v351, %v350
    %v439 = vld [vmem:[#allocation10] sm:$0xff]
    %v440 = vld [vmem:[#allocation10 + $0x8] sm:$0xff]
    %v441 = vld [vmem:[#allocation10 + $0x10] sm:$0xff]
    %v442 = vld [vmem:[#allocation10 + $0x18] sm:$0xff]
    %v443 = vld [vmem:[#allocation10 + $0x20] sm:$0xff]
    %v444 = vld [vmem:[#allocation10 + $0x28] sm:$0xff]
    %v445 = vld [vmem:[#allocation10 + $0x30] sm:$0xff]
    %v446 = vld [vmem:[#allocation10 + $0x38] sm:$0xff]
    %v447 = vld [vmem:[#allocation10 + $0x40] sm:$0xff]
    %v448 = vld [vmem:[#allocation10 + $0x48] sm:$0xff]
    %v449 = vld [vmem:[#allocation10 + $0x50] sm:$0xff]
    %v450 = vld [vmem:[#allocation10 + $0x58] sm:$0xff]
    %v451 = vld [vmem:[#allocation10 + $0x60] sm:$0xff]
    %v452 = vld [vmem:[#allocation10 + $0x68] sm:$0xff]
    %v453 = vld [vmem:[#allocation10 + $0x70] sm:$0xff]
    %v454 = vld [vmem:[#allocation10 + $0x78] sm:$0xff]
    %v455 = vld [vmem:[#allocation10 + $0x80] sm:$0xff]
    %v456 = vld [vmem:[#allocation10 + $0x88] sm:$0xff]
    %v457 = vld [vmem:[#allocation10 + $0x90] sm:$0xff]
    %v458 = vld [vmem:[#allocation10 + $0x98] sm:$0xff]
    %v459 = vld [vmem:[#allocation10 + $0xa0] sm:$0xff]
    %v460 = vld [vmem:[#allocation10 + $0xa8] sm:$0xff]
    %v461 = vld [vmem:[#allocation10 + $0xb0] sm:$0xff]
    %v462 = vld [vmem:[#allocation10 + $0xb8] sm:$0xff]
    %v463 = vld [vmem:[#allocation10 + $0xc0] sm:$0xff]
    %v464 = vld [vmem:[#allocation10 + $0xc8] sm:$0xff]
    %v465 = vld [vmem:[#allocation10 + $0xd0] sm:$0xff]
    %v466 = vld [vmem:[#allocation10 + $0xd8] sm:$0xff]
    %v467 = vld [vmem:[#allocation10 + $0xe0] sm:$0xff]
    %v468 = vld [vmem:[#allocation10 + $0xe8] sm:$0xff]
    %v469 = vld [vmem:[#allocation10 + $0xf0] sm:$0xff]
    %v470 = vld [vmem:[#allocation10 + $0xf8] sm:$0xff]
    %v503 = vunpack.c.l.b16 %v439
    %v504 = vunpack.c.h.b16 %v439
    %v505 = vunpack.c.l.b16 %v440
    %v506 = vunpack.c.h.b16 %v440
    %v507 = vunpack.c.l.b16 %v441
    %v508 = vunpack.c.h.b16 %v441
    %v509 = vunpack.c.l.b16 %v442
    %v510 = vunpack.c.h.b16 %v442
    %v511 = vunpack.c.l.b16 %v443
    %v512 = vunpack.c.h.b16 %v443
    %v513 = vunpack.c.l.b16 %v444
    %v514 = vunpack.c.h.b16 %v444
    %v515 = vunpack.c.l.b16 %v445
    %v516 = vunpack.c.h.b16 %v445
    %v517 = vunpack.c.l.b16 %v446
    %v518 = vunpack.c.h.b16 %v446
    %v519 = vunpack.c.l.b16 %v447
    %v520 = vunpack.c.h.b16 %v447
    %v521 = vunpack.c.l.b16 %v448
    %v522 = vunpack.c.h.b16 %v448
    %v523 = vunpack.c.l.b16 %v449
    %v524 = vunpack.c.h.b16 %v449
    %v525 = vunpack.c.l.b16 %v450
    %v526 = vunpack.c.h.b16 %v450
    %v527 = vunpack.c.l.b16 %v451
    %v528 = vunpack.c.h.b16 %v451
    %v529 = vunpack.c.l.b16 %v452
    %v530 = vunpack.c.h.b16 %v452
    %v531 = vunpack.c.l.b16 %v453
    %v532 = vunpack.c.h.b16 %v453
    %v533 = vunpack.c.l.b16 %v454
    %v534 = vunpack.c.h.b16 %v454
    %v535 = vunpack.c.l.b16 %v455
    %v536 = vunpack.c.h.b16 %v455
    %v537 = vunpack.c.l.b16 %v456
    %v538 = vunpack.c.h.b16 %v456
    %v539 = vunpack.c.l.b16 %v457
    %v540 = vunpack.c.h.b16 %v457
    %v541 = vunpack.c.l.b16 %v458
    %v542 = vunpack.c.h.b16 %v458
    %v543 = vunpack.c.l.b16 %v459
    %v544 = vunpack.c.h.b16 %v459
    %v545 = vunpack.c.l.b16 %v460
    %v546 = vunpack.c.h.b16 %v460
    %v547 = vunpack.c.l.b16 %v461
    %v548 = vunpack.c.h.b16 %v461
    %v549 = vunpack.c.l.b16 %v462
    %v550 = vunpack.c.h.b16 %v462
    %v551 = vunpack.c.l.b16 %v463
    %v552 = vunpack.c.h.b16 %v463
    %v553 = vunpack.c.l.b16 %v464
    %v554 = vunpack.c.h.b16 %v464
    %v555 = vunpack.c.l.b16 %v465
    %v556 = vunpack.c.h.b16 %v465
    %v557 = vunpack.c.l.b16 %v466
    %v558 = vunpack.c.h.b16 %v466
    %v559 = vunpack.c.l.b16 %v467
    %v560 = vunpack.c.h.b16 %v467
    %v561 = vunpack.c.l.b16 %v468
    %v562 = vunpack.c.h.b16 %v468
    %v563 = vunpack.c.l.b16 %v469
    %v564 = vunpack.c.h.b16 %v469
    %v565 = vunpack.c.l.b16 %v470
    %v566 = vunpack.c.h.b16 %v470
    %v567 = vpack.c.b16 %v507, %v503
    %v568 = vpack.c.b16 %v508, %v504
    %v569 = vpack.c.b16 %v509, %v505
    %v570 = vpack.c.b16 %v510, %v506
    %v571 = vpack.c.b16 %v515, %v511
    %v572 = vpack.c.b16 %v516, %v512
    %v573 = vpack.c.b16 %v517, %v513
    %v574 = vpack.c.b16 %v518, %v514
    %v575 = vpack.c.b16 %v523, %v519
    %v576 = vpack.c.b16 %v524, %v520
    %v577 = vpack.c.b16 %v525, %v521
    %v578 = vpack.c.b16 %v526, %v522
    %v579 = vpack.c.b16 %v531, %v527
    %v580 = vpack.c.b16 %v532, %v528
    %v581 = vpack.c.b16 %v533, %v529
    %v582 = vpack.c.b16 %v534, %v530
    %v583 = vpack.c.b16 %v539, %v535
    %v584 = vpack.c.b16 %v540, %v536
    %v585 = vpack.c.b16 %v541, %v537
    %v586 = vpack.c.b16 %v542, %v538
    %v587 = vpack.c.b16 %v547, %v543
    %v588 = vpack.c.b16 %v548, %v544
    %v589 = vpack.c.b16 %v549, %v545
    %v590 = vpack.c.b16 %v550, %v546
    %v591 = vpack.c.b16 %v555, %v551
    %v592 = vpack.c.b16 %v556, %v552
    %v593 = vpack.c.b16 %v557, %v553
    %v594 = vpack.c.b16 %v558, %v554
    %v595 = vpack.c.b16 %v563, %v559
    %v596 = vpack.c.b16 %v564, %v560
    %v597 = vpack.c.b16 %v565, %v561
    %v598 = vpack.c.b16 %v566, %v562
    %631 = vmatprep.subr.bf16.mxu0 %v568
    %632 = vmatpush1.bf16.msra.mxu0 %v567
    %633 = vmatprep.subr.bf16.mxu0 %v572
    %634 = vmatpush1.bf16.msra.mxu0 %v571
    %635 = vmatprep.subr.bf16.mxu0 %v576
    %636 = vmatpush1.bf16.msra.mxu0 %v575
    %637 = vmatprep.subr.bf16.mxu0 %v580
    %638 = vmatpush1.bf16.msra.mxu0 %v579
    %639 = vmatprep.subr.bf16.mxu0 %v584
    %640 = vmatpush1.bf16.msra.mxu0 %v583
    %641 = vmatprep.subr.bf16.mxu0 %v588
    %642 = vmatpush1.bf16.msra.mxu0 %v587
    %643 = vmatprep.subr.bf16.mxu0 %v592
    %644 = vmatpush1.bf16.msra.mxu0 %v591
    %645 = vmatprep.subr.bf16.mxu0 %v596
    %646 = vmatpush1.bf16.msra.mxu0 %v595
    %647 = vmatprep.subr.bf16.mxu0 0
    %648 = vmatpush1.bf16.msra.mxu0 0
    %649 = vmatprep.subr.bf16.mxu0 0
    %650 = vmatpush1.bf16.msra.mxu0 0
    %651 = vmatprep.subr.bf16.mxu0 0
    %652 = vmatpush1.bf16.msra.mxu0 0
    %653 = vmatprep.subr.bf16.mxu0 0
    %654 = vmatpush1.bf16.msra.mxu0 0
    %655 = vmatprep.subr.bf16.mxu0 0
    %656 = vmatpush1.bf16.msra.mxu0 0
    %657 = vmatprep.subr.bf16.mxu0 0
    %658 = vmatpush1.bf16.msra.mxu0 0
    %659 = vmatprep.subr.bf16.mxu0 0
    %660 = vmatpush1.bf16.msra.mxu0 0
    %661 = vmatprep.subr.bf16.mxu0 0
    %662 = vmatpush1.bf16.msra.mxu0 0
    %663 = vmatprep.mubr.bf16.mxu0 0
    %664 = vmatmul.mubr.bf16.gmra.mrb[0].mxu0 %v438
    %v665 = vpop.f32.mrb[0].mxu0
    %v666 = vadd.f32 0.0, %v665
    %v667 = vpop.f32.mrb[0].mxu0
    %v668 = vadd.f32 0.0, %v667
    %v669 = vpop.f32.mrb[0].mxu0
    %v670 = vadd.f32 0.0, %v669
    %v671 = vpop.f32.mrb[0].mxu0
    %v672 = vadd.f32 0.0, %v671
    %673 = vdwg.mxu0
    %674 = vmatprep.subr.bf16.mxu0 %v570
    %675 = vmatpush1.bf16.msra.mxu0 %v569
    %676 = vmatprep.subr.bf16.mxu0 %v574
    %677 = vmatpush1.bf16.msra.mxu0 %v573
    %678 = vmatprep.subr.bf16.mxu0 %v578
    %679 = vmatpush1.bf16.msra.mxu0 %v577
    %680 = vmatprep.subr.bf16.mxu0 %v582
    %681 = vmatpush1.bf16.msra.mxu0 %v581
    %682 = vmatprep.subr.bf16.mxu0 %v586
    %683 = vmatpush1.bf16.msra.mxu0 %v585
    %684 = vmatprep.subr.bf16.mxu0 %v590
    %685 = vmatpush1.bf16.msra.mxu0 %v589
    %686 = vmatprep.subr.bf16.mxu0 %v594
    %687 = vmatpush1.bf16.msra.mxu0 %v593
    %688 = vmatprep.subr.bf16.mxu0 %v598
    %689 = vmatpush1.bf16.msra.mxu0 %v597
    %690 = vmatprep.subr.bf16.mxu0 0
    %691 = vmatpush1.bf16.msra.mxu0 0
    %692 = vmatprep.subr.bf16.mxu0 0
    %693 = vmatpush1.bf16.msra.mxu0 0
    %694 = vmatprep.subr.bf16.mxu0 0
    %695 = vmatpush1.bf16.msra.mxu0 0
    %696 = vmatprep.subr.bf16.mxu0 0
    %697 = vmatpush1.bf16.msra.mxu0 0
    %698 = vmatprep.subr.bf16.mxu0 0
    %699 = vmatpush1.bf16.msra.mxu0 0
    %700 = vmatprep.subr.bf16.mxu0 0
    %701 = vmatpush1.bf16.msra.mxu0 0
    %702 = vmatprep.subr.bf16.mxu0 0
    %703 = vmatpush1.bf16.msra.mxu0 0
    %704 = vmatprep.subr.bf16.mxu0 0
    %705 = vmatpush1.bf16.msra.mxu0 0
    %706 = vmatprep.mubr.bf16.mxu0 0
    %707 = vmatmul.mubr.bf16.gmra.mrb[0].mxu0 %v438
    %v708 = vpop.f32.mrb[0].mxu0
    %v709 = vadd.f32 0.0, %v708
    %v710 = vpop.f32.mrb[0].mxu0
    %v711 = vadd.f32 0.0, %v710
    %v712 = vpop.f32.mrb[0].mxu0
    %v713 = vadd.f32 0.0, %v712
    %v714 = vpop.f32.mrb[0].mxu0
    %v715 = vadd.f32 0.0, %v714
    %716 = vdwg.mxu0
    %v717 = vpack.c.bf16 %v437, %v436
    %v718 = vld [vmem:[#allocation12] sm:$0xff]
    %v719 = vld [vmem:[#allocation12 + $0x8] sm:$0xff]
    %v720 = vld [vmem:[#allocation12 + $0x10] sm:$0xff]
    %v721 = vld [vmem:[#allocation12 + $0x18] sm:$0xff]
    %v722 = vld [vmem:[#allocation12 + $0x20] sm:$0xff]
    %v723 = vld [vmem:[#allocation12 + $0x28] sm:$0xff]
    %v724 = vld [vmem:[#allocation12 + $0x30] sm:$0xff]
    %v725 = vld [vmem:[#allocation12 + $0x38] sm:$0xff]
    %v734 = vunpack.c.l.b16 %v718
    %v735 = vunpack.c.h.b16 %v718
    %v736 = vunpack.c.l.b16 %v719
    %v737 = vunpack.c.h.b16 %v719
    %v738 = vunpack.c.l.b16 %v720
    %v739 = vunpack.c.h.b16 %v720
    %v740 = vunpack.c.l.b16 %v721
    %v741 = vunpack.c.h.b16 %v721
    %v742 = vunpack.c.l.b16 %v722
    %v743 = vunpack.c.h.b16 %v722
    %v744 = vunpack.c.l.b16 %v723
    %v745 = vunpack.c.h.b16 %v723
    %v746 = vunpack.c.l.b16 %v724
    %v747 = vunpack.c.h.b16 %v724
    %v748 = vunpack.c.l.b16 %v725
    %v749 = vunpack.c.h.b16 %v725
    %v750 = vpack.c.b16 %v738, %v734
    %v751 = vpack.c.b16 %v739, %v735
    %v752 = vpack.c.b16 %v740, %v736
    %v753 = vpack.c.b16 %v741, %v737
    %v754 = vpack.c.b16 %v746, %v742
    %v755 = vpack.c.b16 %v747, %v743
    %v756 = vpack.c.b16 %v748, %v744
    %v757 = vpack.c.b16 %v749, %v745
    %v767 = vsel %vm383, %v717, 0
    %769 = vmatprep.subr.bf16.mxu0 %v751
    %770 = vmatpush1.bf16.msra.mxu0 %v750
    %771 = vmatprep.subr.bf16.mxu0 %v755
    %772 = vmatpush1.bf16.msra.mxu0 %v754
    %773 = vmatprep.subr.bf16.mxu0 0
    %774 = vmatpush1.bf16.msra.mxu0 0
    %775 = vmatprep.subr.bf16.mxu0 0
    %776 = vmatpush1.bf16.msra.mxu0 0
    %777 = vmatprep.subr.bf16.mxu0 0
    %778 = vmatpush1.bf16.msra.mxu0 0
    %779 = vmatprep.subr.bf16.mxu0 0
    %780 = vmatpush1.bf16.msra.mxu0 0
    %781 = vmatprep.subr.bf16.mxu0 0
    %782 = vmatpush1.bf16.msra.mxu0 0
    %783 = vmatprep.subr.bf16.mxu0 0
    %784 = vmatpush1.bf16.msra.mxu0 0
    %785 = vmatprep.subr.bf16.mxu0 0
    %786 = vmatpush1.bf16.msra.mxu0 0
    %787 = vmatprep.subr.bf16.mxu0 0
    %788 = vmatpush1.bf16.msra.mxu0 0
    %789 = vmatprep.subr.bf16.mxu0 0
    %790 = vmatpush1.bf16.msra.mxu0 0
    %791 = vmatprep.subr.bf16.mxu0 0
    %792 = vmatpush1.bf16.msra.mxu0 0
    %793 = vmatprep.subr.bf16.mxu0 0
    %794 = vmatpush1.bf16.msra.mxu0 0
    %795 = vmatprep.subr.bf16.mxu0 0
    %796 = vmatpush1.bf16.msra.mxu0 0
    %797 = vmatprep.subr.bf16.mxu0 0
    %798 = vmatpush1.bf16.msra.mxu0 0
    %799 = vmatprep.subr.bf16.mxu0 0
    %800 = vmatpush1.bf16.msra.mxu0 0
    %801 = vmatprep.mubr.bf16.mxu0 0
    %802 = vmatmul.mubr.bf16.gmra.mrb[0].mxu0 %v767
    %v803 = vpop.f32.mrb[0].mxu0
    %v804 = vadd.f32 0.0, %v803
    %v805 = vpop.f32.mrb[0].mxu0
    %v806 = vadd.f32 0.0, %v805
    %v807 = vpop.f32.mrb[0].mxu0
    %v808 = vadd.f32 0.0, %v807
    %v809 = vpop.f32.mrb[0].mxu0
    %v810 = vadd.f32 0.0, %v809
    %811 = vdwg.mxu0
    %812 = vmatprep.subr.bf16.mxu0 %v753
    %813 = vmatpush1.bf16.msra.mxu0 %v752
    %814 = vmatprep.subr.bf16.mxu0 %v757
    %815 = vmatpush1.bf16.msra.mxu0 %v756
    %816 = vmatprep.subr.bf16.mxu0 0
    %817 = vmatpush1.bf16.msra.mxu0 0
    %818 = vmatprep.subr.bf16.mxu0 0
    %819 = vmatpush1.bf16.msra.mxu0 0
    %820 = vmatprep.subr.bf16.mxu0 0
    %821 = vmatpush1.bf16.msra.mxu0 0
    %822 = vmatprep.subr.bf16.mxu0 0
    %823 = vmatpush1.bf16.msra.mxu0 0
    %824 = vmatprep.subr.bf16.mxu0 0
    %825 = vmatpush1.bf16.msra.mxu0 0
    %826 = vmatprep.subr.bf16.mxu0 0
    %827 = vmatpush1.bf16.msra.mxu0 0
    %828 = vmatprep.subr.bf16.mxu0 0
    %829 = vmatpush1.bf16.msra.mxu0 0
    %830 = vmatprep.subr.bf16.mxu0 0
    %831 = vmatpush1.bf16.msra.mxu0 0
    %832 = vmatprep.subr.bf16.mxu0 0
    %833 = vmatpush1.bf16.msra.mxu0 0
    %834 = vmatprep.subr.bf16.mxu0 0
    %835 = vmatpush1.bf16.msra.mxu0 0
    %836 = vmatprep.subr.bf16.mxu0 0
    %837 = vmatpush1.bf16.msra.mxu0 0
    %838 = vmatprep.subr.bf16.mxu0 0
    %839 = vmatpush1.bf16.msra.mxu0 0
    %840 = vmatprep.subr.bf16.mxu0 0
    %841 = vmatpush1.bf16.msra.mxu0 0
    %842 = vmatprep.subr.bf16.mxu0 0
    %843 = vmatpush1.bf16.msra.mxu0 0
    %844 = vmatprep.mubr.bf16.mxu0 0
    %845 = vmatmul.mubr.bf16.gmra.mrb[0].mxu0 %v767
    %v846 = vpop.f32.mrb[0].mxu0
    %v847 = vadd.f32 0.0, %v846
    %v848 = vpop.f32.mrb[0].mxu0
    %v849 = vadd.f32 0.0, %v848
    %v850 = vpop.f32.mrb[0].mxu0
    %v851 = vadd.f32 0.0, %v850
    %v852 = vpop.f32.mrb[0].mxu0
    %v853 = vadd.f32 0.0, %v852
    %854 = vdwg.mxu0
    %v855 = vpack.c.bf16 %v270, %v266
    %v856 = vpack.c.bf16 %v271, %v267
    %v857 = vpack.c.bf16 %v272, %v268
    %v858 = vpack.c.bf16 %v273, %v269
    %v859 = vpack.c.bf16 %v670, %v666
    %v860 = vpack.c.bf16 %v672, %v668
    %v861 = vpack.c.bf16 %v713, %v709
    %v862 = vpack.c.bf16 %v715, %v711
    %v863 = vpack.c.bf16 %v808, %v804
    %v864 = vpack.c.bf16 %v810, %v806
    %v865 = vpack.c.bf16 %v851, %v847
    %v866 = vpack.c.bf16 %v853, %v849
    %v867 = vld [vmem:[%s6 + $0x30] sm:$0xff]
    %v868 = vld [vmem:[%s6 + $0x38] sm:$0xff]
    %v869 = vpack.c.bf16 %v868, %v867
    %v870 = vld [vmem:[%s7 + $0x30] sm:$0xff]
    %v871 = vld [vmem:[%s7 + $0x38] sm:$0xff]
    %873 = vset.pattern.permute.xlu0 0
    %874 = vperm.xlu0 %873, %v870
    %v875 = vpop.permute.xlu0 %874
    %878 = vset.pattern.permute.xlu0 0
    %879 = vperm.xlu0 %878, %v871
    %v880 = vpop.permute.xlu0 %879
    %vm882 = vcmask 392192
    %v884 = vsel %vm882, %v869, 0
    %886 = vmatprep.subr.bf16.mxu0 %v856
    %887 = vmatpush1.bf16.msra.mxu0 %v855
    %888 = vmatprep.subr.bf16.mxu0 %v860
    %889 = vmatpush1.bf16.msra.mxu0 %v859
    %890 = vmatprep.subr.bf16.mxu0 %v864
    %891 = vmatpush1.bf16.msra.mxu0 %v863
    %892 = vmatprep.subr.bf16.mxu0 0
    %893 = vmatpush1.bf16.msra.mxu0 0
    %894 = vmatprep.subr.bf16.mxu0 0
    %895 = vmatpush1.bf16.msra.mxu0 0
    %896 = vmatprep.subr.bf16.mxu0 0
    %897 = vmatpush1.bf16.msra.mxu0 0
    %898 = vmatprep.subr.bf16.mxu0 0
    %899 = vmatpush1.bf16.msra.mxu0 0
    %900 = vmatprep.subr.bf16.mxu0 0
    %901 = vmatpush1.bf16.msra.mxu0 0
    %902 = vmatprep.subr.bf16.mxu0 0
    %903 = vmatpush1.bf16.msra.mxu0 0
    %904 = vmatprep.subr.bf16.mxu0 0
    %905 = vmatpush1.bf16.msra.mxu0 0
    %906 = vmatprep.subr.bf16.mxu0 0
    %907 = vmatpush1.bf16.msra.mxu0 0
    %908 = vmatprep.subr.bf16.mxu0 0
    %909 = vmatpush1.bf16.msra.mxu0 0
    %910 = vmatprep.subr.bf16.mxu0 0
    %911 = vmatpush1.bf16.msra.mxu0 0
    %912 = vmatprep.subr.bf16.mxu0 0
    %913 = vmatpush1.bf16.msra.mxu0 0
    %914 = vmatprep.subr.bf16.mxu0 0
    %915 = vmatpush1.bf16.msra.mxu0 0
    %916 = vmatprep.subr.bf16.mxu0 0
    %917 = vmatpush1.bf16.msra.mxu0 0
    %918 = vmatprep.mubr.bf16.mxu0 0
    %919 = vmatmul.mubr.bf16.gmra.mrb[0].mxu0 %v884
    %v920 = vpop.f32.mrb[0].mxu0
    %v921 = vadd.f32 %v875, %v920
    %v922 = vpop.f32.mrb[0].mxu0
    %v923 = vadd.f32 %v875, %v922
    %v924 = vpop.f32.mrb[0].mxu0
    %v925 = vadd.f32 %v880, %v924
    %v926 = vpop.f32.mrb[0].mxu0
    %v927 = vadd.f32 %v880, %v926
    %928 = vdwg.mxu0
    %929 = vmatprep.subr.bf16.mxu0 %v858
    %930 = vmatpush1.bf16.msra.mxu0 %v857
    %931 = vmatprep.subr.bf16.mxu0 %v862
    %932 = vmatpush1.bf16.msra.mxu0 %v861
    %933 = vmatprep.subr.bf16.mxu0 %v866
    %934 = vmatpush1.bf16.msra.mxu0 %v865
    %935 = vmatprep.subr.bf16.mxu0 0
    %936 = vmatpush1.bf16.msra.mxu0 0
    %937 = vmatprep.subr.bf16.mxu0 0
    %938 = vmatpush1.bf16.msra.mxu0 0
    %939 = vmatprep.subr.bf16.mxu0 0
    %940 = vmatpush1.bf16.msra.mxu0 0
    %941 = vmatprep.subr.bf16.mxu0 0
    %942 = vmatpush1.bf16.msra.mxu0 0
    %943 = vmatprep.subr.bf16.mxu0 0
    %944 = vmatpush1.bf16.msra.mxu0 0
    %945 = vmatprep.subr.bf16.mxu0 0
    %946 = vmatpush1.bf16.msra.mxu0 0
    %947 = vmatprep.subr.bf16.mxu0 0
    %948 = vmatpush1.bf16.msra.mxu0 0
    %949 = vmatprep.subr.bf16.mxu0 0
    %950 = vmatpush1.bf16.msra.mxu0 0
    %951 = vmatprep.subr.bf16.mxu0 0
    %952 = vmatpush1.bf16.msra.mxu0 0
    %953 = vmatprep.subr.bf16.mxu0 0
    %954 = vmatpush1.bf16.msra.mxu0 0
    %955 = vmatprep.subr.bf16.mxu0 0
    %956 = vmatpush1.bf16.msra.mxu0 0
    %957 = vmatprep.subr.bf16.mxu0 0
    %958 = vmatpush1.bf16.msra.mxu0 0
    %959 = vmatprep.subr.bf16.mxu0 0
    %960 = vmatpush1.bf16.msra.mxu0 0
    %961 = vmatprep.mubr.bf16.mxu0 0
    %962 = vmatmul.mubr.bf16.gmra.mrb[0].mxu0 %v884
    %v963 = vpop.f32.mrb[0].mxu0
    %v964 = vadd.f32 %v875, %v963
    %v965 = vpop.f32.mrb[0].mxu0
    %v966 = vadd.f32 %v875, %v965
    %v967 = vpop.f32.mrb[0].mxu0
    %v968 = vadd.f32 %v880, %v967
    %v969 = vpop.f32.mrb[0].mxu0
    %v970 = vadd.f32 %v880, %v969
    %971 = vdwg.mxu0
    %v972 = vmul.f32 %v921, 0.5
    %v973 = vmul.f32 %v923, 0.5
    %v974 = vmul.f32 %v964, 0.5
    %v975 = vmul.f32 %v966, 0.5
    %v976 = vmul.f32 %v925, 0.5
    %v977 = vmul.f32 %v927, 0.5
    %v978 = vmul.f32 %v968, 0.5
    %v979 = vmul.f32 %v970, 0.5
    %v980 = vtanh.pop %v972
    %v981 = vtanh.pop %v973
    %v982 = vtanh.pop %v974
    %v983 = vtanh.pop %v975
    %v984 = vtanh.pop %v976
    %v985 = vtanh.pop %v977
    %v986 = vtanh.pop %v978
    %v987 = vtanh.pop %v979
    %v988 = vmul.f32 %v980, 0.5
    %v989 = vmul.f32 %v981, 0.5
    %v990 = vmul.f32 %v982, 0.5
    %v991 = vmul.f32 %v983, 0.5
    %v992 = vmul.f32 %v984, 0.5
    %v993 = vmul.f32 %v985, 0.5
    %v994 = vmul.f32 %v986, 0.5
    %v995 = vmul.f32 %v987, 0.5
    %v996 = vadd.f32 %v988, 0.5
    %v997 = vadd.f32 %v989, 0.5
    %v998 = vadd.f32 %v990, 0.5
    %v999 = vadd.f32 %v991, 0.5
    %v1000 = vadd.f32 %v992, 0.5
    %v1001 = vadd.f32 %v993, 0.5
    %v1002 = vadd.f32 %v994, 0.5
    %v1003 = vadd.f32 %v995, 0.5
    %v1004 = vmul.f32 %v921, %v996
    %v1005 = vmul.f32 %v923, %v997
    %v1006 = vmul.f32 %v964, %v998
    %v1007 = vmul.f32 %v966, %v999
    %v1008 = vmul.f32 %v925, %v1000
    %v1009 = vmul.f32 %v927, %v1001
    %v1010 = vmul.f32 %v968, %v1002
    %v1011 = vmul.f32 %v970, %v1003
    %v1012 = vld [vmem:[%s6 + $0x40] sm:$0xff]
    %v1013 = vpack.c.bf16 %v1012, %v1012
    %v1014 = vpack.c.bf16 %v1008, %v1004
    %v1015 = vpack.c.bf16 %v1009, %v1005
    %v1016 = vpack.c.bf16 %v1010, %v1006
    %v1017 = vpack.c.bf16 %v1011, %v1007
    %v1018 = vld [vmem:[%s7 + $0x40] sm:$0xff]
    %1020 = vset.pattern.permute.xlu0 0
    %1021 = vperm.xlu0 %1020, %v1018
    %v1022 = vpop.permute.xlu0 %1021
    %v1025 = vsel %vm297, %v1013, 0
    %1027 = vmatprep.subr.bf16.mxu0 %v1015
    %1028 = vmatpush1.bf16.msra.mxu0 %v1014
    %1029 = vmatprep.subr.bf16.mxu0 0
    %1030 = vmatpush1.bf16.msra.mxu0 0
    %1031 = vmatprep.subr.bf16.mxu0 0
    %1032 = vmatpush1.bf16.msra.mxu0 0
    %1033 = vmatprep.subr.bf16.mxu0 0
    %1034 = vmatpush1.bf16.msra.mxu0 0
    %1035 = vmatprep.subr.bf16.mxu0 0
    %1036 = vmatpush1.bf16.msra.mxu0 0
    %1037 = vmatprep.subr.bf16.mxu0 0
    %1038 = vmatpush1.bf16.msra.mxu0 0
    %1039 = vmatprep.subr.bf16.mxu0 0
    %1040 = vmatpush1.bf16.msra.mxu0 0
    %1041 = vmatprep.subr.bf16.mxu0 0
    %1042 = vmatpush1.bf16.msra.mxu0 0
    %1043 = vmatprep.subr.bf16.mxu0 0
    %1044 = vmatpush1.bf16.msra.mxu0 0
    %1045 = vmatprep.subr.bf16.mxu0 0
    %1046 = vmatpush1.bf16.msra.mxu0 0
    %1047 = vmatprep.subr.bf16.mxu0 0
    %1048 = vmatpush1.bf16.msra.mxu0 0
    %1049 = vmatprep.subr.bf16.mxu0 0
    %1050 = vmatpush1.bf16.msra.mxu0 0
    %1051 = vmatprep.subr.bf16.mxu0 0
    %1052 = vmatpush1.bf16.msra.mxu0 0
    %1053 = vmatprep.subr.bf16.mxu0 0
    %1054 = vmatpush1.bf16.msra.mxu0 0
    %1055 = vmatprep.subr.bf16.mxu0 0
    %1056 = vmatpush1.bf16.msra.mxu0 0
    %1057 = vmatprep.subr.bf16.mxu0 0
    %1058 = vmatpush1.bf16.msra.mxu0 0
    %1059 = vmatprep.mubr.bf16.mxu0 0
    %1060 = vmatmul.mubr.bf16.gmra.mrb[0].mxu0 %v1025
    %v1061 = vpop.f32.mrb[0].mxu0
    %v1062 = vadd.f32 %v1022, %v1061
    %v1063 = vpop.f32.mrb[0].mxu0
    %v1064 = vadd.f32 %v1022, %v1063
    %v1065 = vpop.f32.mrb[0].mxu0
    %v1066 = vpop.f32.mrb[0].mxu0
    %1067 = vdwg.mxu0
    %1068 = vmatprep.subr.bf16.mxu0 %v1017
    %1069 = vmatpush1.bf16.msra.mxu0 %v1016
    %1070 = vmatprep.subr.bf16.mxu0 0
    %1071 = vmatpush1.bf16.msra.mxu0 0
    %1072 = vmatprep.subr.bf16.mxu0 0
    %1073 = vmatpush1.bf16.msra.mxu0 0
    %1074 = vmatprep.subr.bf16.mxu0 0
    %1075 = vmatpush1.bf16.msra.mxu0 0
    %1076 = vmatprep.subr.bf16.mxu0 0
    %1077 = vmatpush1.bf16.msra.mxu0 0
    %1078 = vmatprep.subr.bf16.mxu0 0
    %1079 = vmatpush1.bf16.msra.mxu0 0
    %1080 = vmatprep.subr.bf16.mxu0 0
    %1081 = vmatpush1.bf16.msra.mxu0 0
    %1082 = vmatprep.subr.bf16.mxu0 0
    %1083 = vmatpush1.bf16.msra.mxu0 0
    %1084 = vmatprep.subr.bf16.mxu0 0
    %1085 = vmatpush1.bf16.msra.mxu0 0
    %1086 = vmatprep.subr.bf16.mxu0 0
    %1087 = vmatpush1.bf16.msra.mxu0 0
    %1088 = vmatprep.subr.bf16.mxu0 0
    %1089 = vmatpush1.bf16.msra.mxu0 0
    %1090 = vmatprep.subr.bf16.mxu0 0
    %1091 = vmatpush1.bf16.msra.mxu0 0
    %1092 = vmatprep.subr.bf16.mxu0 0
    %1093 = vmatpush1.bf16.msra.mxu0 0
    %1094 = vmatprep.subr.bf16.mxu0 0
    %1095 = vmatpush1.bf16.msra.mxu0 0
    %1096 = vmatprep.subr.bf16.mxu0 0
    %1097 = vmatpush1.bf16.msra.mxu0 0
    %1098 = vmatprep.subr.bf16.mxu0 0
    %1099 = vmatpush1.bf16.msra.mxu0 0
    %1100 = vmatprep.mubr.bf16.mxu0 0
    %1101 = vmatmul.mubr.bf16.gmra.mrb[0].mxu0 %v1025
    %v1102 = vpop.f32.mrb[0].mxu0
    %v1103 = vadd.f32 %v1022, %v1102
    %v1104 = vpop.f32.mrb[0].mxu0
    %v1105 = vadd.f32 %v1022, %v1104
    %v1106 = vpop.f32.mrb[0].mxu0
    %v1107 = vpop.f32.mrb[0].mxu0
    %1108 = vdwg.mxu0
    %v1109 = vmul.f32 %v1062, 0.5
    %v1110 = vmul.f32 %v1064, 0.5
    %v1111 = vmul.f32 %v1103, 0.5
    %v1112 = vmul.f32 %v1105, 0.5
    %v1113 = vtanh.pop %v1109
    %v1114 = vtanh.pop %v1110
    %v1115 = vtanh.pop %v1111
    %v1116 = vtanh.pop %v1112
    %v1117 = vmul.f32 %v1113, 0.5
    %v1118 = vmul.f32 %v1114, 0.5
    %v1119 = vmul.f32 %v1115, 0.5
    %v1120 = vmul.f32 %v1116, 0.5
    %v1121 = vadd.f32 %v1117, 0.5
    %v1122 = vadd.f32 %v1118, 0.5
    %v1123 = vadd.f32 %v1119, 0.5
    %v1124 = vadd.f32 %v1120, 0.5
    %v1125 = vmul.f32 %v1062, %v1121
    %v1126 = vmul.f32 %v1064, %v1122
    %v1127 = vmul.f32 %v1103, %v1123
    %v1128 = vmul.f32 %v1105, %v1124
    %1129 = vst [vmem:[#allocation2 + $0x8] sm:$0xff] %v1125
    %1130 = vst [vmem:[#allocation2 + $0x10] sm:$0xff] %v1126
    %1131 = vst [vmem:[#allocation2 + $0x28] sm:$0xff] %v1127
    %1132 = vst [vmem:[#allocation2 + $0x30] sm:$0xff] %v1128
    %v1133 = vld [vmem:[#allocation2] sm:$0xff]
    %v1134 = vld [vmem:[#allocation2 + $0x8] sm:$0xff]
    %v1135 = vld [vmem:[#allocation2 + $0x10] sm:$0xff]
    %v1137 = vlaneseq
    %v1138 = vshrl.u32 %v1137, 7
    %v1139 = vsub.s32 0, %v1138
    %v1140 = vrot.slane %v101, %v1139
    %v1141 = vlaneseq
    %v1142 = vshrl.u32 %v1141, 7
    %v1143 = vsub.s32 1, %v1142
    %v1144 = vrot.slane %v101, %v1143
    %1145 = vrot.lane.b32.xlu0 %v1140, 111
    %v1146 = vpop.permute.xlu0 %1145
    %1147 = vrot.lane.b32.xlu0 %v1144, 111
    %v1148 = vpop.permute.xlu0 %1147
    %vm1149 = vcmask 908288
    %v1150 = vsel %vm1149, %v1146, %v1148
    %v1154 = vmul.f32 %v1133, %v1146
    %v1155 = vmul.f32 %v1134, %v1150
    %v1156 = vmul.f32 %v1135, %v1148
    %1160 = vrot.lane.b32.xlu0 %v1154, 17
    %v1161 = vpop.permute.xlu0 %1160
    %1162 = vrot.lane.b32.xlu0 %v1155, 17
    %v1163 = vpop.permute.xlu0 %1162
    %1164 = vrot.lane.b32.xlu0 %v1156, 17
    %v1165 = vpop.permute.xlu0 %1164
    %vm1166 = vcmask 138240
    %v1167 = vsel %vm1166, %v1161, %v1163
    %v1168 = vsel %vm1166, %v1163, %v1165
    %1171 = vst [vmem:[#allocation3] sm:$0xff] %v1167
    %1172 = vst [vmem:[#allocation3 + $0x8] sm:$0xff] %v1168
    %v1173 = vld [vmem:[#allocation2 + $0x20] sm:$0xff]
    %v1174 = vld [vmem:[#allocation2 + $0x28] sm:$0xff]
    %v1175 = vld [vmem:[#allocation2 + $0x30] sm:$0xff]
    %v1176 = vmul.f32 %v1173, %v1146
    %v1177 = vmul.f32 %v1174, %v1150
    %v1178 = vmul.f32 %v1175, %v1148
    %1182 = vrot.lane.b32.xlu0 %v1176, 17
    %v1183 = vpop.permute.xlu0 %1182
    %1184 = vrot.lane.b32.xlu0 %v1177, 17
    %v1185 = vpop.permute.xlu0 %1184
    %1186 = vrot.lane.b32.xlu0 %v1178, 17
    %v1187 = vpop.permute.xlu0 %1186
    %v1188 = vsel %vm1166, %v1183, %v1185
    %v1189 = vsel %vm1166, %v1185, %v1187
    %1192 = vst [vmem:[#allocation3 + $0x10] sm:$0xff] %v1188
    %1193 = vst [vmem:[#allocation3 + $0x18] sm:$0xff] %v1189
    %v1194 = vld [vmem:[#allocation2] sm:$0xff]
    %v1195 = vld [vmem:[#allocation2 + $0x8] sm:$0xff]
    %v1196 = vld [vmem:[#allocation2 + $0x10] sm:$0xff]
    %1200 = vrot.lane.b32.xlu0 %v1194, 16
    %v1201 = vpop.permute.xlu0 %1200
    %1202 = vrot.lane.b32.xlu0 %v1195, 16
    %v1203 = vpop.permute.xlu0 %1202
    %1204 = vrot.lane.b32.xlu0 %v1196, 16
    %v1205 = vpop.permute.xlu0 %1204
    %v1206 = vsel %vm297, %v1201, %v1203
    %v1207 = vsel %vm297, %v1203, %v1205
    %1210 = vst [vmem:[#allocation3 + $0x20] sm:$0xff] %v1206
    %1211 = vst [vmem:[#allocation3 + $0x28] sm:$0xff] %v1207
    %v1212 = vld [vmem:[#allocation2 + $0x20] sm:$0xff]
    %v1213 = vld [vmem:[#allocation2 + $0x28] sm:$0xff]
    %v1214 = vld [vmem:[#allocation2 + $0x30] sm:$0xff]
    %1218 = vrot.lane.b32.xlu0 %v1212, 16
    %v1219 = vpop.permute.xlu0 %1218
    %1220 = vrot.lane.b32.xlu0 %v1213, 16
    %v1221 = vpop.permute.xlu0 %1220
    %1222 = vrot.lane.b32.xlu0 %v1214, 16
    %v1223 = vpop.permute.xlu0 %1222
    %v1224 = vsel %vm297, %v1219, %v1221
    %v1225 = vsel %vm297, %v1221, %v1223
    %1228 = vst [vmem:[#allocation3 + $0x30] sm:$0xff] %v1224
    %1229 = vst [vmem:[#allocation3 + $0x38] sm:$0xff] %v1225
    %v1230 = vld [vmem:[#allocation2] sm:$0xff]
    %v1231 = vld [vmem:[#allocation2 + $0x8] sm:$0xff]
    %v1232 = vld [vmem:[#allocation2 + $0x10] sm:$0xff]
    %v1234 = vlaneseq
    %v1235 = vshrl.u32 %v1234, 7
    %v1236 = vsub.s32 0, %v1235
    %v1237 = vrot.slane %v103, %v1236
    %v1238 = vlaneseq
    %v1239 = vshrl.u32 %v1238, 7
    %v1240 = vsub.s32 1, %v1239
    %v1241 = vrot.slane %v103, %v1240
    %1242 = vrot.lane.b32.xlu0 %v1237, 113
    %v1243 = vpop.permute.xlu0 %1242
    %1244 = vrot.lane.b32.xlu0 %v1241, 113
    %v1245 = vpop.permute.xlu0 %1244
    %vm1246 = vcmask 924672
    %v1247 = vsel %vm1246, %v1243, %v1245
    %v1251 = vmul.f32 %v1230, %v1243
    %v1252 = vmul.f32 %v1231, %v1247
    %v1253 = vmul.f32 %v1232, %v1245
    %1257 = vrot.lane.b32.xlu0 %v1251, 15
    %v1258 = vpop.permute.xlu0 %1257
    %1259 = vrot.lane.b32.xlu0 %v1252, 15
    %v1260 = vpop.permute.xlu0 %1259
    %1261 = vrot.lane.b32.xlu0 %v1253, 15
    %v1262 = vpop.permute.xlu0 %1261
    %vm1263 = vcmask 121856
    %v1264 = vsel %vm1263, %v1258, %v1260
    %v1265 = vsel %vm1263, %v1260, %v1262
    %1268 = vst [vmem:[#allocation3 + $0x40] sm:$0xff] %v1264
    %1269 = vst [vmem:[#allocation3 + $0x48] sm:$0xff] %v1265
    %v1270 = vld [vmem:[#allocation2 + $0x20] sm:$0xff]
    %v1271 = vld [vmem:[#allocation2 + $0x28] sm:$0xff]
    %v1272 = vld [vmem:[#allocation2 + $0x30] sm:$0xff]
    %v1273 = vmul.f32 %v1270, %v1243
    %v1274 = vmul.f32 %v1271, %v1247
    %v1275 = vmul.f32 %v1272, %v1245
    %1279 = vrot.lane.b32.xlu0 %v1273, 15
    %v1280 = vpop.permute.xlu0 %1279
    %1281 = vrot.lane.b32.xlu0 %v1274, 15
    %v1282 = vpop.permute.xlu0 %1281
    %1283 = vrot.lane.b32.xlu0 %v1275, 15
    %v1284 = vpop.permute.xlu0 %1283
    %v1285 = vsel %vm1263, %v1280, %v1282
    %v1286 = vsel %vm1263, %v1282, %v1284
    %1289 = vst [vmem:[#allocation3 + $0x50] sm:$0xff] %v1285
    %1290 = vst [vmem:[#allocation3 + $0x58] sm:$0xff] %v1286
    %v1291 = vld [vmem:[#allocation2] sm:$0xff]
    %v1292 = vld [vmem:[#allocation2 + $0x8] sm:$0xff]
    %v1293 = vld [vmem:[#allocation2 + $0x10] sm:$0xff]
    %1294 = vrot.lane.b32.xlu0 %v1140, 127
    %v1295 = vpop.permute.xlu0 %1294
    %1296 = vrot.lane.b32.xlu0 %v1144, 127
    %v1297 = vpop.permute.xlu0 %1296
    %vm1298 = vcmask 1039360
    %v1299 = vsel %vm1298, %v1295, %v1297
    %v1303 = vmul.f32 %v1291, %v1295
    %v1304 = vmul.f32 %v1292, %v1299
    %v1305 = vmul.f32 %v1293, %v1297
    %1309 = vrot.lane.b32.xlu0 %v1303, 1
    %v1310 = vpop.permute.xlu0 %1309
    %1311 = vrot.lane.b32.xlu0 %v1304, 1
    %v1312 = vpop.permute.xlu0 %1311
    %1313 = vrot.lane.b32.xlu0 %v1305, 1
    %v1314 = vpop.permute.xlu0 %1313
    %vm1315 = vcmask 7168
    %v1316 = vsel %vm1315, %v1310, %v1312
    %v1317 = vsel %vm1315, %v1312, %v1314
    %1320 = vst [vmem:[#allocation3 + $0x60] sm:$0xff] %v1316
    %1321 = vst [vmem:[#allocation3 + $0x68] sm:$0xff] %v1317
    %v1322 = vld [vmem:[#allocation2 + $0x20] sm:$0xff]
    %v1323 = vld [vmem:[#allocation2 + $0x28] sm:$0xff]
    %v1324 = vld [vmem:[#allocation2 + $0x30] sm:$0xff]
    %v1325 = vmul.f32 %v1322, %v1295
    %v1326 = vmul.f32 %v1323, %v1299
    %v1327 = vmul.f32 %v1324, %v1297
    %1331 = vrot.lane.b32.xlu0 %v1325, 1
    %v1332 = vpop.permute.xlu0 %1331
    %1333 = vrot.lane.b32.xlu0 %v1326, 1
    %v1334 = vpop.permute.xlu0 %1333
    %1335 = vrot.lane.b32.xlu0 %v1327, 1
    %v1336 = vpop.permute.xlu0 %1335
    %v1337 = vsel %vm1315, %v1332, %v1334
    %v1338 = vsel %vm1315, %v1334, %v1336
    %1341 = vst [vmem:[#allocation3 + $0x70] sm:$0xff] %v1337
    %1342 = vst [vmem:[#allocation3 + $0x78] sm:$0xff] %v1338
    %v1343 = vld [vmem:[#allocation2 + $0x8] sm:$0xff]
    %v1344 = vld [vmem:[#allocation2 + $0x10] sm:$0xff]
    %1345 = vst [vmem:[#allocation3 + $0x80] sm:$0xff] %v1343
    %1346 = vst [vmem:[#allocation3 + $0x88] sm:$0xff] %v1344
    %v1347 = vld [vmem:[#allocation2 + $0x28] sm:$0xff]
    %v1348 = vld [vmem:[#allocation2 + $0x30] sm:$0xff]
    %1349 = vst [vmem:[#allocation3 + $0x90] sm:$0xff] %v1347
    %1350 = vst [vmem:[#allocation3 + $0x98] sm:$0xff] %v1348
    %v1351 = vld [vmem:[#allocation2 + $0x8] sm:$0xff]
    %v1352 = vld [vmem:[#allocation2 + $0x10] sm:$0xff]
    %v1353 = vld [vmem:[#allocation2 + $0x18] sm:$0xff]
    %1354 = vrot.lane.b32.xlu0 %v1237, 1
    %v1355 = vpop.permute.xlu0 %1354
    %1356 = vrot.lane.b32.xlu0 %v1241, 1
    %v1357 = vpop.permute.xlu0 %1356
    %v1358 = vsel %vm1315, %v1355, %v1357
    %v1362 = vmul.f32 %v1351, %v1355
    %v1363 = vmul.f32 %v1352, %v1358
    %v1364 = vmul.f32 %v1353, %v1357
    %1368 = vrot.lane.b32.xlu0 %v1362, 127
    %v1369 = vpop.permute.xlu0 %1368
    %1370 = vrot.lane.b32.xlu0 %v1363, 127
    %v1371 = vpop.permute.xlu0 %1370
    %1372 = vrot.lane.b32.xlu0 %v1364, 127
    %v1373 = vpop.permute.xlu0 %1372
    %v1374 = vsel %vm1298, %v1369, %v1371
    %v1375 = vsel %vm1298, %v1371, %v1373
    %1378 = vst [vmem:[#allocation3 + $0xa0] sm:$0xff] %v1374
    %1379 = vst [vmem:[#allocation3 + $0xa8] sm:$0xff] %v1375
    %v1380 = vld [vmem:[#allocation2 + $0x28] sm:$0xff]
    %v1381 = vld [vmem:[#allocation2 + $0x30] sm:$0xff]
    %v1382 = vld [vmem:[#allocation2 + $0x38] sm:$0xff]
    %v1383 = vmul.f32 %v1380, %v1355
    %v1384 = vmul.f32 %v1381, %v1358
    %v1385 = vmul.f32 %v1382, %v1357
    %1389 = vrot.lane.b32.xlu0 %v1383, 127
    %v1390 = vpop.permute.xlu0 %1389
    %1391 = vrot.lane.b32.xlu0 %v1384, 127
    %v1392 = vpop.permute.xlu0 %1391
    %1393 = vrot.lane.b32.xlu0 %v1385, 127
    %v1394 = vpop.permute.xlu0 %1393
    %v1395 = vsel %vm1298, %v1390, %v1392
    %v1396 = vsel %vm1298, %v1392, %v1394
    %1399 = vst [vmem:[#allocation3 + $0xb0] sm:$0xff] %v1395
    %1400 = vst [vmem:[#allocation3 + $0xb8] sm:$0xff] %v1396
    %v1401 = vld [vmem:[#allocation2 + $0x8] sm:$0xff]
    %v1402 = vld [vmem:[#allocation2 + $0x10] sm:$0xff]
    %v1403 = vld [vmem:[#allocation2 + $0x18] sm:$0xff]
    %1404 = vrot.lane.b32.xlu0 %v1140, 15
    %v1405 = vpop.permute.xlu0 %1404
    %1406 = vrot.lane.b32.xlu0 %v1144, 15
    %v1407 = vpop.permute.xlu0 %1406
    %v1408 = vsel %vm1263, %v1405, %v1407
    %v1412 = vmul.f32 %v1401, %v1405
    %v1413 = vmul.f32 %v1402, %v1408
    %v1414 = vmul.f32 %v1403, %v1407
    %1418 = vrot.lane.b32.xlu0 %v1412, 113
    %v1419 = vpop.permute.xlu0 %1418
    %1420 = vrot.lane.b32.xlu0 %v1413, 113
    %v1421 = vpop.permute.xlu0 %1420
    %1422 = vrot.lane.b32.xlu0 %v1414, 113
    %v1423 = vpop.permute.xlu0 %1422
    %v1424 = vsel %vm1246, %v1419, %v1421
    %v1425 = vsel %vm1246, %v1421, %v1423
    %1428 = vst [vmem:[#allocation3 + $0xc0] sm:$0xff] %v1424
    %1429 = vst [vmem:[#allocation3 + $0xc8] sm:$0xff] %v1425
    %v1430 = vld [vmem:[#allocation2 + $0x28] sm:$0xff]
    %v1431 = vld [vmem:[#allocation2 + $0x30] sm:$0xff]
    %v1432 = vld [vmem:[#allocation2 + $0x38] sm:$0xff]
    %v1433 = vmul.f32 %v1430, %v1405
    %v1434 = vmul.f32 %v1431, %v1408
    %v1435 = vmul.f32 %v1432, %v1407
    %1439 = vrot.lane.b32.xlu0 %v1433, 113
    %v1440 = vpop.permute.xlu0 %1439
    %1441 = vrot.lane.b32.xlu0 %v1434, 113
    %v1442 = vpop.permute.xlu0 %1441
    %1443 = vrot.lane.b32.xlu0 %v1435, 113
    %v1444 = vpop.permute.xlu0 %1443
    %v1445 = vsel %vm1246, %v1440, %v1442
    %v1446 = vsel %vm1246, %v1442, %v1444
    %1449 = vst [vmem:[#allocation3 + $0xd0] sm:$0xff] %v1445
    %1450 = vst [vmem:[#allocation3 + $0xd8] sm:$0xff] %v1446
    %v1451 = vld [vmem:[#allocation2 + $0x8] sm:$0xff]
    %v1452 = vld [vmem:[#allocation2 + $0x10] sm:$0xff]
    %v1453 = vld [vmem:[#allocation2 + $0x18] sm:$0xff]
    %1457 = vrot.lane.b32.xlu0 %v1451, 112
    %v1458 = vpop.permute.xlu0 %1457
    %1459 = vrot.lane.b32.xlu0 %v1452, 112
    %v1460 = vpop.permute.xlu0 %1459
    %1461 = vrot.lane.b32.xlu0 %v1453, 112
    %v1462 = vpop.permute.xlu0 %1461
    %vm1463 = vcmask 916480
    %v1464 = vsel %vm1463, %v1458, %v1460
    %v1465 = vsel %vm1463, %v1460, %v1462
    %1468 = vst [vmem:[#allocation3 + $0xe0] sm:$0xff] %v1464
    %1469 = vst [vmem:[#allocation3 + $0xe8] sm:$0xff] %v1465
    %v1470 = vld [vmem:[#allocation2 + $0x28] sm:$0xff]
    %v1471 = vld [vmem:[#allocation2 + $0x30] sm:$0xff]
    %v1472 = vld [vmem:[#allocation2 + $0x38] sm:$0xff]
    %1476 = vrot.lane.b32.xlu0 %v1470, 112
    %v1477 = vpop.permute.xlu0 %1476
    %1478 = vrot.lane.b32.xlu0 %v1471, 112
    %v1479 = vpop.permute.xlu0 %1478
    %1480 = vrot.lane.b32.xlu0 %v1472, 112
    %v1481 = vpop.permute.xlu0 %1480
    %v1482 = vsel %vm1463, %v1477, %v1479
    %v1483 = vsel %vm1463, %v1479, %v1481
    %1486 = vst [vmem:[#allocation3 + $0xf0] sm:$0xff] %v1482
    %1487 = vst [vmem:[#allocation3 + $0xf8] sm:$0xff] %v1483
    %v1488 = vld [vmem:[#allocation2 + $0x8] sm:$0xff]
    %v1489 = vld [vmem:[#allocation2 + $0x10] sm:$0xff]
    %v1490 = vld [vmem:[#allocation2 + $0x18] sm:$0xff]
    %1491 = vrot.lane.b32.xlu0 %v1237, 17
    %v1492 = vpop.permute.xlu0 %1491
    %1493 = vrot.lane.b32.xlu0 %v1241, 17
    %v1494 = vpop.permute.xlu0 %1493
    %v1495 = vsel %vm1166, %v1492, %v1494
    %v1499 = vmul.f32 %v1488, %v1492
    %v1500 = vmul.f32 %v1489, %v1495
    %v1501 = vmul.f32 %v1490, %v1494
    %1505 = vrot.lane.b32.xlu0 %v1499, 111
    %v1506 = vpop.permute.xlu0 %1505
    %1507 = vrot.lane.b32.xlu0 %v1500, 111
    %v1508 = vpop.permute.xlu0 %1507
    %1509 = vrot.lane.b32.xlu0 %v1501, 111
    %v1510 = vpop.permute.xlu0 %1509
    %v1511 = vsel %vm1149, %v1506, %v1508
    %v1512 = vsel %vm1149, %v1508, %v1510
    %1515 = vst [vmem:[#allocation3 + $0x100] sm:$0xff] %v1511
    %1516 = vst [vmem:[#allocation3 + $0x108] sm:$0xff] %v1512
    %v1517 = vld [vmem:[#allocation2 + $0x28] sm:$0xff]
    %v1518 = vld [vmem:[#allocation2 + $0x30] sm:$0xff]
    %v1519 = vld [vmem:[#allocation2 + $0x38] sm:$0xff]
    %v1520 = vmul.f32 %v1517, %v1492
    %v1521 = vmul.f32 %v1518, %v1495
    %v1522 = vmul.f32 %v1519, %v1494
    %1526 = vrot.lane.b32.xlu0 %v1520, 111
    %v1527 = vpop.permute.xlu0 %1526
    %1528 = vrot.lane.b32.xlu0 %v1521, 111
    %v1529 = vpop.permute.xlu0 %1528
    %1530 = vrot.lane.b32.xlu0 %v1522, 111
    %v1531 = vpop.permute.xlu0 %1530
    %v1532 = vsel %vm1149, %v1527, %v1529
    %v1533 = vsel %vm1149, %v1529, %v1531
    %1536 = vst [vmem:[#allocation3 + $0x110] sm:$0xff] %v1532
    %1537 = vst [vmem:[#allocation3 + $0x118] sm:$0xff] %v1533
    %v1538 = vld [vmem:[%s6 + $0x48] sm:$0xff]
    %v1539 = vpack.c.bf16 %v1538, %v1538
    %v1540 = vld [vmem:[#allocation3] sm:$0xff]
    %v1541 = vld [vmem:[#allocation3 + $0x8] sm:$0xff]
    %v1542 = vld [vmem:[#allocation3 + $0x10] sm:$0xff]
    %v1543 = vld [vmem:[#allocation3 + $0x18] sm:$0xff]
    %v1544 = vld [vmem:[#allocation3 + $0x20] sm:$0xff]
    %v1545 = vld [vmem:[#allocation3 + $0x28] sm:$0xff]
    %v1546 = vld [vmem:[#allocation3 + $0x30] sm:$0xff]
    %v1547 = vld [vmem:[#allocation3 + $0x38] sm:$0xff]
    %v1548 = vld [vmem:[#allocation3 + $0x40] sm:$0xff]
    %v1549 = vld [vmem:[#allocation3 + $0x48] sm:$0xff]
    %v1550 = vld [vmem:[#allocation3 + $0x50] sm:$0xff]
    %v1551 = vld [vmem:[#allocation3 + $0x58] sm:$0xff]
    %v1552 = vld [vmem:[#allocation3 + $0x60] sm:$0xff]
    %v1553 = vld [vmem:[#allocation3 + $0x68] sm:$0xff]
    %v1554 = vld [vmem:[#allocation3 + $0x70] sm:$0xff]
    %v1555 = vld [vmem:[#allocation3 + $0x78] sm:$0xff]
    %v1556 = vld [vmem:[#allocation3 + $0x80] sm:$0xff]
    %v1557 = vld [vmem:[#allocation3 + $0x88] sm:$0xff]
    %v1558 = vld [vmem:[#allocation3 + $0x90] sm:$0xff]
    %v1559 = vld [vmem:[#allocation3 + $0x98] sm:$0xff]
    %v1560 = vld [vmem:[#allocation3 + $0xa0] sm:$0xff]
    %v1561 = vld [vmem:[#allocation3 + $0xa8] sm:$0xff]
    %v1562 = vld [vmem:[#allocation3 + $0xb0] sm:$0xff]
    %v1563 = vld [vmem:[#allocation3 + $0xb8] sm:$0xff]
    %v1564 = vld [vmem:[#allocation3 + $0xc0] sm:$0xff]
    %v1565 = vld [vmem:[#allocation3 + $0xc8] sm:$0xff]
    %v1566 = vld [vmem:[#allocation3 + $0xd0] sm:$0xff]
    %v1567 = vld [vmem:[#allocation3 + $0xd8] sm:$0xff]
    %v1568 = vld [vmem:[#allocation3 + $0xe0] sm:$0xff]
    %v1569 = vld [vmem:[#allocation3 + $0xe8] sm:$0xff]
    %v1570 = vld [vmem:[#allocation3 + $0xf0] sm:$0xff]
    %v1571 = vld [vmem:[#allocation3 + $0xf8] sm:$0xff]
    %v1572 = vld [vmem:[#allocation3 + $0x100] sm:$0xff]
    %v1573 = vld [vmem:[#allocation3 + $0x108] sm:$0xff]
    %v1574 = vld [vmem:[#allocation3 + $0x110] sm:$0xff]
    %v1575 = vld [vmem:[#allocation3 + $0x118] sm:$0xff]
    %v1576 = vpack.c.bf16 %v1544, %v1540
    %v1577 = vpack.c.bf16 %v1545, %v1541
    %v1578 = vpack.c.bf16 %v1546, %v1542
    %v1579 = vpack.c.bf16 %v1547, %v1543
    %v1580 = vpack.c.bf16 %v1552, %v1548
    %v1581 = vpack.c.bf16 %v1553, %v1549
    %v1582 = vpack.c.bf16 %v1554, %v1550
    %v1583 = vpack.c.bf16 %v1555, %v1551
    %v1584 = vpack.c.bf16 %v1560, %v1556
    %v1585 = vpack.c.bf16 %v1561, %v1557
    %v1586 = vpack.c.bf16 %v1562, %v1558
    %v1587 = vpack.c.bf16 %v1563, %v1559
    %v1588 = vpack.c.bf16 %v1568, %v1564
    %v1589 = vpack.c.bf16 %v1569, %v1565
    %v1590 = vpack.c.bf16 %v1570, %v1566
    %v1591 = vpack.c.bf16 %v1571, %v1567
    %v1592 = vpack.c.bf16 %v1572, %v1572
    %v1593 = vpack.c.bf16 %v1573, %v1573
    %v1594 = vpack.c.bf16 %v1574, %v1574
    %v1595 = vpack.c.bf16 %v1575, %v1575
    %vm1596 = vcmask 588800
    %v1598 = vsel %vm1596, %v1539, 0
    %v1601 = vsel %vm135, %v1592, 0
    %v1604 = vsel %vm135, %v1593, 0
    %v1607 = vsel %vm135, %v1594, 0
    %v1610 = vsel %vm135, %v1595, 0
    %1612 = vmatprep.subr.bf16.mxu0 %v1577
    %1613 = vmatpush1.bf16.msra.mxu0 %v1576
    %1614 = vmatprep.subr.bf16.mxu0 %v1581
    %1615 = vmatpush1.bf16.msra.mxu0 %v1580
    %1616 = vmatprep.subr.bf16.mxu0 %v1585
    %1617 = vmatpush1.bf16.msra.mxu0 %v1584
    %1618 = vmatprep.subr.bf16.mxu0 %v1589
    %1619 = vmatpush1.bf16.msra.mxu0 %v1588
    %1620 = vmatprep.subr.bf16.mxu0 %v1604
    %1621 = vmatpush1.bf16.msra.mxu0 %v1601
    %1622 = vmatprep.subr.bf16.mxu0 0
    %1623 = vmatpush1.bf16.msra.mxu0 0
    %1624 = vmatprep.subr.bf16.mxu0 0
    %1625 = vmatpush1.bf16.msra.mxu0 0
    %1626 = vmatprep.subr.bf16.mxu0 0
    %1627 = vmatpush1.bf16.msra.mxu0 0
    %1628 = vmatprep.subr.bf16.mxu0 0
    %1629 = vmatpush1.bf16.msra.mxu0 0
    %1630 = vmatprep.subr.bf16.mxu0 0
    %1631 = vmatpush1.bf16.msra.mxu0 0
    %1632 = vmatprep.subr.bf16.mxu0 0
    %1633 = vmatpush1.bf16.msra.mxu0 0
    %1634 = vmatprep.subr.bf16.mxu0 0
    %1635 = vmatpush1.bf16.msra.mxu0 0
    %1636 = vmatprep.subr.bf16.mxu0 0
    %1637 = vmatpush1.bf16.msra.mxu0 0
    %1638 = vmatprep.subr.bf16.mxu0 0
    %1639 = vmatpush1.bf16.msra.mxu0 0
    %1640 = vmatprep.subr.bf16.mxu0 0
    %1641 = vmatpush1.bf16.msra.mxu0 0
    %1642 = vmatprep.subr.bf16.mxu0 0
    %1643 = vmatpush1.bf16.msra.mxu0 0
    %1644 = vmatprep.mubr.bf16.mxu0 0
    %1645 = vmatmul.mubr.bf16.gmra.mrb[0].mxu0 %v1598
    %v1646 = vpop.f32.mrb[0].mxu0
    %v1647 = vadd.f32 0.0, %v1646
    %v1648 = vpop.f32.mrb[0].mxu0
    %v1649 = vadd.f32 0.0, %v1648
    %v1650 = vpop.f32.mrb[0].mxu0
    %v1651 = vpop.f32.mrb[0].mxu0
    %1652 = vdwg.mxu0
    %1653 = vmatprep.subr.bf16.mxu0 %v1579
    %1654 = vmatpush1.bf16.msra.mxu0 %v1578
    %1655 = vmatprep.subr.bf16.mxu0 %v1583
    %1656 = vmatpush1.bf16.msra.mxu0 %v1582
    %1657 = vmatprep.subr.bf16.mxu0 %v1587
    %1658 = vmatpush1.bf16.msra.mxu0 %v1586
    %1659 = vmatprep.subr.bf16.mxu0 %v1591
    %1660 = vmatpush1.bf16.msra.mxu0 %v1590
    %1661 = vmatprep.subr.bf16.mxu0 %v1610
    %1662 = vmatpush1.bf16.msra.mxu0 %v1607
    %1663 = vmatprep.subr.bf16.mxu0 0
    %1664 = vmatpush1.bf16.msra.mxu0 0
    %1665 = vmatprep.subr.bf16.mxu0 0
    %1666 = vmatpush1.bf16.msra.mxu0 0
    %1667 = vmatprep.subr.bf16.mxu0 0
    %1668 = vmatpush1.bf16.msra.mxu0 0
    %1669 = vmatprep.subr.bf16.mxu0 0
    %1670 = vmatpush1.bf16.msra.mxu0 0
    %1671 = vmatprep.subr.bf16.mxu0 0
    %1672 = vmatpush1.bf16.msra.mxu0 0
    %1673 = vmatprep.subr.bf16.mxu0 0
    %1674 = vmatpush1.bf16.msra.mxu0 0
    %1675 = vmatprep.subr.bf16.mxu0 0
    %1676 = vmatpush1.bf16.msra.mxu0 0
    %1677 = vmatprep.subr.bf16.mxu0 0
    %1678 = vmatpush1.bf16.msra.mxu0 0
    %1679 = vmatprep.subr.bf16.mxu0 0
    %1680 = vmatpush1.bf16.msra.mxu0 0
    %1681 = vmatprep.subr.bf16.mxu0 0
    %1682 = vmatpush1.bf16.msra.mxu0 0
    %1683 = vmatprep.subr.bf16.mxu0 0
    %1684 = vmatpush1.bf16.msra.mxu0 0
    %1685 = vmatprep.mubr.bf16.mxu0 0
    %1686 = vmatmul.mubr.bf16.gmra.mrb[0].mxu0 %v1598
    %v1687 = vpop.f32.mrb[0].mxu0
    %v1688 = vadd.f32 0.0, %v1687
    %v1689 = vpop.f32.mrb[0].mxu0
    %v1690 = vadd.f32 0.0, %v1689
    %v1691 = vpop.f32.mrb[0].mxu0
    %v1692 = vpop.f32.mrb[0].mxu0
    %1693 = vdwg.mxu0
    %v1694 = vmul.f32 %v1647, 0.5
    %v1695 = vmul.f32 %v1649, 0.5
    %v1696 = vmul.f32 %v1688, 0.5
    %v1697 = vmul.f32 %v1690, 0.5
    %v1698 = vtanh.pop %v1694
    %v1699 = vtanh.pop %v1695
    %v1700 = vtanh.pop %v1696
    %v1701 = vtanh.pop %v1697
    %v1702 = vmul.f32 %v1698, 0.5
    %v1703 = vmul.f32 %v1699, 0.5
    %v1704 = vmul.f32 %v1700, 0.5
    %v1705 = vmul.f32 %v1701, 0.5
    %v1706 = vadd.f32 %v1702, 0.5
    %v1707 = vadd.f32 %v1703, 0.5
    %v1708 = vadd.f32 %v1704, 0.5
    %v1709 = vadd.f32 %v1705, 0.5
    %v1710 = vmul.f32 %v1647, %v1706
    %v1711 = vmul.f32 %v1649, %v1707
    %v1712 = vmul.f32 %v1688, %v1708
    %v1713 = vmul.f32 %v1690, %v1709
    %v1714 = vld [vmem:[%s6 + $0x50] sm:$0xff]
    %v1715 = vpack.c.bf16 %v1714, %v1714
    %v1716 = vpack.c.bf16 %v1710, %v1710
    %v1717 = vpack.c.bf16 %v1711, %v1711
    %v1718 = vpack.c.bf16 %v1712, %v1712
    %v1719 = vpack.c.bf16 %v1713, %v1713
    %v1720 = vld [vmem:[%s7 + $0x48] sm:$0xff]
    %1722 = vset.pattern.permute.xlu0 0
    %1723 = vperm.xlu0 %1722, %v1720
    %v1724 = vpop.permute.xlu0 %1723
    %v1727 = vsel %vm131, %v1715, 0
    %v1730 = vsel %vm135, %v1716, 0
    %v1733 = vsel %vm135, %v1717, 0
    %v1736 = vsel %vm135, %v1718, 0
    %v1739 = vsel %vm135, %v1719, 0
    %1741 = vmatprep.subr.bf16.mxu0 %v1733
    %1742 = vmatpush1.bf16.msra.mxu0 %v1730
    %1743 = vmatprep.subr.bf16.mxu0 0
    %1744 = vmatpush1.bf16.msra.mxu0 0
    %1745 = vmatprep.subr.bf16.mxu0 0
    %1746 = vmatpush1.bf16.msra.mxu0 0
    %1747 = vmatprep.subr.bf16.mxu0 0
    %1748 = vmatpush1.bf16.msra.mxu0 0
    %1749 = vmatprep.subr.bf16.mxu0 0
    %1750 = vmatpush1.bf16.msra.mxu0 0
    %1751 = vmatprep.subr.bf16.mxu0 0
    %1752 = vmatpush1.bf16.msra.mxu0 0
    %1753 = vmatprep.subr.bf16.mxu0 0
    %1754 = vmatpush1.bf16.msra.mxu0 0
    %1755 = vmatprep.subr.bf16.mxu0 0
    %1756 = vmatpush1.bf16.msra.mxu0 0
    %1757 = vmatprep.subr.bf16.mxu0 0
    %1758 = vmatpush1.bf16.msra.mxu0 0
    %1759 = vmatprep.subr.bf16.mxu0 0
    %1760 = vmatpush1.bf16.msra.mxu0 0
    %1761 = vmatprep.subr.bf16.mxu0 0
    %1762 = vmatpush1.bf16.msra.mxu0 0
    %1763 = vmatprep.subr.bf16.mxu0 0
    %1764 = vmatpush1.bf16.msra.mxu0 0
    %1765 = vmatprep.subr.bf16.mxu0 0
    %1766 = vmatpush1.bf16.msra.mxu0 0
    %1767 = vmatprep.subr.bf16.mxu0 0
    %1768 = vmatpush1.bf16.msra.mxu0 0
    %1769 = vmatprep.subr.bf16.mxu0 0
    %1770 = vmatpush1.bf16.msra.mxu0 0
    %1771 = vmatprep.subr.bf16.mxu0 0
    %1772 = vmatpush1.bf16.msra.mxu0 0
    %1773 = vmatprep.mubr.bf16.mxu0 0
    %1774 = vmatmul.mubr.bf16.gmra.mrb[0].mxu0 %v1727
    %v1775 = vpop.f32.mrb[0].mxu0
    %v1776 = vadd.f32 %v1724, %v1775
    %v1777 = vpop.f32.mrb[0].mxu0
    %v1778 = vadd.f32 %v1724, %v1777
    %v1779 = vpop.f32.mrb[0].mxu0
    %v1780 = vpop.f32.mrb[0].mxu0
    %1781 = vdwg.mxu0
    %1782 = vmatprep.subr.bf16.mxu0 %v1739
    %1783 = vmatpush1.bf16.msra.mxu0 %v1736
    %1784 = vmatprep.subr.bf16.mxu0 0
    %1785 = vmatpush1.bf16.msra.mxu0 0
    %1786 = vmatprep.subr.bf16.mxu0 0
    %1787 = vmatpush1.bf16.msra.mxu0 0
    %1788 = vmatprep.subr.bf16.mxu0 0
    %1789 = vmatpush1.bf16.msra.mxu0 0
    %1790 = vmatprep.subr.bf16.mxu0 0
    %1791 = vmatpush1.bf16.msra.mxu0 0
    %1792 = vmatprep.subr.bf16.mxu0 0
    %1793 = vmatpush1.bf16.msra.mxu0 0
    %1794 = vmatprep.subr.bf16.mxu0 0
    %1795 = vmatpush1.bf16.msra.mxu0 0
    %1796 = vmatprep.subr.bf16.mxu0 0
    %1797 = vmatpush1.bf16.msra.mxu0 0
    %1798 = vmatprep.subr.bf16.mxu0 0
    %1799 = vmatpush1.bf16.msra.mxu0 0
    %1800 = vmatprep.subr.bf16.mxu0 0
    %1801 = vmatpush1.bf16.msra.mxu0 0
    %1802 = vmatprep.subr.bf16.mxu0 0
    %1803 = vmatpush1.bf16.msra.mxu0 0
    %1804 = vmatprep.subr.bf16.mxu0 0
    %1805 = vmatpush1.bf16.msra.mxu0 0
    %1806 = vmatprep.subr.bf16.mxu0 0
    %1807 = vmatpush1.bf16.msra.mxu0 0
    %1808 = vmatprep.subr.bf16.mxu0 0
    %1809 = vmatpush1.bf16.msra.mxu0 0
    %1810 = vmatprep.subr.bf16.mxu0 0
    %1811 = vmatpush1.bf16.msra.mxu0 0
    %1812 = vmatprep.subr.bf16.mxu0 0
    %1813 = vmatpush1.bf16.msra.mxu0 0
    %1814 = vmatprep.mubr.bf16.mxu0 0
    %1815 = vmatmul.mubr.bf16.gmra.mrb[0].mxu0 %v1727
    %v1816 = vpop.f32.mrb[0].mxu0
    %v1817 = vadd.f32 %v1724, %v1816
    %v1818 = vpop.f32.mrb[0].mxu0
    %v1819 = vadd.f32 %v1724, %v1818
    %v1820 = vpop.f32.mrb[0].mxu0
    %v1821 = vpop.f32.mrb[0].mxu0
    %1822 = vdwg.mxu0
    %v1823 = vmul.f32 %v1776, 0.5
    %v1824 = vmul.f32 %v1778, 0.5
    %v1825 = vmul.f32 %v1817, 0.5
    %v1826 = vmul.f32 %v1819, 0.5
    %v1827 = vtanh.pop %v1823
    %v1828 = vtanh.pop %v1824
    %v1829 = vtanh.pop %v1825
    %v1830 = vtanh.pop %v1826
    %v1831 = vmul.f32 %v1827, 0.5
    %v1832 = vmul.f32 %v1828, 0.5
    %v1833 = vmul.f32 %v1829, 0.5
    %v1834 = vmul.f32 %v1830, 0.5
    %v1835 = vadd.f32 %v1831, 0.5
    %v1836 = vadd.f32 %v1832, 0.5
    %v1837 = vadd.f32 %v1833, 0.5
    %v1838 = vadd.f32 %v1834, 0.5
    %v1839 = vmul.f32 %v1776, %v1835
    %v1840 = vmul.f32 %v1778, %v1836
    %v1841 = vmul.f32 %v1817, %v1837
    %v1842 = vmul.f32 %v1819, %v1838
    %1843 = vst [vmem:[#allocation2 + $0x8] sm:$0xff] %v1839
    %1844 = vst [vmem:[#allocation2 + $0x10] sm:$0xff] %v1840
    %1845 = vst [vmem:[#allocation2 + $0x28] sm:$0xff] %v1841
    %1846 = vst [vmem:[#allocation2 + $0x30] sm:$0xff] %v1842
    %v1847 = vld [vmem:[#allocation2] sm:$0xff]
    %v1848 = vld [vmem:[#allocation2 + $0x8] sm:$0xff]
    %v1849 = vld [vmem:[#allocation2 + $0x10] sm:$0xff]
    %v1850 = vmul.f32 %v1847, %v1146
    %v1851 = vmul.f32 %v1848, %v1150
    %v1852 = vmul.f32 %v1849, %v1148
    %1856 = vrot.lane.b32.xlu0 %v1850, 17
    %v1857 = vpop.permute.xlu0 %1856
    %1858 = vrot.lane.b32.xlu0 %v1851, 17
    %v1859 = vpop.permute.xlu0 %1858
    %1860 = vrot.lane.b32.xlu0 %v1852, 17
    %v1861 = vpop.permute.xlu0 %1860
    %v1862 = vsel %vm1166, %v1857, %v1859
    %v1863 = vsel %vm1166, %v1859, %v1861
    %1866 = vst [vmem:[#allocation3] sm:$0xff] %v1862
    %1867 = vst [vmem:[#allocation3 + $0x8] sm:$0xff] %v1863
    %v1868 = vld [vmem:[#allocation2 + $0x20] sm:$0xff]
    %v1869 = vld [vmem:[#allocation2 + $0x28] sm:$0xff]
    %v1870 = vld [vmem:[#allocation2 + $0x30] sm:$0xff]
    %v1871 = vmul.f32 %v1868, %v1146
    %v1872 = vmul.f32 %v1869, %v1150
    %v1873 = vmul.f32 %v1870, %v1148
    %1877 = vrot.lane.b32.xlu0 %v1871, 17
    %v1878 = vpop.permute.xlu0 %1877
    %1879 = vrot.lane.b32.xlu0 %v1872, 17
    %v1880 = vpop.permute.xlu0 %1879
    %1881 = vrot.lane.b32.xlu0 %v1873, 17
    %v1882 = vpop.permute.xlu0 %1881
    %v1883 = vsel %vm1166, %v1878, %v1880
    %v1884 = vsel %vm1166, %v1880, %v1882
    %1887 = vst [vmem:[#allocation3 + $0x10] sm:$0xff] %v1883
    %1888 = vst [vmem:[#allocation3 + $0x18] sm:$0xff] %v1884
    %v1889 = vld [vmem:[#allocation2] sm:$0xff]
    %v1890 = vld [vmem:[#allocation2 + $0x8] sm:$0xff]
    %v1891 = vld [vmem:[#allocation2 + $0x10] sm:$0xff]
    %1895 = vrot.lane.b32.xlu0 %v1889, 16
    %v1896 = vpop.permute.xlu0 %1895
    %1897 = vrot.lane.b32.xlu0 %v1890, 16
    %v1898 = vpop.permute.xlu0 %1897
    %1899 = vrot.lane.b32.xlu0 %v1891, 16
    %v1900 = vpop.permute.xlu0 %1899
    %v1901 = vsel %vm297, %v1896, %v1898
    %v1902 = vsel %vm297, %v1898, %v1900
    %1905 = vst [vmem:[#allocation3 + $0x20] sm:$0xff] %v1901
    %1906 = vst [vmem:[#allocation3 + $0x28] sm:$0xff] %v1902
    %v1907 = vld [vmem:[#allocation2 + $0x20] sm:$0xff]
    %v1908 = vld [vmem:[#allocation2 + $0x28] sm:$0xff]
    %v1909 = vld [vmem:[#allocation2 + $0x30] sm:$0xff]
    %1913 = vrot.lane.b32.xlu0 %v1907, 16
    %v1914 = vpop.permute.xlu0 %1913
    %1915 = vrot.lane.b32.xlu0 %v1908, 16
    %v1916 = vpop.permute.xlu0 %1915
    %1917 = vrot.lane.b32.xlu0 %v1909, 16
    %v1918 = vpop.permute.xlu0 %1917
    %v1919 = vsel %vm297, %v1914, %v1916
    %v1920 = vsel %vm297, %v1916, %v1918
    %1923 = vst [vmem:[#allocation3 + $0x30] sm:$0xff] %v1919
    %1924 = vst [vmem:[#allocation3 + $0x38] sm:$0xff] %v1920
    %v1925 = vld [vmem:[#allocation2] sm:$0xff]
    %v1926 = vld [vmem:[#allocation2 + $0x8] sm:$0xff]
    %v1927 = vld [vmem:[#allocation2 + $0x10] sm:$0xff]
    %v1928 = vmul.f32 %v1925, %v1243
    %v1929 = vmul.f32 %v1926, %v1247
    %v1930 = vmul.f32 %v1927, %v1245
    %1934 = vrot.lane.b32.xlu0 %v1928, 15
    %v1935 = vpop.permute.xlu0 %1934
    %1936 = vrot.lane.b32.xlu0 %v1929, 15
    %v1937 = vpop.permute.xlu0 %1936
    %1938 = vrot.lane.b32.xlu0 %v1930, 15
    %v1939 = vpop.permute.xlu0 %1938
    %v1940 = vsel %vm1263, %v1935, %v1937
    %v1941 = vsel %vm1263, %v1937, %v1939
    %1944 = vst [vmem:[#allocation3 + $0x40] sm:$0xff] %v1940
    %1945 = vst [vmem:[#allocation3 + $0x48] sm:$0xff] %v1941
    %v1946 = vld [vmem:[#allocation2 + $0x20] sm:$0xff]
    %v1947 = vld [vmem:[#allocation2 + $0x28] sm:$0xff]
    %v1948 = vld [vmem:[#allocation2 + $0x30] sm:$0xff]
    %v1949 = vmul.f32 %v1946, %v1243
    %v1950 = vmul.f32 %v1947, %v1247
    %v1951 = vmul.f32 %v1948, %v1245
    %1955 = vrot.lane.b32.xlu0 %v1949, 15
    %v1956 = vpop.permute.xlu0 %1955
    %1957 = vrot.lane.b32.xlu0 %v1950, 15
    %v1958 = vpop.permute.xlu0 %1957
    %1959 = vrot.lane.b32.xlu0 %v1951, 15
    %v1960 = vpop.permute.xlu0 %1959
    %v1961 = vsel %vm1263, %v1956, %v1958
    %v1962 = vsel %vm1263, %v1958, %v1960
    %1965 = vst [vmem:[#allocation3 + $0x50] sm:$0xff] %v1961
    %1966 = vst [vmem:[#allocation3 + $0x58] sm:$0xff] %v1962
    %v1967 = vld [vmem:[#allocation2] sm:$0xff]
    %v1968 = vld [vmem:[#allocation2 + $0x8] sm:$0xff]
    %v1969 = vld [vmem:[#allocation2 + $0x10] sm:$0xff]
    %v1970 = vmul.f32 %v1967, %v1295
    %v1971 = vmul.f32 %v1968, %v1299
    %v1972 = vmul.f32 %v1969, %v1297
    %1976 = vrot.lane.b32.xlu0 %v1970, 1
    %v1977 = vpop.permute.xlu0 %1976
    %1978 = vrot.lane.b32.xlu0 %v1971, 1
    %v1979 = vpop.permute.xlu0 %1978
    %1980 = vrot.lane.b32.xlu0 %v1972, 1
    %v1981 = vpop.permute.xlu0 %1980
    %v1982 = vsel %vm1315, %v1977, %v1979
    %v1983 = vsel %vm1315, %v1979, %v1981
    %1986 = vst [vmem:[#allocation3 + $0x60] sm:$0xff] %v1982
    %1987 = vst [vmem:[#allocation3 + $0x68] sm:$0xff] %v1983
    %v1988 = vld [vmem:[#allocation2 + $0x20] sm:$0xff]
    %v1989 = vld [vmem:[#allocation2 + $0x28] sm:$0xff]
    %v1990 = vld [vmem:[#allocation2 + $0x30] sm:$0xff]
    %v1991 = vmul.f32 %v1988, %v1295
    %v1992 = vmul.f32 %v1989, %v1299
    %v1993 = vmul.f32 %v1990, %v1297
    %1997 = vrot.lane.b32.xlu0 %v1991, 1
    %v1998 = vpop.permute.xlu0 %1997
    %1999 = vrot.lane.b32.xlu0 %v1992, 1
    %v2000 = vpop.permute.xlu0 %1999
    %2001 = vrot.lane.b32.xlu0 %v1993, 1
    %v2002 = vpop.permute.xlu0 %2001
    %v2003 = vsel %vm1315, %v1998, %v2000
    %v2004 = vsel %vm1315, %v2000, %v2002
    %2007 = vst [vmem:[#allocation3 + $0x70] sm:$0xff] %v2003
    %2008 = vst [vmem:[#allocation3 + $0x78] sm:$0xff] %v2004
    %v2009 = vld [vmem:[#allocation2 + $0x8] sm:$0xff]
    %v2010 = vld [vmem:[#allocation2 + $0x10] sm:$0xff]
    %2011 = vst [vmem:[#allocation3 + $0x80] sm:$0xff] %v2009
    %2012 = vst [vmem:[#allocation3 + $0x88] sm:$0xff] %v2010
    %v2013 = vld [vmem:[#allocation2 + $0x28] sm:$0xff]
    %v2014 = vld [vmem:[#allocation2 + $0x30] sm:$0xff]
    %2015 = vst [vmem:[#allocation3 + $0x90] sm:$0xff] %v2013
    %2016 = vst [vmem:[#allocation3 + $0x98] sm:$0xff] %v2014
    %v2017 = vld [vmem:[#allocation2 + $0x8] sm:$0xff]
    %v2018 = vld [vmem:[#allocation2 + $0x10] sm:$0xff]
    %v2019 = vld [vmem:[#allocation2 + $0x18] sm:$0xff]
    %v2020 = vmul.f32 %v2017, %v1355
    %v2021 = vmul.f32 %v2018, %v1358
    %v2022 = vmul.f32 %v2019, %v1357
    %2026 = vrot.lane.b32.xlu0 %v2020, 127
    %v2027 = vpop.permute.xlu0 %2026
    %2028 = vrot.lane.b32.xlu0 %v2021, 127
    %v2029 = vpop.permute.xlu0 %2028
    %2030 = vrot.lane.b32.xlu0 %v2022, 127
    %v2031 = vpop.permute.xlu0 %2030
    %v2032 = vsel %vm1298, %v2027, %v2029
    %v2033 = vsel %vm1298, %v2029, %v2031
    %2036 = vst [vmem:[#allocation3 + $0xa0] sm:$0xff] %v2032
    %2037 = vst [vmem:[#allocation3 + $0xa8] sm:$0xff] %v2033
    %v2038 = vld [vmem:[#allocation2 + $0x28] sm:$0xff]
    %v2039 = vld [vmem:[#allocation2 + $0x30] sm:$0xff]
    %v2040 = vld [vmem:[#allocation2 + $0x38] sm:$0xff]
    %v2041 = vmul.f32 %v2038, %v1355
    %v2042 = vmul.f32 %v2039, %v1358
    %v2043 = vmul.f32 %v2040, %v1357
    %2047 = vrot.lane.b32.xlu0 %v2041, 127
    %v2048 = vpop.permute.xlu0 %2047
    %2049 = vrot.lane.b32.xlu0 %v2042, 127
    %v2050 = vpop.permute.xlu0 %2049
    %2051 = vrot.lane.b32.xlu0 %v2043, 127
    %v2052 = vpop.permute.xlu0 %2051
    %v2053 = vsel %vm1298, %v2048, %v2050
    %v2054 = vsel %vm1298, %v2050, %v2052
    %2057 = vst [vmem:[#allocation3 + $0xb0] sm:$0xff] %v2053
    %2058 = vst [vmem:[#allocation3 + $0xb8] sm:$0xff] %v2054
    %v2059 = vld [vmem:[#allocation2 + $0x8] sm:$0xff]
    %v2060 = vld [vmem:[#allocation2 + $0x10] sm:$0xff]
    %v2061 = vld [vmem:[#allocation2 + $0x18] sm:$0xff]
    %v2062 = vmul.f32 %v2059, %v1405
    %v2063 = vmul.f32 %v2060, %v1408
    %v2064 = vmul.f32 %v2061, %v1407
    %2068 = vrot.lane.b32.xlu0 %v2062, 113
    %v2069 = vpop.permute.xlu0 %2068
    %2070 = vrot.lane.b32.xlu0 %v2063, 113
    %v2071 = vpop.permute.xlu0 %2070
    %2072 = vrot.lane.b32.xlu0 %v2064, 113
    %v2073 = vpop.permute.xlu0 %2072
    %v2074 = vsel %vm1246, %v2069, %v2071
    %v2075 = vsel %vm1246, %v2071, %v2073
    %2078 = vst [vmem:[#allocation3 + $0xc0] sm:$0xff] %v2074
    %2079 = vst [vmem:[#allocation3 + $0xc8] sm:$0xff] %v2075
    %v2080 = vld [vmem:[#allocation2 + $0x28] sm:$0xff]
    %v2081 = vld [vmem:[#allocation2 + $0x30] sm:$0xff]
    %v2082 = vld [vmem:[#allocation2 + $0x38] sm:$0xff]
    %v2083 = vmul.f32 %v2080, %v1405
    %v2084 = vmul.f32 %v2081, %v1408
    %v2085 = vmul.f32 %v2082, %v1407
    %2089 = vrot.lane.b32.xlu0 %v2083, 113
    %v2090 = vpop.permute.xlu0 %2089
    %2091 = vrot.lane.b32.xlu0 %v2084, 113
    %v2092 = vpop.permute.xlu0 %2091
    %2093 = vrot.lane.b32.xlu0 %v2085, 113
    %v2094 = vpop.permute.xlu0 %2093
    %v2095 = vsel %vm1246, %v2090, %v2092
    %v2096 = vsel %vm1246, %v2092, %v2094
    %2099 = vst [vmem:[#allocation3 + $0xd0] sm:$0xff] %v2095
    %2100 = vst [vmem:[#allocation3 + $0xd8] sm:$0xff] %v2096
    %v2101 = vld [vmem:[#allocation2 + $0x8] sm:$0xff]
    %v2102 = vld [vmem:[#allocation2 + $0x10] sm:$0xff]
    %v2103 = vld [vmem:[#allocation2 + $0x18] sm:$0xff]
    %2107 = vrot.lane.b32.xlu0 %v2101, 112
    %v2108 = vpop.permute.xlu0 %2107
    %2109 = vrot.lane.b32.xlu0 %v2102, 112
    %v2110 = vpop.permute.xlu0 %2109
    %2111 = vrot.lane.b32.xlu0 %v2103, 112
    %v2112 = vpop.permute.xlu0 %2111
    %v2113 = vsel %vm1463, %v2108, %v2110
    %v2114 = vsel %vm1463, %v2110, %v2112
    %2117 = vst [vmem:[#allocation3 + $0xe0] sm:$0xff] %v2113
    %2118 = vst [vmem:[#allocation3 + $0xe8] sm:$0xff] %v2114
    %v2119 = vld [vmem:[#allocation2 + $0x28] sm:$0xff]
    %v2120 = vld [vmem:[#allocation2 + $0x30] sm:$0xff]
    %v2121 = vld [vmem:[#allocation2 + $0x38] sm:$0xff]
    %2125 = vrot.lane.b32.xlu0 %v2119, 112
    %v2126 = vpop.permute.xlu0 %2125
    %2127 = vrot.lane.b32.xlu0 %v2120, 112
    %v2128 = vpop.permute.xlu0 %2127
    %2129 = vrot.lane.b32.xlu0 %v2121, 112
    %v2130 = vpop.permute.xlu0 %2129
    %v2131 = vsel %vm1463, %v2126, %v2128
    %v2132 = vsel %vm1463, %v2128, %v2130
    %2135 = vst [vmem:[#allocation3 + $0xf0] sm:$0xff] %v2131
    %2136 = vst [vmem:[#allocation3 + $0xf8] sm:$0xff] %v2132
    %v2137 = vld [vmem:[#allocation2 + $0x8] sm:$0xff]
    %v2138 = vld [vmem:[#allocation2 + $0x10] sm:$0xff]
    %v2139 = vld [vmem:[#allocation2 + $0x18] sm:$0xff]
    %v2140 = vmul.f32 %v2137, %v1492
    %v2141 = vmul.f32 %v2138, %v1495
    %v2142 = vmul.f32 %v2139, %v1494
    %2146 = vrot.lane.b32.xlu0 %v2140, 111
    %v2147 = vpop.permute.xlu0 %2146
    %2148 = vrot.lane.b32.xlu0 %v2141, 111
    %v2149 = vpop.permute.xlu0 %2148
    %2150 = vrot.lane.b32.xlu0 %v2142, 111
    %v2151 = vpop.permute.xlu0 %2150
    %v2152 = vsel %vm1149, %v2147, %v2149
    %v2153 = vsel %vm1149, %v2149, %v2151
    %2156 = vst [vmem:[#allocation3 + $0x100] sm:$0xff] %v2152
    %2157 = vst [vmem:[#allocation3 + $0x108] sm:$0xff] %v2153
    %v2158 = vld [vmem:[#allocation2 + $0x28] sm:$0xff]
    %v2159 = vld [vmem:[#allocation2 + $0x30] sm:$0xff]
    %v2160 = vld [vmem:[#allocation2 + $0x38] sm:$0xff]
    %v2161 = vmul.f32 %v2158, %v1492
    %v2162 = vmul.f32 %v2159, %v1495
    %v2163 = vmul.f32 %v2160, %v1494
    %2167 = vrot.lane.b32.xlu0 %v2161, 111
    %v2168 = vpop.permute.xlu0 %2167
    %2169 = vrot.lane.b32.xlu0 %v2162, 111
    %v2170 = vpop.permute.xlu0 %2169
    %2171 = vrot.lane.b32.xlu0 %v2163, 111
    %v2172 = vpop.permute.xlu0 %2171
    %v2173 = vsel %vm1149, %v2168, %v2170
    %v2174 = vsel %vm1149, %v2170, %v2172
    %2177 = vst [vmem:[#allocation3 + $0x110] sm:$0xff] %v2173
    %2178 = vst [vmem:[#allocation3 + $0x118] sm:$0xff] %v2174
    %v2179 = vld [vmem:[%s6 + $0x58] sm:$0xff]
    %v2180 = vpack.c.bf16 %v2179, %v2179
    %v2181 = vld [vmem:[#allocation3] sm:$0xff]
    %v2182 = vld [vmem:[#allocation3 + $0x8] sm:$0xff]
    %v2183 = vld [vmem:[#allocation3 + $0x10] sm:$0xff]
    %v2184 = vld [vmem:[#allocation3 + $0x18] sm:$0xff]
    %v2185 = vld [vmem:[#allocation3 + $0x20] sm:$0xff]
    %v2186 = vld [vmem:[#allocation3 + $0x28] sm:$0xff]
    %v2187 = vld [vmem:[#allocation3 + $0x30] sm:$0xff]
    %v2188 = vld [vmem:[#allocation3 + $0x38] sm:$0xff]
    %v2189 = vld [vmem:[#allocation3 + $0x40] sm:$0xff]
    %v2190 = vld [vmem:[#allocation3 + $0x48] sm:$0xff]
    %v2191 = vld [vmem:[#allocation3 + $0x50] sm:$0xff]
    %v2192 = vld [vmem:[#allocation3 + $0x58] sm:$0xff]
    %v2193 = vld [vmem:[#allocation3 + $0x60] sm:$0xff]
    %v2194 = vld [vmem:[#allocation3 + $0x68] sm:$0xff]
    %v2195 = vld [vmem:[#allocation3 + $0x70] sm:$0xff]
    %v2196 = vld [vmem:[#allocation3 + $0x78] sm:$0xff]
    %v2197 = vld [vmem:[#allocation3 + $0x80] sm:$0xff]
    %v2198 = vld [vmem:[#allocation3 + $0x88] sm:$0xff]
    %v2199 = vld [vmem:[#allocation3 + $0x90] sm:$0xff]
    %v2200 = vld [vmem:[#allocation3 + $0x98] sm:$0xff]
    %v2201 = vld [vmem:[#allocation3 + $0xa0] sm:$0xff]
    %v2202 = vld [vmem:[#allocation3 + $0xa8] sm:$0xff]
    %v2203 = vld [vmem:[#allocation3 + $0xb0] sm:$0xff]
    %v2204 = vld [vmem:[#allocation3 + $0xb8] sm:$0xff]
    %v2205 = vld [vmem:[#allocation3 + $0xc0] sm:$0xff]
    %v2206 = vld [vmem:[#allocation3 + $0xc8] sm:$0xff]
    %v2207 = vld [vmem:[#allocation3 + $0xd0] sm:$0xff]
    %v2208 = vld [vmem:[#allocation3 + $0xd8] sm:$0xff]
    %v2209 = vld [vmem:[#allocation3 + $0xe0] sm:$0xff]
    %v2210 = vld [vmem:[#allocation3 + $0xe8] sm:$0xff]
    %v2211 = vld [vmem:[#allocation3 + $0xf0] sm:$0xff]
    %v2212 = vld [vmem:[#allocation3 + $0xf8] sm:$0xff]
    %v2213 = vld [vmem:[#allocation3 + $0x100] sm:$0xff]
    %v2214 = vld [vmem:[#allocation3 + $0x108] sm:$0xff]
    %v2215 = vld [vmem:[#allocation3 + $0x110] sm:$0xff]
    %v2216 = vld [vmem:[#allocation3 + $0x118] sm:$0xff]
    %v2217 = vpack.c.bf16 %v2185, %v2181
    %v2218 = vpack.c.bf16 %v2186, %v2182
    %v2219 = vpack.c.bf16 %v2187, %v2183
    %v2220 = vpack.c.bf16 %v2188, %v2184
    %v2221 = vpack.c.bf16 %v2193, %v2189
    %v2222 = vpack.c.bf16 %v2194, %v2190
    %v2223 = vpack.c.bf16 %v2195, %v2191
    %v2224 = vpack.c.bf16 %v2196, %v2192
    %v2225 = vpack.c.bf16 %v2201, %v2197
    %v2226 = vpack.c.bf16 %v2202, %v2198
    %v2227 = vpack.c.bf16 %v2203, %v2199
    %v2228 = vpack.c.bf16 %v2204, %v2200
    %v2229 = vpack.c.bf16 %v2209, %v2205
    %v2230 = vpack.c.bf16 %v2210, %v2206
    %v2231 = vpack.c.bf16 %v2211, %v2207
    %v2232 = vpack.c.bf16 %v2212, %v2208
    %v2233 = vpack.c.bf16 %v2213, %v2213
    %v2234 = vpack.c.bf16 %v2214, %v2214
    %v2235 = vpack.c.bf16 %v2215, %v2215
    %v2236 = vpack.c.bf16 %v2216, %v2216
    %v2238 = vsel %vm1596, %v2180, 0
    %v2241 = vsel %vm135, %v2233, 0
    %v2244 = vsel %vm135, %v2234, 0
    %v2247 = vsel %vm135, %v2235, 0
    %v2250 = vsel %vm135, %v2236, 0
    %2252 = vmatprep.subr.bf16.mxu0 %v2218
    %2253 = vmatpush1.bf16.msra.mxu0 %v2217
    %2254 = vmatprep.subr.bf16.mxu0 %v2222
    %2255 = vmatpush1.bf16.msra.mxu0 %v2221
    %2256 = vmatprep.subr.bf16.mxu0 %v2226
    %2257 = vmatpush1.bf16.msra.mxu0 %v2225
    %2258 = vmatprep.subr.bf16.mxu0 %v2230
    %2259 = vmatpush1.bf16.msra.mxu0 %v2229
    %2260 = vmatprep.subr.bf16.mxu0 %v2244
    %2261 = vmatpush1.bf16.msra.mxu0 %v2241
    %2262 = vmatprep.subr.bf16.mxu0 0
    %2263 = vmatpush1.bf16.msra.mxu0 0
    %2264 = vmatprep.subr.bf16.mxu0 0
    %2265 = vmatpush1.bf16.msra.mxu0 0
    %2266 = vmatprep.subr.bf16.mxu0 0
    %2267 = vmatpush1.bf16.msra.mxu0 0
    %2268 = vmatprep.subr.bf16.mxu0 0
    %2269 = vmatpush1.bf16.msra.mxu0 0
    %2270 = vmatprep.subr.bf16.mxu0 0
    %2271 = vmatpush1.bf16.msra.mxu0 0
    %2272 = vmatprep.subr.bf16.mxu0 0
    %2273 = vmatpush1.bf16.msra.mxu0 0
    %2274 = vmatprep.subr.bf16.mxu0 0
    %2275 = vmatpush1.bf16.msra.mxu0 0
    %2276 = vmatprep.subr.bf16.mxu0 0
    %2277 = vmatpush1.bf16.msra.mxu0 0
    %2278 = vmatprep.subr.bf16.mxu0 0
    %2279 = vmatpush1.bf16.msra.mxu0 0
    %2280 = vmatprep.subr.bf16.mxu0 0
    %2281 = vmatpush1.bf16.msra.mxu0 0
    %2282 = vmatprep.subr.bf16.mxu0 0
    %2283 = vmatpush1.bf16.msra.mxu0 0
    %2284 = vmatprep.mubr.bf16.mxu0 0
    %2285 = vmatmul.mubr.bf16.gmra.mrb[0].mxu0 %v2238
    %v2286 = vpop.f32.mrb[0].mxu0
    %v2287 = vadd.f32 0.0, %v2286
    %v2288 = vpop.f32.mrb[0].mxu0
    %v2289 = vadd.f32 0.0, %v2288
    %v2290 = vpop.f32.mrb[0].mxu0
    %v2291 = vpop.f32.mrb[0].mxu0
    %2292 = vdwg.mxu0
    %2293 = vmatprep.subr.bf16.mxu0 %v2220
    %2294 = vmatpush1.bf16.msra.mxu0 %v2219
    %2295 = vmatprep.subr.bf16.mxu0 %v2224
    %2296 = vmatpush1.bf16.msra.mxu0 %v2223
    %2297 = vmatprep.subr.bf16.mxu0 %v2228
    %2298 = vmatpush1.bf16.msra.mxu0 %v2227
    %2299 = vmatprep.subr.bf16.mxu0 %v2232
    %2300 = vmatpush1.bf16.msra.mxu0 %v2231
    %2301 = vmatprep.subr.bf16.mxu0 %v2250
    %2302 = vmatpush1.bf16.msra.mxu0 %v2247
    %2303 = vmatprep.subr.bf16.mxu0 0
    %2304 = vmatpush1.bf16.msra.mxu0 0
    %2305 = vmatprep.subr.bf16.mxu0 0
    %2306 = vmatpush1.bf16.msra.mxu0 0
    %2307 = vmatprep.subr.bf16.mxu0 0
    %2308 = vmatpush1.bf16.msra.mxu0 0
    %2309 = vmatprep.subr.bf16.mxu0 0
    %2310 = vmatpush1.bf16.msra.mxu0 0
    %2311 = vmatprep.subr.bf16.mxu0 0
    %2312 = vmatpush1.bf16.msra.mxu0 0
    %2313 = vmatprep.subr.bf16.mxu0 0
    %2314 = vmatpush1.bf16.msra.mxu0 0
    %2315 = vmatprep.subr.bf16.mxu0 0
    %2316 = vmatpush1.bf16.msra.mxu0 0
    %2317 = vmatprep.subr.bf16.mxu0 0
    %2318 = vmatpush1.bf16.msra.mxu0 0
    %2319 = vmatprep.subr.bf16.mxu0 0
    %2320 = vmatpush1.bf16.msra.mxu0 0
    %2321 = vmatprep.subr.bf16.mxu0 0
    %2322 = vmatpush1.bf16.msra.mxu0 0
    %2323 = vmatprep.subr.bf16.mxu0 0
    %2324 = vmatpush1.bf16.msra.mxu0 0
    %2325 = vmatprep.mubr.bf16.mxu0 0
    %2326 = vmatmul.mubr.bf16.gmra.mrb[0].mxu0 %v2238
    %v2327 = vpop.f32.mrb[0].mxu0
    %v2328 = vadd.f32 0.0, %v2327
    %v2329 = vpop.f32.mrb[0].mxu0
    %v2330 = vadd.f32 0.0, %v2329
    %v2331 = vpop.f32.mrb[0].mxu0
    %v2332 = vpop.f32.mrb[0].mxu0
    %2333 = vdwg.mxu0
    %v2334 = vmul.f32 %v2287, 0.5
    %v2335 = vmul.f32 %v2289, 0.5
    %v2336 = vmul.f32 %v2328, 0.5
    %v2337 = vmul.f32 %v2330, 0.5
    %v2338 = vtanh.pop %v2334
    %v2339 = vtanh.pop %v2335
    %v2340 = vtanh.pop %v2336
    %v2341 = vtanh.pop %v2337
    %v2342 = vmul.f32 %v2338, 0.5
    %v2343 = vmul.f32 %v2339, 0.5
    %v2344 = vmul.f32 %v2340, 0.5
    %v2345 = vmul.f32 %v2341, 0.5
    %v2346 = vadd.f32 %v2342, 0.5
    %v2347 = vadd.f32 %v2343, 0.5
    %v2348 = vadd.f32 %v2344, 0.5
    %v2349 = vadd.f32 %v2345, 0.5
    %v2350 = vmul.f32 %v2287, %v2346
    %v2351 = vmul.f32 %v2289, %v2347
    %v2352 = vmul.f32 %v2328, %v2348
    %v2353 = vmul.f32 %v2330, %v2349
    %v2354 = vpack.c.bf16 %v2350, %v1710
    %v2355 = vpack.c.bf16 %v2351, %v1711
    %v2356 = vpack.c.bf16 %v2352, %v1712
    %v2357 = vpack.c.bf16 %v2353, %v1713
    %v2358 = vld [vmem:[%s6 + $0x60] sm:$0xff]
    %v2359 = vpack.c.bf16 %v2358, %v2358
    %v2360 = vld [vmem:[%s7 + $0x50] sm:$0xff]
    %2362 = vset.pattern.permute.xlu0 0
    %2363 = vperm.xlu0 %2362, %v2360
    %v2364 = vpop.permute.xlu0 %2363
    %v2367 = vsel %vm383, %v2359, 0
    %2369 = vmatprep.subr.bf16.mxu0 %v1015
    %2370 = vmatpush1.bf16.msra.mxu0 %v1014
    %2371 = vmatprep.subr.bf16.mxu0 %v2355
    %2372 = vmatpush1.bf16.msra.mxu0 %v2354
    %2373 = vmatprep.subr.bf16.mxu0 0
    %2374 = vmatpush1.bf16.msra.mxu0 0
    %2375 = vmatprep.subr.bf16.mxu0 0
    %2376 = vmatpush1.bf16.msra.mxu0 0
    %2377 = vmatprep.subr.bf16.mxu0 0
    %2378 = vmatpush1.bf16.msra.mxu0 0
    %2379 = vmatprep.subr.bf16.mxu0 0
    %2380 = vmatpush1.bf16.msra.mxu0 0
    %2381 = vmatprep.subr.bf16.mxu0 0
    %2382 = vmatpush1.bf16.msra.mxu0 0
    %2383 = vmatprep.subr.bf16.mxu0 0
    %2384 = vmatpush1.bf16.msra.mxu0 0
    %2385 = vmatprep.subr.bf16.mxu0 0
    %2386 = vmatpush1.bf16.msra.mxu0 0
    %2387 = vmatprep.subr.bf16.mxu0 0
    %2388 = vmatpush1.bf16.msra.mxu0 0
    %2389 = vmatprep.subr.bf16.mxu0 0
    %2390 = vmatpush1.bf16.msra.mxu0 0
    %2391 = vmatprep.subr.bf16.mxu0 0
    %2392 = vmatpush1.bf16.msra.mxu0 0
    %2393 = vmatprep.subr.bf16.mxu0 0
    %2394 = vmatpush1.bf16.msra.mxu0 0
    %2395 = vmatprep.subr.bf16.mxu0 0
    %2396 = vmatpush1.bf16.msra.mxu0 0
    %2397 = vmatprep.subr.bf16.mxu0 0
    %2398 = vmatpush1.bf16.msra.mxu0 0
    %2399 = vmatprep.subr.bf16.mxu0 0
    %2400 = vmatpush1.bf16.msra.mxu0 0
    %2401 = vmatprep.mubr.bf16.mxu0 0
    %2402 = vmatmul.mubr.bf16.gmra.mrb[0].mxu0 %v2367
    %v2403 = vpop.f32.mrb[0].mxu0
    %v2404 = vadd.f32 %v2364, %v2403
    %v2405 = vpop.f32.mrb[0].mxu0
    %v2406 = vadd.f32 %v2364, %v2405
    %v2407 = vpop.f32.mrb[0].mxu0
    %v2408 = vpop.f32.mrb[0].mxu0
    %2409 = vdwg.mxu0
    %2410 = vmatprep.subr.bf16.mxu0 %v1017
    %2411 = vmatpush1.bf16.msra.mxu0 %v1016
    %2412 = vmatprep.subr.bf16.mxu0 %v2357
    %2413 = vmatpush1.bf16.msra.mxu0 %v2356
    %2414 = vmatprep.subr.bf16.mxu0 0
    %2415 = vmatpush1.bf16.msra.mxu0 0
    %2416 = vmatprep.subr.bf16.mxu0 0
    %2417 = vmatpush1.bf16.msra.mxu0 0
    %2418 = vmatprep.subr.bf16.mxu0 0
    %2419 = vmatpush1.bf16.msra.mxu0 0
    %2420 = vmatprep.subr.bf16.mxu0 0
    %2421 = vmatpush1.bf16.msra.mxu0 0
    %2422 = vmatprep.subr.bf16.mxu0 0
    %2423 = vmatpush1.bf16.msra.mxu0 0
    %2424 = vmatprep.subr.bf16.mxu0 0
    %2425 = vmatpush1.bf16.msra.mxu0 0
    %2426 = vmatprep.subr.bf16.mxu0 0
    %2427 = vmatpush1.bf16.msra.mxu0 0
    %2428 = vmatprep.subr.bf16.mxu0 0
    %2429 = vmatpush1.bf16.msra.mxu0 0
    %2430 = vmatprep.subr.bf16.mxu0 0
    %2431 = vmatpush1.bf16.msra.mxu0 0
    %2432 = vmatprep.subr.bf16.mxu0 0
    %2433 = vmatpush1.bf16.msra.mxu0 0
    %2434 = vmatprep.subr.bf16.mxu0 0
    %2435 = vmatpush1.bf16.msra.mxu0 0
    %2436 = vmatprep.subr.bf16.mxu0 0
    %2437 = vmatpush1.bf16.msra.mxu0 0
    %2438 = vmatprep.subr.bf16.mxu0 0
    %2439 = vmatpush1.bf16.msra.mxu0 0
    %2440 = vmatprep.subr.bf16.mxu0 0
    %2441 = vmatpush1.bf16.msra.mxu0 0
    %2442 = vmatprep.mubr.bf16.mxu0 0
    %2443 = vmatmul.mubr.bf16.gmra.mrb[0].mxu0 %v2367
    %v2444 = vpop.f32.mrb[0].mxu0
    %v2445 = vadd.f32 %v2364, %v2444
    %v2446 = vpop.f32.mrb[0].mxu0
    %v2447 = vadd.f32 %v2364, %v2446
    %v2448 = vpop.f32.mrb[0].mxu0
    %v2449 = vpop.f32.mrb[0].mxu0
    %2450 = vdwg.mxu0
    %v2451 = vmul.f32 %v2404, 0.5
    %v2452 = vmul.f32 %v2406, 0.5
    %v2453 = vmul.f32 %v2445, 0.5
    %v2454 = vmul.f32 %v2447, 0.5
    %v2455 = vtanh.pop %v2451
    %v2456 = vtanh.pop %v2452
    %v2457 = vtanh.pop %v2453
    %v2458 = vtanh.pop %v2454
    %v2459 = vmul.f32 %v2455, 0.5
    %v2460 = vmul.f32 %v2456, 0.5
    %v2461 = vmul.f32 %v2457, 0.5
    %v2462 = vmul.f32 %v2458, 0.5
    %v2463 = vadd.f32 %v2459, 0.5
    %v2464 = vadd.f32 %v2460, 0.5
    %v2465 = vadd.f32 %v2461, 0.5
    %v2466 = vadd.f32 %v2462, 0.5
    %v2467 = vmul.f32 %v2404, %v2463
    %v2468 = vmul.f32 %v2406, %v2464
    %v2469 = vmul.f32 %v2445, %v2465
    %v2470 = vmul.f32 %v2447, %v2466
    %v2471 = vpack.c.bf16 %v2467, %v2350
    %v2472 = vpack.c.bf16 %v2468, %v2351
    %v2473 = vpack.c.bf16 %v2469, %v2352
    %v2474 = vpack.c.bf16 %v2470, %v2353
    %v2475 = vld [vmem:[%s6 + $0x68] sm:$0xff]
    %v2476 = vld [vmem:[%s6 + $0x70] sm:$0xff]
    %v2477 = vpack.c.bf16 %v2476, %v2475
    %v2478 = vld [vmem:[%s7 + $0x58] sm:$0xff]
    %v2479 = vld [vmem:[%s7 + $0x60] sm:$0xff]
    %2481 = vset.pattern.permute.xlu0 0
    %2482 = vperm.xlu0 %2481, %v2478
    %v2483 = vpop.permute.xlu0 %2482
    %2486 = vset.pattern.permute.xlu0 0
    %2487 = vperm.xlu0 %2486, %v2479
    %v2488 = vpop.permute.xlu0 %2487
    %v2491 = vsel %vm297, %v2477, 0
    %2493 = vmatprep.subr.bf16.mxu0 %v2472
    %2494 = vmatpush1.bf16.msra.mxu0 %v2471
    %2495 = vmatprep.subr.bf16.mxu0 0
    %2496 = vmatpush1.bf16.msra.mxu0 0
    %2497 = vmatprep.subr.bf16.mxu0 0
    %2498 = vmatpush1.bf16.msra.mxu0 0
    %2499 = vmatprep.subr.bf16.mxu0 0
    %2500 = vmatpush1.bf16.msra.mxu0 0
    %2501 = vmatprep.subr.bf16.mxu0 0
    %2502 = vmatpush1.bf16.msra.mxu0 0
    %2503 = vmatprep.subr.bf16.mxu0 0
    %2504 = vmatpush1.bf16.msra.mxu0 0
    %2505 = vmatprep.subr.bf16.mxu0 0
    %2506 = vmatpush1.bf16.msra.mxu0 0
    %2507 = vmatprep.subr.bf16.mxu0 0
    %2508 = vmatpush1.bf16.msra.mxu0 0
    %2509 = vmatprep.subr.bf16.mxu0 0
    %2510 = vmatpush1.bf16.msra.mxu0 0
    %2511 = vmatprep.subr.bf16.mxu0 0
    %2512 = vmatpush1.bf16.msra.mxu0 0
    %2513 = vmatprep.subr.bf16.mxu0 0
    %2514 = vmatpush1.bf16.msra.mxu0 0
    %2515 = vmatprep.subr.bf16.mxu0 0
    %2516 = vmatpush1.bf16.msra.mxu0 0
    %2517 = vmatprep.subr.bf16.mxu0 0
    %2518 = vmatpush1.bf16.msra.mxu0 0
    %2519 = vmatprep.subr.bf16.mxu0 0
    %2520 = vmatpush1.bf16.msra.mxu0 0
    %2521 = vmatprep.subr.bf16.mxu0 0
    %2522 = vmatpush1.bf16.msra.mxu0 0
    %2523 = vmatprep.subr.bf16.mxu0 0
    %2524 = vmatpush1.bf16.msra.mxu0 0
    %2525 = vmatprep.mubr.bf16.mxu0 0
    %2526 = vmatmul.mubr.bf16.gmra.mrb[0].mxu0 %v2491
    %v2527 = vpop.f32.mrb[0].mxu0
    %v2528 = vadd.f32 %v2483, %v2527
    %v2529 = vpop.f32.mrb[0].mxu0
    %v2530 = vadd.f32 %v2483, %v2529
    %v2531 = vpop.f32.mrb[0].mxu0
    %v2532 = vadd.f32 %v2488, %v2531
    %v2533 = vpop.f32.mrb[0].mxu0
    %v2534 = vadd.f32 %v2488, %v2533
    %2535 = vdwg.mxu0
    %2536 = vmatprep.subr.bf16.mxu0 %v2474
    %2537 = vmatpush1.bf16.msra.mxu0 %v2473
    %2538 = vmatprep.subr.bf16.mxu0 0
    %2539 = vmatpush1.bf16.msra.mxu0 0
    %2540 = vmatprep.subr.bf16.mxu0 0
    %2541 = vmatpush1.bf16.msra.mxu0 0
    %2542 = vmatprep.subr.bf16.mxu0 0
    %2543 = vmatpush1.bf16.msra.mxu0 0
    %2544 = vmatprep.subr.bf16.mxu0 0
    %2545 = vmatpush1.bf16.msra.mxu0 0
    %2546 = vmatprep.subr.bf16.mxu0 0
    %2547 = vmatpush1.bf16.msra.mxu0 0
    %2548 = vmatprep.subr.bf16.mxu0 0
    %2549 = vmatpush1.bf16.msra.mxu0 0
    %2550 = vmatprep.subr.bf16.mxu0 0
    %2551 = vmatpush1.bf16.msra.mxu0 0
    %2552 = vmatprep.subr.bf16.mxu0 0
    %2553 = vmatpush1.bf16.msra.mxu0 0
    %2554 = vmatprep.subr.bf16.mxu0 0
    %2555 = vmatpush1.bf16.msra.mxu0 0
    %2556 = vmatprep.subr.bf16.mxu0 0
    %2557 = vmatpush1.bf16.msra.mxu0 0
    %2558 = vmatprep.subr.bf16.mxu0 0
    %2559 = vmatpush1.bf16.msra.mxu0 0
    %2560 = vmatprep.subr.bf16.mxu0 0
    %2561 = vmatpush1.bf16.msra.mxu0 0
    %2562 = vmatprep.subr.bf16.mxu0 0
    %2563 = vmatpush1.bf16.msra.mxu0 0
    %2564 = vmatprep.subr.bf16.mxu0 0
    %2565 = vmatpush1.bf16.msra.mxu0 0
    %2566 = vmatprep.subr.bf16.mxu0 0
    %2567 = vmatpush1.bf16.msra.mxu0 0
    %2568 = vmatprep.mubr.bf16.mxu0 0
    %2569 = vmatmul.mubr.bf16.gmra.mrb[0].mxu0 %v2491
    %v2570 = vpop.f32.mrb[0].mxu0
    %v2571 = vadd.f32 %v2483, %v2570
    %v2572 = vpop.f32.mrb[0].mxu0
    %v2573 = vadd.f32 %v2483, %v2572
    %v2574 = vpop.f32.mrb[0].mxu0
    %v2575 = vadd.f32 %v2488, %v2574
    %v2576 = vpop.f32.mrb[0].mxu0
    %v2577 = vadd.f32 %v2488, %v2576
    %2578 = vdwg.mxu0
    %v2579 = vmul.f32 %v2528, 0.5
    %v2580 = vmul.f32 %v2530, 0.5
    %v2581 = vmul.f32 %v2571, 0.5
    %v2582 = vmul.f32 %v2573, 0.5
    %v2583 = vmul.f32 %v2532, 0.5
    %v2584 = vmul.f32 %v2534, 0.5
    %v2585 = vmul.f32 %v2575, 0.5
    %v2586 = vmul.f32 %v2577, 0.5
    %v2587 = vtanh.pop %v2579
    %v2588 = vtanh.pop %v2580
    %v2589 = vtanh.pop %v2581
    %v2590 = vtanh.pop %v2582
    %v2591 = vtanh.pop %v2583
    %v2592 = vtanh.pop %v2584
    %v2593 = vtanh.pop %v2585
    %v2594 = vtanh.pop %v2586
    %v2595 = vmul.f32 %v2587, 0.5
    %v2596 = vmul.f32 %v2588, 0.5
    %v2597 = vmul.f32 %v2589, 0.5
    %v2598 = vmul.f32 %v2590, 0.5
    %v2599 = vmul.f32 %v2591, 0.5
    %v2600 = vmul.f32 %v2592, 0.5
    %v2601 = vmul.f32 %v2593, 0.5
    %v2602 = vmul.f32 %v2594, 0.5
    %v2603 = vadd.f32 %v2595, 0.5
    %v2604 = vadd.f32 %v2596, 0.5
    %v2605 = vadd.f32 %v2597, 0.5
    %v2606 = vadd.f32 %v2598, 0.5
    %v2607 = vadd.f32 %v2599, 0.5
    %v2608 = vadd.f32 %v2600, 0.5
    %v2609 = vadd.f32 %v2601, 0.5
    %v2610 = vadd.f32 %v2602, 0.5
    %v2611 = vmul.f32 %v2528, %v2603
    %v2612 = vmul.f32 %v2530, %v2604
    %v2613 = vmul.f32 %v2571, %v2605
    %v2614 = vmul.f32 %v2573, %v2606
    %v2615 = vmul.f32 %v2532, %v2607
    %v2616 = vmul.f32 %v2534, %v2608
    %v2617 = vmul.f32 %v2575, %v2609
    %v2618 = vmul.f32 %v2577, %v2610
    %2619 = vst [vmem:[#allocation13] sm:$0xff] %v2611
    %2620 = vst [vmem:[#allocation13 + $0x8] sm:$0xff] %v2612
    %2621 = vst [vmem:[#allocation13 + $0x10] sm:$0xff] %v2613
    %2622 = vst [vmem:[#allocation13 + $0x18] sm:$0xff] %v2614
    %2623 = vst [vmem:[#allocation13 + $0x20] sm:$0xff] %v2615
    %2624 = vst [vmem:[#allocation13 + $0x28] sm:$0xff] %v2616
    %2625 = vst [vmem:[#allocation13 + $0x30] sm:$0xff] %v2617
    %2626 = vst [vmem:[#allocation13 + $0x38] sm:$0xff] %v2618
    // Predicated region
    $region54: #{tpu_custom_call.1} parent=1 // pred_check
      _
    $region55: #{tpu_custom_call.1} parent=1 // pred_check_branch
      %2628 = sbr.rel (0) target = $region57
    $region56: #{tpu_custom_call.1} parent=1 // pred_region
      %s2630 = ssub.s32 1024, 1024
      %2631 = vsyncadd [#allocation6], %s2630
      %s2632 = sshll.u32 [#allocation13], 4
      %s2633 = int_to_ptr.vmem [resolvable:$true] %s2632
      %2638 = dma.vmem_to_hbm [thread:$0]  %s2633, 1024, %s8, [#allocation6], 512, 512, 32
    $region57: #{tpu_custom_call.1} parent=1 // pred_fallthru
      _
    // Predicated region
    $region58: #{tpu_custom_call.1} parent=1 // pred_check
      _
    $region59: #{tpu_custom_call.1} parent=1 // pred_check_branch
      %2640 = sbr.rel (0) target = $region61
    $region60: #{tpu_custom_call.1} parent=1 // pred_region
      %2641 = dma.done [#allocation6], 1024
    $region61: #{tpu_custom_call.1} parent=1 // pred_fallthru
      _
    %2642 = vsyncpa [#allocation5], 1
    %2643 = vsyncpa [#allocation8], 1
    %2644 = vsyncpa [#allocation11], 1
    %2645 = vsyncpa [#allocation6], 1

</llo_original>
